<compile_context>
chip_gen: v6e
topology: v6e:2x2x1
jax: 0.10.0
libtpu: 0.0.40
codegen_flags: <defaults>
</compile_context>

<pallas_src>
import math

import jax
import jax.numpy as jnp
from jax.experimental import pallas as pl
from jax.experimental.pallas import tpu as pltpu

# ---- small synthetic RoBERTa config (AutoModel replaced in-script) ----
VOCAB = 64
B_TOTAL = 8          # total paragraphs in the batch
S = 8                # sequence length
H = 32               # hidden size
NH = 4               # attention heads
DH = H // NH         # head dim
FF = 64              # intermediate size
L = 2                # transformer layers
EPS = 1e-5


def _num_tensorcores():
    # v5e/v6e: 1 TensorCore per chip -> a 2-wide grid is just a serial loop
    # (2x per-step overhead, half the GEMM M rows).  v7x: 2 TCs -> shard.
    try:
        kind = jax.devices()[0].device_kind.lower()
    except Exception:
        return 1
    return 2 if ("v7" in kind or "7x" in kind) else 1


NG = _num_tensorcores()   # parallel batch groups (grid size)
BT = B_TOTAL // NG        # sequences per kernel invocation
R = BT * S                # activation rows per kernel invocation


def _layer_norm(x, g, b):
    mu = jnp.mean(x, axis=-1, keepdims=True)
    var = jnp.mean(jnp.square(x - mu), axis=-1, keepdims=True)
    return (x - mu) * jax.lax.rsqrt(var + EPS) * g + b


def encode_kernel(emb_ref, mask_ref,
                  emb_g_ref, emb_b_ref,
                  wqkv_ref, bqkv_ref, wo_ref, bo_ref,
                  ln1_g_ref, ln1_b_ref,
                  w1_ref, b1_ref, w2_ref, b2_ref,
                  ln2_g_ref, ln2_b_ref,
                  wp_ref, bp_ref, lnp_g_ref, lnp_b_ref,
                  hsum_ref, hexp_ref,
                  out_ref):
    # activations live as one flat [R, H] slab for the whole layer stack
    x = emb_ref[0].reshape(R, H)

    # mask arrives as [BT, S, 1]: key positions already on the sublane axis,
    # so the bias broadcasts straight onto the [BT, sq, S_k, NH] score layout.
    attn_bias = (1.0 - mask_ref[0])[:, None, :, :] * -1e9      # [BT, 1, S, 1]

    # embedding LayerNorm
    x = _layer_norm(x, emb_g_ref[...], emb_b_ref[...])

    hsum = hsum_ref[...]    # [H, NH] bf16 head indicator (sum over DH lanes)
    hexp = hexp_ref[...]    # [NH, H] bf16 head indicator transpose

    for l in range(L):
        last = (l == L - 1)
        sq = 1 if last else S   # only the CLS query row matters in the last layer

        # ---- self-attention: one fused QKV matmul (wq/bq pre-scaled by 1/sqrt(DH)) ----
        qkv = (jnp.dot(x.astype(jnp.bfloat16), wqkv_ref[l],
                       preferred_element_type=jnp.float32)
               + bqkv_ref[l])                                   # [R, 3H] f32
        q = qkv[:, 0 * H:1 * H].reshape(BT, S, H)
        k = qkv[:, 1 * H:2 * H].reshape(BT, S, H)
        v = qkv[:, 2 * H:3 * H].reshape(BT, S, H)
        if last:
            q = q[:, 0:1, :]                                    # CLS queries only

        # scores: VPU broadcast-mul over rows + ONE MXU head-sum matmul
        # (replaces NH*BT tiny per-head [S,S]x[S,S] MXU matmuls per layer)
        prod = q[:, :, None, :] * k[:, None, :, :]              # [BT, sq, S, H] f32
        scores = jnp.dot(prod.reshape(BT * sq * S, H).astype(jnp.bfloat16),
                         hsum, preferred_element_type=jnp.float32
                         ).reshape(BT, sq, S, NH)
        scores = scores + attn_bias                             # mask over key axis
        scores = scores - jnp.max(scores, axis=2, keepdims=True)
        p = jnp.exp(scores)                                     # f32 (v5e: no bf16 EUP)
        p = p * pl.reciprocal(jnp.sum(p, axis=2, keepdims=True), approx=True)

        # broadcast probs back over DH with ONE MXU matmul, weight V on the VPU
        pe = jnp.dot(p.reshape(BT * sq * S, NH).astype(jnp.bfloat16),
                     hexp, preferred_element_type=jnp.float32
                     ).reshape(BT, sq, S, H)
        ctx = jnp.sum(pe * v[:, None, :, :], axis=2)            # [BT, sq, H] f32

        if last:
            ctx = ctx[:, 0, :]                                  # [BT, H]
            x = x.reshape(BT, S, H)[:, 0, :]                    # residual: CLS rows only
        else:
            ctx = ctx.reshape(R, H)

        attn = (jnp.dot(ctx.astype(jnp.bfloat16), wo_ref[l],
                        preferred_element_type=jnp.float32) + bo_ref[l])
        x = _layer_norm(x + attn, ln1_g_ref[l], ln1_b_ref[l])

        # ---- feed-forward (last layer: CLS rows only) ----
        hdn = (jnp.dot(x.astype(jnp.bfloat16), w1_ref[l],
                       preferred_element_type=jnp.float32) + b1_ref[l])
        # TODO(synk): HF RoBERTa uses exact erf-GELU; tanh-approx GELU used here
        # (the pure-JAX reference below matches it).
        hdn = jax.nn.gelu(hdn, approximate=True)
        ffn = (jnp.dot(hdn.astype(jnp.bfloat16), w2_ref[l],
                       preferred_element_type=jnp.float32) + b2_ref[l])
        x = _layer_norm(x + ffn, ln2_g_ref[l], ln2_b_ref[l])

    # ---- projection head (Linear -> LayerNorm) on the CLS rows, kept in f32 ----
    proj = jnp.dot(x, wp_ref[...],
                   preferred_element_type=jnp.float32) + bp_ref[...]
    out_ref[0] = _layer_norm(proj, lnp_g_ref[...], lnp_b_ref[...])


def roberta_ctx_encoder_forward(params, batch):
    """RobertaCtxEncoder.forward: {'input_ids','input_mask'} -> {'embed': [B,H]}."""
    input_ids = batch["input_ids"]
    attention_mask = batch["input_mask"].astype(jnp.float32)

    # embedding lookup (vocab gather) as plain-JAX glue before the kernel
    # TODO(synk): embedding gather stays outside the kernel.
    pos = jnp.arange(S)
    emb = (params["word_emb"][input_ids]
           + params["pos_emb"][pos][None, :, :]
           + params["type_emb"][0][None, None, :]).astype(jnp.float32)

    # fuse QKV along the output dim; fold 1/sqrt(DH) into wq & bq; matmul
    # weights in bf16 (f32 accumulation in-kernel), everything else f32.
    inv = 1.0 / math.sqrt(DH)
    bf16 = lambda a: a.astype(jnp.bfloat16)
    wqkv = bf16(jnp.concatenate(
        [params["wq"] * inv, params["wk"], params["wv"]], axis=-1))     # [L,H,3H]
    bqkv = jnp.concatenate(
        [params["bq"] * inv, params["bk"], params["bv"]], axis=-1)      # [L,1,3H]

    # head-indicator matrix: hsum[c, h] = 1 iff column c belongs to head h
    hsum = (jnp.arange(H)[:, None] // DH
            == jnp.arange(NH)[None, :]).astype(jnp.float32)             # [H, NH]

    plist = [
        params["emb_ln_g"], params["emb_ln_b"],
        wqkv, bqkv, bf16(params["wo"]), params["bo"],
        params["ln1_g"], params["ln1_b"],
        bf16(params["w1"]), params["b1"], bf16(params["w2"]), params["b2"],
        params["ln2_g"], params["ln2_b"],
        params["wp"], params["bp"], params["lnp_g"], params["lnp_b"],
        bf16(hsum), bf16(hsum.T),
    ]

    emb_g = emb.reshape(NG, BT, S, H)
    # trailing size-1 dim puts key positions on the sublane axis in-kernel
    mask_g = attention_mask.reshape(NG, BT, S, 1)

    def full_spec(a):
        nd = a.ndim
        return pl.BlockSpec(a.shape, lambda i, _nd=nd: (0,) * _nd)

    # TODO(synk): all encoder params VMEM-resident (fine at synthetic size);
    # stream per-layer weight blocks before scaling to real RoBERTa configs.
    in_specs = ([pl.BlockSpec((1, BT, S, H), lambda i: (i, 0, 0, 0)),
                 pl.BlockSpec((1, BT, S, 1), lambda i: (i, 0, 0, 0))]
                + [full_spec(a) for a in plist])

    out = pl.pallas_call(
        encode_kernel,
        out_shape=jax.ShapeDtypeStruct((NG, BT, H), jnp.float32),
        grid=(NG,),
        in_specs=in_specs,
        out_specs=pl.BlockSpec((1, BT, H), lambda i: (i, 0, 0)),
        compiler_params=pltpu.CompilerParams(
            dimension_semantics=("parallel",)),
    )(emb_g, mask_g, *plist)
    return {"embed": out.reshape(NG * BT, H)}


# ---------------- parameter init (deterministic, synthetic) ----------------
def init_encoder_params(key):
    ks = iter(jax.random.split(key, 32))
    std = 0.02
    n = lambda shape: jax.random.normal(next(ks), shape, jnp.float32) * std
    return {
        "word_emb": n((VOCAB, H)),
        "pos_emb": n((S, H)),
        "type_emb": n((1, H)),
        "emb_ln_g": 1.0 + n((1, H)), "emb_ln_b": n((1, H)),
        "wq": n((L, H, H)), "bq": n((L, 1, H)),
        "wk": n((L, H, H)), "bk": n((L, 1, H)),
        "wv": n((L, H, H)), "bv": n((L, 1, H)),
        "wo": n((L, H, H)), "bo": n((L, 1, H)),
        "ln1_g": 1.0 + n((L, 1, H)), "ln1_b": n((L, 1, H)),
        "w1": n((L, H, FF)), "b1": n((L, 1, FF)),
        "w2": n((L, FF, H)), "b2": n((L, 1, H)),
        "ln2_g": 1.0 + n((L, 1, H)), "ln2_b": n((L, 1, H)),
        # projection head: Linear(H,H) + LayerNorm(H)
        "wp": n((H, H)), "bp": n((1, H)),
        "lnp_g": 1.0 + n((1, H)), "lnp_b": n((1, H)),
    }


# ---------------- pure-JAX f32 reference (for verification) ----------------
def encode_ref(x, mask, p):
    def ln(v, g, b):
        mu = v.mean(-1, keepdims=True)
        var = ((v - mu) ** 2).mean(-1, keepdims=True)
        return (v - mu) / jnp.sqrt(var + EPS) * g + b

    btot = x.shape[0]
    x = ln(x, p["emb_ln_g"][0], p["emb_ln_b"][0])
    bias = (1.0 - mask)[:, None, None, :] * -1e9
    for l in range(L):
        q = (x @ p["wq"][l] + p["bq"][l]).reshape(btot, S, NH, DH)
        k = (x @ p["wk"][l] + p["bk"][l]).reshape(btot, S, NH, DH)
        v = (x @ p["wv"][l] + p["bv"][l]).reshape(btot, S, NH, DH)
        s = jnp.einsum("bqhd,bkhd->bhqk", q, k) / math.sqrt(DH) + bias
        a = jax.nn.softmax(s, axis=-1)
        ctx = jnp.einsum("bhqk,bkhd->bqhd", a, v).reshape(btot, S, H)
        x = ln(x + ctx @ p["wo"][l] + p["bo"][l], p["ln1_g"][l], p["ln1_b"][l])
        hdn = jax.nn.gelu(x @ p["w1"][l] + p["b1"][l], approximate=True)
        x = ln(x + hdn @ p["w2"][l] + p["b2"][l], p["ln2_g"][l], p["ln2_b"][l])
    cls = x[:, 0, :]
    proj = cls @ p["wp"] + p["bp"]
    return ln(proj, p["lnp_g"], p["lnp_b"])


if __name__ == "__main__":
    key = jax.random.PRNGKey(0)
    k_par, k_ids = jax.random.split(key)
    params = init_encoder_params(k_par)

    input_ids = jax.random.randint(k_ids, (B_TOTAL, S), 3, VOCAB)
    input_mask = jnp.ones((B_TOTAL, S), jnp.float32)
    input_mask = input_mask.at[1::2, S - 2:].set(0.0)        # some padding

    # ---- Pallas kernel ----
    out = roberta_ctx_encoder_forward(
        params, {"input_ids": input_ids, "input_mask": input_mask})
    vec = jax.block_until_ready(out["embed"])

    # ---- verify against pure-JAX f32 reference ----
    pos = jnp.arange(S)
    emb = (params["word_emb"][input_ids]
           + params["pos_emb"][pos][None, :, :]
           + params["type_emb"][0][None, None, :])
    ref = encode_ref(emb, input_mask, params)

    assert vec.shape == (B_TOTAL, H)
    max_err = float(jnp.max(jnp.abs(vec - ref)))
    # tolerance covers bf16 MXU matmuls + approx reciprocal vs f32 reference
    assert max_err < 2e-2, f"mismatch vs reference: {max_err}"
    print("KERNEL_OK")
</pallas_src>

<mosaic_0001>
module attributes {stable_mosaic.version = 11 : i64} {
  func.func @encode_kernel(%arg0: i32, %arg1: memref<1x8x8x32xf32, #tpu.memory_space<vmem>>, %arg2: memref<1x8x8x1xf32, #tpu.memory_space<vmem>>, %arg3: memref<1x32xf32, #tpu.memory_space<vmem>>, %arg4: memref<1x32xf32, #tpu.memory_space<vmem>>, %arg5: memref<2x32x96xbf16, #tpu.memory_space<vmem>>, %arg6: memref<2x1x96xf32, #tpu.memory_space<vmem>>, %arg7: memref<2x32x32xbf16, #tpu.memory_space<vmem>>, %arg8: memref<2x1x32xf32, #tpu.memory_space<vmem>>, %arg9: memref<2x1x32xf32, #tpu.memory_space<vmem>>, %arg10: memref<2x1x32xf32, #tpu.memory_space<vmem>>, %arg11: memref<2x32x64xbf16, #tpu.memory_space<vmem>>, %arg12: memref<2x1x64xf32, #tpu.memory_space<vmem>>, %arg13: memref<2x64x32xbf16, #tpu.memory_space<vmem>>, %arg14: memref<2x1x32xf32, #tpu.memory_space<vmem>>, %arg15: memref<2x1x32xf32, #tpu.memory_space<vmem>>, %arg16: memref<2x1x32xf32, #tpu.memory_space<vmem>>, %arg17: memref<32x32xf32, #tpu.memory_space<vmem>>, %arg18: memref<1x32xf32, #tpu.memory_space<vmem>>, %arg19: memref<1x32xf32, #tpu.memory_space<vmem>>, %arg20: memref<1x32xf32, #tpu.memory_space<vmem>>, %arg21: memref<32x4xbf16, #tpu.memory_space<vmem>>, %arg22: memref<4x32xbf16, #tpu.memory_space<vmem>>, %arg23: memref<1x8x32xf32, #tpu.memory_space<vmem>>) attributes {dimension_semantics = [#tpu.dimension_semantics<parallel>], iteration_bounds = array<i64: 1>, scalar_prefetch = 0 : i64, scratch_operands = 0 : i64, tpu.core_type = #tpu.core_type<tc>, window_params = [{transform_indices = @transform_0, window_bounds = array<i64: 1, 8, 8, 32>}, {transform_indices = @transform_1, window_bounds = array<i64: 1, 8, 8, 1>}, {pipeline_mode = #tpu.pipeline_mode<synchronous>, transform_indices = @transform_2, window_bounds = array<i64: 1, 32>}, {pipeline_mode = #tpu.pipeline_mode<synchronous>, transform_indices = @transform_3, window_bounds = array<i64: 1, 32>}, {pipeline_mode = #tpu.pipeline_mode<synchronous>, transform_indices = @transform_4, window_bounds = array<i64: 2, 32, 96>}, {pipeline_mode = #tpu.pipeline_mode<synchronous>, transform_indices = @transform_5, window_bounds = array<i64: 2, 1, 96>}, {pipeline_mode = #tpu.pipeline_mode<synchronous>, transform_indices = @transform_6, window_bounds = array<i64: 2, 32, 32>}, {pipeline_mode = #tpu.pipeline_mode<synchronous>, transform_indices = @transform_7, window_bounds = array<i64: 2, 1, 32>}, {pipeline_mode = #tpu.pipeline_mode<synchronous>, transform_indices = @transform_8, window_bounds = array<i64: 2, 1, 32>}, {pipeline_mode = #tpu.pipeline_mode<synchronous>, transform_indices = @transform_9, window_bounds = array<i64: 2, 1, 32>}, {pipeline_mode = #tpu.pipeline_mode<synchronous>, transform_indices = @transform_10, window_bounds = array<i64: 2, 32, 64>}, {pipeline_mode = #tpu.pipeline_mode<synchronous>, transform_indices = @transform_11, window_bounds = array<i64: 2, 1, 64>}, {pipeline_mode = #tpu.pipeline_mode<synchronous>, transform_indices = @transform_12, window_bounds = array<i64: 2, 64, 32>}, {pipeline_mode = #tpu.pipeline_mode<synchronous>, transform_indices = @transform_13, window_bounds = array<i64: 2, 1, 32>}, {pipeline_mode = #tpu.pipeline_mode<synchronous>, transform_indices = @transform_14, window_bounds = array<i64: 2, 1, 32>}, {pipeline_mode = #tpu.pipeline_mode<synchronous>, transform_indices = @transform_15, window_bounds = array<i64: 2, 1, 32>}, {pipeline_mode = #tpu.pipeline_mode<synchronous>, transform_indices = @transform_16, window_bounds = array<i64: 32, 32>}, {pipeline_mode = #tpu.pipeline_mode<synchronous>, transform_indices = @transform_17, window_bounds = array<i64: 1, 32>}, {pipeline_mode = #tpu.pipeline_mode<synchronous>, transform_indices = @transform_18, window_bounds = array<i64: 1, 32>}, {pipeline_mode = #tpu.pipeline_mode<synchronous>, transform_indices = @transform_19, window_bounds = array<i64: 1, 32>}, {pipeline_mode = #tpu.pipeline_mode<synchronous>, transform_indices = @transform_20, window_bounds = array<i64: 32, 4>}, {pipeline_mode = #tpu.pipeline_mode<synchronous>, transform_indices = @transform_21, window_bounds = array<i64: 4, 32>}, {transform_indices = @transform_22, window_bounds = array<i64: 1, 8, 32>}]} {
    %c0 = arith.constant 0 : index
    %c0_0 = arith.constant 0 : index
    %c0_1 = arith.constant 0 : index
    %c0_2 = arith.constant 0 : index
    %0 = vector.load %arg1[%c0, %c0_0, %c0_1, %c0_2] : memref<1x8x8x32xf32, #tpu.memory_space<vmem>>, vector<1x8x8x32xf32>
    %1 = vector.shape_cast %0 : vector<1x8x8x32xf32> to vector<8x8x32xf32>
    %2 = vector.shape_cast %1 : vector<8x8x32xf32> to vector<64x32xf32>
    %c0_3 = arith.constant 0 : index
    %c0_4 = arith.constant 0 : index
    %c0_5 = arith.constant 0 : index
    %c0_6 = arith.constant 0 : index
    %3 = vector.load %arg2[%c0_3, %c0_4, %c0_5, %c0_6] : memref<1x8x8x1xf32, #tpu.memory_space<vmem>>, vector<1x8x8x1xf32>
    %4 = vector.shape_cast %3 : vector<1x8x8x1xf32> to vector<8x8x1xf32>
    %cst = arith.constant 1.000000e+00 : f32
    %5 = vector.broadcast %cst : f32 to vector<8x8x1xf32>
    %6 = arith.subf %5, %4 : vector<8x8x1xf32>
    %7 = vector.shape_cast %6 : vector<8x8x1xf32> to vector<8x1x8x1xf32>
    %cst_7 = arith.constant -1.000000e+09 : f32
    %8 = vector.broadcast %cst_7 : f32 to vector<8x1x8x1xf32>
    %9 = arith.mulf %7, %8 : vector<8x1x8x1xf32>
    %c0_8 = arith.constant 0 : index
    %c0_9 = arith.constant 0 : index
    %10 = vector.load %arg3[%c0_8, %c0_9] : memref<1x32xf32, #tpu.memory_space<vmem>>, vector<1x32xf32>
    %c0_10 = arith.constant 0 : index
    %c0_11 = arith.constant 0 : index
    %11 = vector.load %arg4[%c0_10, %c0_11] : memref<1x32xf32, #tpu.memory_space<vmem>>, vector<1x32xf32>
    %cst_12 = arith.constant dense<0.000000e+00> : vector<64xf32>
    %12 = vector.multi_reduction <add>, %2, %cst_12 [1] : vector<64x32xf32> to vector<64xf32>
    %13 = vector.shape_cast %12 : vector<64xf32> to vector<64x1xf32>
    %cst_13 = arith.constant 3.200000e+01 : f32
    %14 = vector.broadcast %cst_13 : f32 to vector<64x1xf32>
    %15 = arith.divf %13, %14 : vector<64x1xf32>
    %16 = vector.broadcast %15 : vector<64x1xf32> to vector<64x32xf32>
    %17 = arith.subf %2, %16 : vector<64x32xf32>
    %18 = arith.mulf %17, %17 : vector<64x32xf32>
    %cst_14 = arith.constant dense<0.000000e+00> : vector<64xf32>
    %19 = vector.multi_reduction <add>, %18, %cst_14 [1] : vector<64x32xf32> to vector<64xf32>
    %20 = vector.shape_cast %19 : vector<64xf32> to vector<64x1xf32>
    %cst_15 = arith.constant 3.200000e+01 : f32
    %21 = vector.broadcast %cst_15 : f32 to vector<64x1xf32>
    %22 = arith.divf %20, %21 : vector<64x1xf32>
    %23 = vector.broadcast %15 : vector<64x1xf32> to vector<64x32xf32>
    %24 = arith.subf %2, %23 : vector<64x32xf32>
    %cst_16 = arith.constant 9.99999974E-6 : f32
    %25 = vector.broadcast %cst_16 : f32 to vector<64x1xf32>
    %26 = arith.addf %22, %25 : vector<64x1xf32>
    %27 = math.rsqrt %26 : vector<64x1xf32>
    %28 = vector.broadcast %27 : vector<64x1xf32> to vector<64x32xf32>
    %29 = arith.mulf %24, %28 : vector<64x32xf32>
    %30 = vector.broadcast %10 : vector<1x32xf32> to vector<64x32xf32>
    %31 = arith.mulf %29, %30 : vector<64x32xf32>
    %32 = vector.broadcast %11 : vector<1x32xf32> to vector<64x32xf32>
    %33 = arith.addf %31, %32 : vector<64x32xf32>
    %c0_17 = arith.constant 0 : index
    %c0_18 = arith.constant 0 : index
    %34 = vector.load %arg21[%c0_17, %c0_18] : memref<32x4xbf16, #tpu.memory_space<vmem>>, vector<32x4xbf16>
    %c0_19 = arith.constant 0 : index
    %c0_20 = arith.constant 0 : index
    %35 = vector.load %arg22[%c0_19, %c0_20] : memref<4x32xbf16, #tpu.memory_space<vmem>>, vector<4x32xbf16>
    %36 = arith.truncf %33 : vector<64x32xf32> to vector<64x32xbf16>
    %c0_21 = arith.constant 0 : index
    %c0_22 = arith.constant 0 : index
    %c0_23 = arith.constant 0 : index
    %37 = vector.load %arg5[%c0_21, %c0_22, %c0_23] : memref<2x32x96xbf16, #tpu.memory_space<vmem>>, vector<1x32x96xbf16>
    %38 = vector.shape_cast %37 : vector<1x32x96xbf16> to vector<32x96xbf16>
    %cst_24 = arith.constant dense<0.000000e+00> : vector<64x96xf32>
    %39 = tpu.matmul %36, %38, %cst_24 {dimension_numbers = #tpu.dot_dimension_numbers<[1], [0], [0], [1], [0, 0, 1, 1], [], []>} : vector<64x32xbf16>, vector<32x96xbf16>, vector<64x96xf32> -> vector<64x96xf32>
    %c0_25 = arith.constant 0 : index
    %c0_26 = arith.constant 0 : index
    %c0_27 = arith.constant 0 : index
    %40 = vector.load %arg6[%c0_25, %c0_26, %c0_27] : memref<2x1x96xf32, #tpu.memory_space<vmem>>, vector<1x1x96xf32>
    %41 = vector.shape_cast %40 : vector<1x1x96xf32> to vector<1x96xf32>
    %42 = vector.broadcast %41 : vector<1x96xf32> to vector<64x96xf32>
    %43 = arith.addf %39, %42 : vector<64x96xf32>
    %44 = vector.extract_strided_slice %43 {offsets = [0, 0], sizes = [64, 32], strides = [1, 1]} : vector<64x96xf32> to vector<64x32xf32>
    %45 = vector.shape_cast %44 : vector<64x32xf32> to vector<8x8x32xf32>
    %46 = vector.extract_strided_slice %43 {offsets = [0, 32], sizes = [64, 32], strides = [1, 1]} : vector<64x96xf32> to vector<64x32xf32>
    %47 = vector.shape_cast %46 : vector<64x32xf32> to vector<8x8x32xf32>
    %48 = vector.extract_strided_slice %43 {offsets = [0, 64], sizes = [64, 32], strides = [1, 1]} : vector<64x96xf32> to vector<64x32xf32>
    %49 = vector.shape_cast %48 : vector<64x32xf32> to vector<8x8x32xf32>
    %50 = vector.shape_cast %45 : vector<8x8x32xf32> to vector<8x8x1x32xf32>
    %51 = vector.shape_cast %47 : vector<8x8x32xf32> to vector<8x1x8x32xf32>
    %52 = vector.broadcast %50 : vector<8x8x1x32xf32> to vector<8x8x8x32xf32>
    %53 = vector.broadcast %51 : vector<8x1x8x32xf32> to vector<8x8x8x32xf32>
    %54 = arith.mulf %52, %53 : vector<8x8x8x32xf32>
    %55 = vector.shape_cast %54 : vector<8x8x8x32xf32> to vector<512x32xf32>
    %56 = arith.truncf %55 : vector<512x32xf32> to vector<512x32xbf16>
    %cst_28 = arith.constant dense<0.000000e+00> : vector<512x4xf32>
    %57 = tpu.matmul %56, %34, %cst_28 {dimension_numbers = #tpu.dot_dimension_numbers<[1], [0], [0], [1], [0, 0, 1, 1], [], []>} : vector<512x32xbf16>, vector<32x4xbf16>, vector<512x4xf32> -> vector<512x4xf32>
    %58 = vector.shape_cast %57 : vector<512x4xf32> to vector<8x8x8x4xf32>
    %59 = vector.broadcast %9 : vector<8x1x8x1xf32> to vector<8x8x8x4xf32>
    %60 = arith.addf %58, %59 : vector<8x8x8x4xf32>
    %cst_29 = arith.constant dense<0xFF800000> : vector<8x8x4xf32>
    %61 = vector.multi_reduction <maximumf>, %60, %cst_29 [2] : vector<8x8x8x4xf32> to vector<8x8x4xf32>
    %62 = vector.shape_cast %61 : vector<8x8x4xf32> to vector<8x8x1x4xf32>
    %63 = vector.broadcast %62 : vector<8x8x1x4xf32> to vector<8x8x8x4xf32>
    %64 = arith.subf %60, %63 : vector<8x8x8x4xf32>
    %65 = math.exp %64 : vector<8x8x8x4xf32>
    %cst_30 = arith.constant dense<0.000000e+00> : vector<8x8x4xf32>
    %66 = vector.multi_reduction <add>, %65, %cst_30 [2] : vector<8x8x8x4xf32> to vector<8x8x4xf32>
    %67 = vector.shape_cast %66 : vector<8x8x4xf32> to vector<8x8x1x4xf32>
    %68 = tpu.reciprocal %67 {approx = true} : vector<8x8x1x4xf32> -> vector<8x8x1x4xf32>
    %69 = vector.broadcast %68 : vector<8x8x1x4xf32> to vector<8x8x8x4xf32>
    %70 = arith.mulf %65, %69 : vector<8x8x8x4xf32>
    %71 = vector.shape_cast %70 : vector<8x8x8x4xf32> to vector<512x4xf32>
    %72 = arith.truncf %71 : vector<512x4xf32> to vector<512x4xbf16>
    %cst_31 = arith.constant dense<0.000000e+00> : vector<512x32xf32>
    %73 = tpu.matmul %72, %35, %cst_31 {dimension_numbers = #tpu.dot_dimension_numbers<[1], [0], [0], [1], [0, 0, 1, 1], [], []>} : vector<512x4xbf16>, vector<4x32xbf16>, vector<512x32xf32> -> vector<512x32xf32>
    %74 = vector.shape_cast %73 : vector<512x32xf32> to vector<8x8x8x32xf32>
    %75 = vector.shape_cast %49 : vector<8x8x32xf32> to vector<8x1x8x32xf32>
    %76 = vector.broadcast %75 : vector<8x1x8x32xf32> to vector<8x8x8x32xf32>
    %77 = arith.mulf %74, %76 : vector<8x8x8x32xf32>
    %cst_32 = arith.constant dense<0.000000e+00> : vector<8x8x32xf32>
    %78 = vector.multi_reduction <add>, %77, %cst_32 [2] : vector<8x8x8x32xf32> to vector<8x8x32xf32>
    %79 = vector.shape_cast %78 : vector<8x8x32xf32> to vector<64x32xf32>
    %80 = arith.truncf %79 : vector<64x32xf32> to vector<64x32xbf16>
    %c0_33 = arith.constant 0 : index
    %c0_34 = arith.constant 0 : index
    %c0_35 = arith.constant 0 : index
    %81 = vector.load %arg7[%c0_33, %c0_34, %c0_35] : memref<2x32x32xbf16, #tpu.memory_space<vmem>>, vector<1x32x32xbf16>
    %82 = vector.shape_cast %81 : vector<1x32x32xbf16> to vector<32x32xbf16>
    %cst_36 = arith.constant dense<0.000000e+00> : vector<64x32xf32>
    %83 = tpu.matmul %80, %82, %cst_36 {dimension_numbers = #tpu.dot_dimension_numbers<[1], [0], [0], [1], [0, 0, 1, 1], [], []>} : vector<64x32xbf16>, vector<32x32xbf16>, vector<64x32xf32> -> vector<64x32xf32>
    %c0_37 = arith.constant 0 : index
    %c0_38 = arith.constant 0 : index
    %c0_39 = arith.constant 0 : index
    %84 = vector.load %arg8[%c0_37, %c0_38, %c0_39] : memref<2x1x32xf32, #tpu.memory_space<vmem>>, vector<1x1x32xf32>
    %85 = vector.shape_cast %84 : vector<1x1x32xf32> to vector<1x32xf32>
    %86 = vector.broadcast %85 : vector<1x32xf32> to vector<64x32xf32>
    %87 = arith.addf %83, %86 : vector<64x32xf32>
    %88 = arith.addf %33, %87 : vector<64x32xf32>
    %c0_40 = arith.constant 0 : index
    %c0_41 = arith.constant 0 : index
    %c0_42 = arith.constant 0 : index
    %89 = vector.load %arg9[%c0_40, %c0_41, %c0_42] : memref<2x1x32xf32, #tpu.memory_space<vmem>>, vector<1x1x32xf32>
    %90 = vector.shape_cast %89 : vector<1x1x32xf32> to vector<1x32xf32>
    %c0_43 = arith.constant 0 : index
    %c0_44 = arith.constant 0 : index
    %c0_45 = arith.constant 0 : index
    %91 = vector.load %arg10[%c0_43, %c0_44, %c0_45] : memref<2x1x32xf32, #tpu.memory_space<vmem>>, vector<1x1x32xf32>
    %92 = vector.shape_cast %91 : vector<1x1x32xf32> to vector<1x32xf32>
    %cst_46 = arith.constant dense<0.000000e+00> : vector<64xf32>
    %93 = vector.multi_reduction <add>, %88, %cst_46 [1] : vector<64x32xf32> to vector<64xf32>
    %94 = vector.shape_cast %93 : vector<64xf32> to vector<64x1xf32>
    %cst_47 = arith.constant 3.200000e+01 : f32
    %95 = vector.broadcast %cst_47 : f32 to vector<64x1xf32>
    %96 = arith.divf %94, %95 : vector<64x1xf32>
    %97 = vector.broadcast %96 : vector<64x1xf32> to vector<64x32xf32>
    %98 = arith.subf %88, %97 : vector<64x32xf32>
    %99 = arith.mulf %98, %98 : vector<64x32xf32>
    %cst_48 = arith.constant dense<0.000000e+00> : vector<64xf32>
    %100 = vector.multi_reduction <add>, %99, %cst_48 [1] : vector<64x32xf32> to vector<64xf32>
    %101 = vector.shape_cast %100 : vector<64xf32> to vector<64x1xf32>
    %cst_49 = arith.constant 3.200000e+01 : f32
    %102 = vector.broadcast %cst_49 : f32 to vector<64x1xf32>
    %103 = arith.divf %101, %102 : vector<64x1xf32>
    %104 = vector.broadcast %96 : vector<64x1xf32> to vector<64x32xf32>
    %105 = arith.subf %88, %104 : vector<64x32xf32>
    %cst_50 = arith.constant 9.99999974E-6 : f32
    %106 = vector.broadcast %cst_50 : f32 to vector<64x1xf32>
    %107 = arith.addf %103, %106 : vector<64x1xf32>
    %108 = math.rsqrt %107 : vector<64x1xf32>
    %109 = vector.broadcast %108 : vector<64x1xf32> to vector<64x32xf32>
    %110 = arith.mulf %105, %109 : vector<64x32xf32>
    %111 = vector.broadcast %90 : vector<1x32xf32> to vector<64x32xf32>
    %112 = arith.mulf %110, %111 : vector<64x32xf32>
    %113 = vector.broadcast %92 : vector<1x32xf32> to vector<64x32xf32>
    %114 = arith.addf %112, %113 : vector<64x32xf32>
    %115 = arith.truncf %114 : vector<64x32xf32> to vector<64x32xbf16>
    %c0_51 = arith.constant 0 : index
    %c0_52 = arith.constant 0 : index
    %c0_53 = arith.constant 0 : index
    %116 = vector.load %arg11[%c0_51, %c0_52, %c0_53] : memref<2x32x64xbf16, #tpu.memory_space<vmem>>, vector<1x32x64xbf16>
    %117 = vector.shape_cast %116 : vector<1x32x64xbf16> to vector<32x64xbf16>
    %cst_54 = arith.constant dense<0.000000e+00> : vector<64x64xf32>
    %118 = tpu.matmul %115, %117, %cst_54 {dimension_numbers = #tpu.dot_dimension_numbers<[1], [0], [0], [1], [0, 0, 1, 1], [], []>} : vector<64x32xbf16>, vector<32x64xbf16>, vector<64x64xf32> -> vector<64x64xf32>
    %c0_55 = arith.constant 0 : index
    %c0_56 = arith.constant 0 : index
    %c0_57 = arith.constant 0 : index
    %119 = vector.load %arg12[%c0_55, %c0_56, %c0_57] : memref<2x1x64xf32, #tpu.memory_space<vmem>>, vector<1x1x64xf32>
    %120 = vector.shape_cast %119 : vector<1x1x64xf32> to vector<1x64xf32>
    %121 = vector.broadcast %120 : vector<1x64xf32> to vector<64x64xf32>
    %122 = arith.addf %118, %121 : vector<64x64xf32>
    %123 = arith.mulf %122, %122 : vector<64x64xf32>
    %124 = arith.mulf %122, %123 : vector<64x64xf32>
    %cst_58 = arith.constant 4.471500e-02 : f32
    %125 = vector.broadcast %cst_58 : f32 to vector<64x64xf32>
    %126 = arith.mulf %125, %124 : vector<64x64xf32>
    %127 = arith.addf %122, %126 : vector<64x64xf32>
    %cst_59 = arith.constant 0.797884583 : f32
    %128 = vector.broadcast %cst_59 : f32 to vector<64x64xf32>
    %129 = arith.mulf %128, %127 : vector<64x64xf32>
    %130 = math.tanh %129 : vector<64x64xf32>
    %cst_60 = arith.constant 1.000000e+00 : f32
    %131 = vector.broadcast %cst_60 : f32 to vector<64x64xf32>
    %132 = arith.addf %131, %130 : vector<64x64xf32>
    %cst_61 = arith.constant 5.000000e-01 : f32
    %133 = vector.broadcast %cst_61 : f32 to vector<64x64xf32>
    %134 = arith.mulf %133, %132 : vector<64x64xf32>
    %135 = arith.mulf %122, %134 : vector<64x64xf32>
    %136 = arith.truncf %135 : vector<64x64xf32> to vector<64x64xbf16>
    %c0_62 = arith.constant 0 : index
    %c0_63 = arith.constant 0 : index
    %c0_64 = arith.constant 0 : index
    %137 = vector.load %arg13[%c0_62, %c0_63, %c0_64] : memref<2x64x32xbf16, #tpu.memory_space<vmem>>, vector<1x64x32xbf16>
    %138 = vector.shape_cast %137 : vector<1x64x32xbf16> to vector<64x32xbf16>
    %cst_65 = arith.constant dense<0.000000e+00> : vector<64x32xf32>
    %139 = tpu.matmul %136, %138, %cst_65 {dimension_numbers = #tpu.dot_dimension_numbers<[1], [0], [0], [1], [0, 0, 1, 1], [], []>} : vector<64x64xbf16>, vector<64x32xbf16>, vector<64x32xf32> -> vector<64x32xf32>
    %c0_66 = arith.constant 0 : index
    %c0_67 = arith.constant 0 : index
    %c0_68 = arith.constant 0 : index
    %140 = vector.load %arg14[%c0_66, %c0_67, %c0_68] : memref<2x1x32xf32, #tpu.memory_space<vmem>>, vector<1x1x32xf32>
    %141 = vector.shape_cast %140 : vector<1x1x32xf32> to vector<1x32xf32>
    %142 = vector.broadcast %141 : vector<1x32xf32> to vector<64x32xf32>
    %143 = arith.addf %139, %142 : vector<64x32xf32>
    %144 = arith.addf %114, %143 : vector<64x32xf32>
    %c0_69 = arith.constant 0 : index
    %c0_70 = arith.constant 0 : index
    %c0_71 = arith.constant 0 : index
    %145 = vector.load %arg15[%c0_69, %c0_70, %c0_71] : memref<2x1x32xf32, #tpu.memory_space<vmem>>, vector<1x1x32xf32>
    %146 = vector.shape_cast %145 : vector<1x1x32xf32> to vector<1x32xf32>
    %c0_72 = arith.constant 0 : index
    %c0_73 = arith.constant 0 : index
    %c0_74 = arith.constant 0 : index
    %147 = vector.load %arg16[%c0_72, %c0_73, %c0_74] : memref<2x1x32xf32, #tpu.memory_space<vmem>>, vector<1x1x32xf32>
    %148 = vector.shape_cast %147 : vector<1x1x32xf32> to vector<1x32xf32>
    %cst_75 = arith.constant dense<0.000000e+00> : vector<64xf32>
    %149 = vector.multi_reduction <add>, %144, %cst_75 [1] : vector<64x32xf32> to vector<64xf32>
    %150 = vector.shape_cast %149 : vector<64xf32> to vector<64x1xf32>
    %cst_76 = arith.constant 3.200000e+01 : f32
    %151 = vector.broadcast %cst_76 : f32 to vector<64x1xf32>
    %152 = arith.divf %150, %151 : vector<64x1xf32>
    %153 = vector.broadcast %152 : vector<64x1xf32> to vector<64x32xf32>
    %154 = arith.subf %144, %153 : vector<64x32xf32>
    %155 = arith.mulf %154, %154 : vector<64x32xf32>
    %cst_77 = arith.constant dense<0.000000e+00> : vector<64xf32>
    %156 = vector.multi_reduction <add>, %155, %cst_77 [1] : vector<64x32xf32> to vector<64xf32>
    %157 = vector.shape_cast %156 : vector<64xf32> to vector<64x1xf32>
    %cst_78 = arith.constant 3.200000e+01 : f32
    %158 = vector.broadcast %cst_78 : f32 to vector<64x1xf32>
    %159 = arith.divf %157, %158 : vector<64x1xf32>
    %160 = vector.broadcast %152 : vector<64x1xf32> to vector<64x32xf32>
    %161 = arith.subf %144, %160 : vector<64x32xf32>
    %cst_79 = arith.constant 9.99999974E-6 : f32
    %162 = vector.broadcast %cst_79 : f32 to vector<64x1xf32>
    %163 = arith.addf %159, %162 : vector<64x1xf32>
    %164 = math.rsqrt %163 : vector<64x1xf32>
    %165 = vector.broadcast %164 : vector<64x1xf32> to vector<64x32xf32>
    %166 = arith.mulf %161, %165 : vector<64x32xf32>
    %167 = vector.broadcast %146 : vector<1x32xf32> to vector<64x32xf32>
    %168 = arith.mulf %166, %167 : vector<64x32xf32>
    %169 = vector.broadcast %148 : vector<1x32xf32> to vector<64x32xf32>
    %170 = arith.addf %168, %169 : vector<64x32xf32>
    %171 = arith.truncf %170 : vector<64x32xf32> to vector<64x32xbf16>
    %c1 = arith.constant 1 : index
    %c0_80 = arith.constant 0 : index
    %c0_81 = arith.constant 0 : index
    %172 = vector.load %arg5[%c1, %c0_80, %c0_81] : memref<2x32x96xbf16, #tpu.memory_space<vmem>>, vector<1x32x96xbf16>
    %173 = vector.shape_cast %172 : vector<1x32x96xbf16> to vector<32x96xbf16>
    %cst_82 = arith.constant dense<0.000000e+00> : vector<64x96xf32>
    %174 = tpu.matmul %171, %173, %cst_82 {dimension_numbers = #tpu.dot_dimension_numbers<[1], [0], [0], [1], [0, 0, 1, 1], [], []>} : vector<64x32xbf16>, vector<32x96xbf16>, vector<64x96xf32> -> vector<64x96xf32>
    %c1_83 = arith.constant 1 : index
    %c0_84 = arith.constant 0 : index
    %c0_85 = arith.constant 0 : index
    %175 = vector.load %arg6[%c1_83, %c0_84, %c0_85] : memref<2x1x96xf32, #tpu.memory_space<vmem>>, vector<1x1x96xf32>
    %176 = vector.shape_cast %175 : vector<1x1x96xf32> to vector<1x96xf32>
    %177 = vector.broadcast %176 : vector<1x96xf32> to vector<64x96xf32>
    %178 = arith.addf %174, %177 : vector<64x96xf32>
    %179 = vector.extract_strided_slice %178 {offsets = [0, 0], sizes = [64, 32], strides = [1, 1]} : vector<64x96xf32> to vector<64x32xf32>
    %180 = vector.shape_cast %179 : vector<64x32xf32> to vector<8x8x32xf32>
    %181 = vector.extract_strided_slice %178 {offsets = [0, 32], sizes = [64, 32], strides = [1, 1]} : vector<64x96xf32> to vector<64x32xf32>
    %182 = vector.shape_cast %181 : vector<64x32xf32> to vector<8x8x32xf32>
    %183 = vector.extract_strided_slice %178 {offsets = [0, 64], sizes = [64, 32], strides = [1, 1]} : vector<64x96xf32> to vector<64x32xf32>
    %184 = vector.shape_cast %183 : vector<64x32xf32> to vector<8x8x32xf32>
    %185 = vector.extract_strided_slice %180 {offsets = [0, 0, 0], sizes = [8, 1, 32], strides = [1, 1, 1]} : vector<8x8x32xf32> to vector<8x1x32xf32>
    %186 = vector.shape_cast %185 : vector<8x1x32xf32> to vector<8x1x1x32xf32>
    %187 = vector.shape_cast %182 : vector<8x8x32xf32> to vector<8x1x8x32xf32>
    %188 = vector.broadcast %186 : vector<8x1x1x32xf32> to vector<8x1x8x32xf32>
    %189 = arith.mulf %188, %187 : vector<8x1x8x32xf32>
    %190 = vector.shape_cast %189 : vector<8x1x8x32xf32> to vector<64x32xf32>
    %191 = arith.truncf %190 : vector<64x32xf32> to vector<64x32xbf16>
    %cst_86 = arith.constant dense<0.000000e+00> : vector<64x4xf32>
    %192 = tpu.matmul %191, %34, %cst_86 {dimension_numbers = #tpu.dot_dimension_numbers<[1], [0], [0], [1], [0, 0, 1, 1], [], []>} : vector<64x32xbf16>, vector<32x4xbf16>, vector<64x4xf32> -> vector<64x4xf32>
    %193 = vector.shape_cast %192 : vector<64x4xf32> to vector<8x1x8x4xf32>
    %194 = vector.broadcast %9 : vector<8x1x8x1xf32> to vector<8x1x8x4xf32>
    %195 = arith.addf %193, %194 : vector<8x1x8x4xf32>
    %cst_87 = arith.constant dense<0xFF800000> : vector<8x1x4xf32>
    %196 = vector.multi_reduction <maximumf>, %195, %cst_87 [2] : vector<8x1x8x4xf32> to vector<8x1x4xf32>
    %197 = vector.shape_cast %196 : vector<8x1x4xf32> to vector<8x1x1x4xf32>
    %198 = vector.broadcast %197 : vector<8x1x1x4xf32> to vector<8x1x8x4xf32>
    %199 = arith.subf %195, %198 : vector<8x1x8x4xf32>
    %200 = math.exp %199 : vector<8x1x8x4xf32>
    %cst_88 = arith.constant dense<0.000000e+00> : vector<8x1x4xf32>
    %201 = vector.multi_reduction <add>, %200, %cst_88 [2] : vector<8x1x8x4xf32> to vector<8x1x4xf32>
    %202 = vector.shape_cast %201 : vector<8x1x4xf32> to vector<8x1x1x4xf32>
    %203 = tpu.reciprocal %202 {approx = true} : vector<8x1x1x4xf32> -> vector<8x1x1x4xf32>
    %204 = vector.broadcast %203 : vector<8x1x1x4xf32> to vector<8x1x8x4xf32>
    %205 = arith.mulf %200, %204 : vector<8x1x8x4xf32>
    %206 = vector.shape_cast %205 : vector<8x1x8x4xf32> to vector<64x4xf32>
    %207 = arith.truncf %206 : vector<64x4xf32> to vector<64x4xbf16>
    %cst_89 = arith.constant dense<0.000000e+00> : vector<64x32xf32>
    %208 = tpu.matmul %207, %35, %cst_89 {dimension_numbers = #tpu.dot_dimension_numbers<[1], [0], [0], [1], [0, 0, 1, 1], [], []>} : vector<64x4xbf16>, vector<4x32xbf16>, vector<64x32xf32> -> vector<64x32xf32>
    %209 = vector.shape_cast %208 : vector<64x32xf32> to vector<8x1x8x32xf32>
    %210 = vector.shape_cast %184 : vector<8x8x32xf32> to vector<8x1x8x32xf32>
    %211 = arith.mulf %209, %210 : vector<8x1x8x32xf32>
    %cst_90 = arith.constant dense<0.000000e+00> : vector<8x1x32xf32>
    %212 = vector.multi_reduction <add>, %211, %cst_90 [2] : vector<8x1x8x32xf32> to vector<8x1x32xf32>
    %213 = vector.shape_cast %212 : vector<8x1x32xf32> to vector<8x32xf32>
    %214 = vector.shape_cast %170 : vector<64x32xf32> to vector<8x8x32xf32>
    %215 = vector.extract_strided_slice %214 {offsets = [0, 0, 0], sizes = [8, 1, 32], strides = [1, 1, 1]} : vector<8x8x32xf32> to vector<8x1x32xf32>
    %216 = vector.shape_cast %215 : vector<8x1x32xf32> to vector<8x32xf32>
    %217 = arith.truncf %213 : vector<8x32xf32> to vector<8x32xbf16>
    %c1_91 = arith.constant 1 : index
    %c0_92 = arith.constant 0 : index
    %c0_93 = arith.constant 0 : index
    %218 = vector.load %arg7[%c1_91, %c0_92, %c0_93] : memref<2x32x32xbf16, #tpu.memory_space<vmem>>, vector<1x32x32xbf16>
    %219 = vector.shape_cast %218 : vector<1x32x32xbf16> to vector<32x32xbf16>
    %cst_94 = arith.constant dense<0.000000e+00> : vector<8x32xf32>
    %220 = tpu.matmul %217, %219, %cst_94 {dimension_numbers = #tpu.dot_dimension_numbers<[1], [0], [0], [1], [0, 0, 1, 1], [], []>} : vector<8x32xbf16>, vector<32x32xbf16>, vector<8x32xf32> -> vector<8x32xf32>
    %c1_95 = arith.constant 1 : index
    %c0_96 = arith.constant 0 : index
    %c0_97 = arith.constant 0 : index
    %221 = vector.load %arg8[%c1_95, %c0_96, %c0_97] : memref<2x1x32xf32, #tpu.memory_space<vmem>>, vector<1x1x32xf32>
    %222 = vector.shape_cast %221 : vector<1x1x32xf32> to vector<1x32xf32>
    %223 = vector.broadcast %222 : vector<1x32xf32> to vector<8x32xf32>
    %224 = arith.addf %220, %223 : vector<8x32xf32>
    %225 = arith.addf %216, %224 : vector<8x32xf32>
    %c1_98 = arith.constant 1 : index
    %c0_99 = arith.constant 0 : index
    %c0_100 = arith.constant 0 : index
    %226 = vector.load %arg9[%c1_98, %c0_99, %c0_100] : memref<2x1x32xf32, #tpu.memory_space<vmem>>, vector<1x1x32xf32>
    %227 = vector.shape_cast %226 : vector<1x1x32xf32> to vector<1x32xf32>
    %c1_101 = arith.constant 1 : index
    %c0_102 = arith.constant 0 : index
    %c0_103 = arith.constant 0 : index
    %228 = vector.load %arg10[%c1_101, %c0_102, %c0_103] : memref<2x1x32xf32, #tpu.memory_space<vmem>>, vector<1x1x32xf32>
    %229 = vector.shape_cast %228 : vector<1x1x32xf32> to vector<1x32xf32>
    %cst_104 = arith.constant dense<0.000000e+00> : vector<8xf32>
    %230 = vector.multi_reduction <add>, %225, %cst_104 [1] : vector<8x32xf32> to vector<8xf32>
    %231 = vector.shape_cast %230 : vector<8xf32> to vector<8x1xf32>
    %cst_105 = arith.constant 3.200000e+01 : f32
    %232 = vector.broadcast %cst_105 : f32 to vector<8x1xf32>
    %233 = arith.divf %231, %232 : vector<8x1xf32>
    %234 = vector.broadcast %233 : vector<8x1xf32> to vector<8x32xf32>
    %235 = arith.subf %225, %234 : vector<8x32xf32>
    %236 = arith.mulf %235, %235 : vector<8x32xf32>
    %cst_106 = arith.constant dense<0.000000e+00> : vector<8xf32>
    %237 = vector.multi_reduction <add>, %236, %cst_106 [1] : vector<8x32xf32> to vector<8xf32>
    %238 = vector.shape_cast %237 : vector<8xf32> to vector<8x1xf32>
    %cst_107 = arith.constant 3.200000e+01 : f32
    %239 = vector.broadcast %cst_107 : f32 to vector<8x1xf32>
    %240 = arith.divf %238, %239 : vector<8x1xf32>
    %241 = vector.broadcast %233 : vector<8x1xf32> to vector<8x32xf32>
    %242 = arith.subf %225, %241 : vector<8x32xf32>
    %cst_108 = arith.constant 9.99999974E-6 : f32
    %243 = vector.broadcast %cst_108 : f32 to vector<8x1xf32>
    %244 = arith.addf %240, %243 : vector<8x1xf32>
    %245 = math.rsqrt %244 : vector<8x1xf32>
    %246 = vector.broadcast %245 : vector<8x1xf32> to vector<8x32xf32>
    %247 = arith.mulf %242, %246 : vector<8x32xf32>
    %248 = vector.broadcast %227 : vector<1x32xf32> to vector<8x32xf32>
    %249 = arith.mulf %247, %248 : vector<8x32xf32>
    %250 = vector.broadcast %229 : vector<1x32xf32> to vector<8x32xf32>
    %251 = arith.addf %249, %250 : vector<8x32xf32>
    %252 = arith.truncf %251 : vector<8x32xf32> to vector<8x32xbf16>
    %c1_109 = arith.constant 1 : index
    %c0_110 = arith.constant 0 : index
    %c0_111 = arith.constant 0 : index
    %253 = vector.load %arg11[%c1_109, %c0_110, %c0_111] : memref<2x32x64xbf16, #tpu.memory_space<vmem>>, vector<1x32x64xbf16>
    %254 = vector.shape_cast %253 : vector<1x32x64xbf16> to vector<32x64xbf16>
    %cst_112 = arith.constant dense<0.000000e+00> : vector<8x64xf32>
    %255 = tpu.matmul %252, %254, %cst_112 {dimension_numbers = #tpu.dot_dimension_numbers<[1], [0], [0], [1], [0, 0, 1, 1], [], []>} : vector<8x32xbf16>, vector<32x64xbf16>, vector<8x64xf32> -> vector<8x64xf32>
    %c1_113 = arith.constant 1 : index
    %c0_114 = arith.constant 0 : index
    %c0_115 = arith.constant 0 : index
    %256 = vector.load %arg12[%c1_113, %c0_114, %c0_115] : memref<2x1x64xf32, #tpu.memory_space<vmem>>, vector<1x1x64xf32>
    %257 = vector.shape_cast %256 : vector<1x1x64xf32> to vector<1x64xf32>
    %258 = vector.broadcast %257 : vector<1x64xf32> to vector<8x64xf32>
    %259 = arith.addf %255, %258 : vector<8x64xf32>
    %260 = arith.mulf %259, %259 : vector<8x64xf32>
    %261 = arith.mulf %259, %260 : vector<8x64xf32>
    %cst_116 = arith.constant 4.471500e-02 : f32
    %262 = vector.broadcast %cst_116 : f32 to vector<8x64xf32>
    %263 = arith.mulf %262, %261 : vector<8x64xf32>
    %264 = arith.addf %259, %263 : vector<8x64xf32>
    %cst_117 = arith.constant 0.797884583 : f32
    %265 = vector.broadcast %cst_117 : f32 to vector<8x64xf32>
    %266 = arith.mulf %265, %264 : vector<8x64xf32>
    %267 = math.tanh %266 : vector<8x64xf32>
    %cst_118 = arith.constant 1.000000e+00 : f32
    %268 = vector.broadcast %cst_118 : f32 to vector<8x64xf32>
    %269 = arith.addf %268, %267 : vector<8x64xf32>
    %cst_119 = arith.constant 5.000000e-01 : f32
    %270 = vector.broadcast %cst_119 : f32 to vector<8x64xf32>
    %271 = arith.mulf %270, %269 : vector<8x64xf32>
    %272 = arith.mulf %259, %271 : vector<8x64xf32>
    %273 = arith.truncf %272 : vector<8x64xf32> to vector<8x64xbf16>
    %c1_120 = arith.constant 1 : index
    %c0_121 = arith.constant 0 : index
    %c0_122 = arith.constant 0 : index
    %274 = vector.load %arg13[%c1_120, %c0_121, %c0_122] : memref<2x64x32xbf16, #tpu.memory_space<vmem>>, vector<1x64x32xbf16>
    %275 = vector.shape_cast %274 : vector<1x64x32xbf16> to vector<64x32xbf16>
    %cst_123 = arith.constant dense<0.000000e+00> : vector<8x32xf32>
    %276 = tpu.matmul %273, %275, %cst_123 {dimension_numbers = #tpu.dot_dimension_numbers<[1], [0], [0], [1], [0, 0, 1, 1], [], []>} : vector<8x64xbf16>, vector<64x32xbf16>, vector<8x32xf32> -> vector<8x32xf32>
    %c1_124 = arith.constant 1 : index
    %c0_125 = arith.constant 0 : index
    %c0_126 = arith.constant 0 : index
    %277 = vector.load %arg14[%c1_124, %c0_125, %c0_126] : memref<2x1x32xf32, #tpu.memory_space<vmem>>, vector<1x1x32xf32>
    %278 = vector.shape_cast %277 : vector<1x1x32xf32> to vector<1x32xf32>
    %279 = vector.broadcast %278 : vector<1x32xf32> to vector<8x32xf32>
    %280 = arith.addf %276, %279 : vector<8x32xf32>
    %281 = arith.addf %251, %280 : vector<8x32xf32>
    %c1_127 = arith.constant 1 : index
    %c0_128 = arith.constant 0 : index
    %c0_129 = arith.constant 0 : index
    %282 = vector.load %arg15[%c1_127, %c0_128, %c0_129] : memref<2x1x32xf32, #tpu.memory_space<vmem>>, vector<1x1x32xf32>
    %283 = vector.shape_cast %282 : vector<1x1x32xf32> to vector<1x32xf32>
    %c1_130 = arith.constant 1 : index
    %c0_131 = arith.constant 0 : index
    %c0_132 = arith.constant 0 : index
    %284 = vector.load %arg16[%c1_130, %c0_131, %c0_132] : memref<2x1x32xf32, #tpu.memory_space<vmem>>, vector<1x1x32xf32>
    %285 = vector.shape_cast %284 : vector<1x1x32xf32> to vector<1x32xf32>
    %cst_133 = arith.constant dense<0.000000e+00> : vector<8xf32>
    %286 = vector.multi_reduction <add>, %281, %cst_133 [1] : vector<8x32xf32> to vector<8xf32>
    %287 = vector.shape_cast %286 : vector<8xf32> to vector<8x1xf32>
    %cst_134 = arith.constant 3.200000e+01 : f32
    %288 = vector.broadcast %cst_134 : f32 to vector<8x1xf32>
    %289 = arith.divf %287, %288 : vector<8x1xf32>
    %290 = vector.broadcast %289 : vector<8x1xf32> to vector<8x32xf32>
    %291 = arith.subf %281, %290 : vector<8x32xf32>
    %292 = arith.mulf %291, %291 : vector<8x32xf32>
    %cst_135 = arith.constant dense<0.000000e+00> : vector<8xf32>
    %293 = vector.multi_reduction <add>, %292, %cst_135 [1] : vector<8x32xf32> to vector<8xf32>
    %294 = vector.shape_cast %293 : vector<8xf32> to vector<8x1xf32>
    %cst_136 = arith.constant 3.200000e+01 : f32
    %295 = vector.broadcast %cst_136 : f32 to vector<8x1xf32>
    %296 = arith.divf %294, %295 : vector<8x1xf32>
    %297 = vector.broadcast %289 : vector<8x1xf32> to vector<8x32xf32>
    %298 = arith.subf %281, %297 : vector<8x32xf32>
    %cst_137 = arith.constant 9.99999974E-6 : f32
    %299 = vector.broadcast %cst_137 : f32 to vector<8x1xf32>
    %300 = arith.addf %296, %299 : vector<8x1xf32>
    %301 = math.rsqrt %300 : vector<8x1xf32>
    %302 = vector.broadcast %301 : vector<8x1xf32> to vector<8x32xf32>
    %303 = arith.mulf %298, %302 : vector<8x32xf32>
    %304 = vector.broadcast %283 : vector<1x32xf32> to vector<8x32xf32>
    %305 = arith.mulf %303, %304 : vector<8x32xf32>
    %306 = vector.broadcast %285 : vector<1x32xf32> to vector<8x32xf32>
    %307 = arith.addf %305, %306 : vector<8x32xf32>
    %c0_138 = arith.constant 0 : index
    %c0_139 = arith.constant 0 : index
    %308 = vector.load %arg17[%c0_138, %c0_139] : memref<32x32xf32, #tpu.memory_space<vmem>>, vector<32x32xf32>
    %cst_140 = arith.constant dense<0.000000e+00> : vector<8x32xf32>
    %309 = tpu.matmul %307, %308, %cst_140 {dimension_numbers = #tpu.dot_dimension_numbers<[1], [0], [0], [1], [0, 0, 1, 1], [], []>} : vector<8x32xf32>, vector<32x32xf32>, vector<8x32xf32> -> vector<8x32xf32>
    %c0_141 = arith.constant 0 : index
    %c0_142 = arith.constant 0 : index
    %310 = vector.load %arg18[%c0_141, %c0_142] : memref<1x32xf32, #tpu.memory_space<vmem>>, vector<1x32xf32>
    %311 = vector.broadcast %310 : vector<1x32xf32> to vector<8x32xf32>
    %312 = arith.addf %309, %311 : vector<8x32xf32>
    %c0_143 = arith.constant 0 : index
    %c0_144 = arith.constant 0 : index
    %313 = vector.load %arg19[%c0_143, %c0_144] : memref<1x32xf32, #tpu.memory_space<vmem>>, vector<1x32xf32>
    %c0_145 = arith.constant 0 : index
    %c0_146 = arith.constant 0 : index
    %314 = vector.load %arg20[%c0_145, %c0_146] : memref<1x32xf32, #tpu.memory_space<vmem>>, vector<1x32xf32>
    %cst_147 = arith.constant dense<0.000000e+00> : vector<8xf32>
    %315 = vector.multi_reduction <add>, %312, %cst_147 [1] : vector<8x32xf32> to vector<8xf32>
    %316 = vector.shape_cast %315 : vector<8xf32> to vector<8x1xf32>
    %cst_148 = arith.constant 3.200000e+01 : f32
    %317 = vector.broadcast %cst_148 : f32 to vector<8x1xf32>
    %318 = arith.divf %316, %317 : vector<8x1xf32>
    %319 = vector.broadcast %318 : vector<8x1xf32> to vector<8x32xf32>
    %320 = arith.subf %312, %319 : vector<8x32xf32>
    %321 = arith.mulf %320, %320 : vector<8x32xf32>
    %cst_149 = arith.constant dense<0.000000e+00> : vector<8xf32>
    %322 = vector.multi_reduction <add>, %321, %cst_149 [1] : vector<8x32xf32> to vector<8xf32>
    %323 = vector.shape_cast %322 : vector<8xf32> to vector<8x1xf32>
    %cst_150 = arith.constant 3.200000e+01 : f32
    %324 = vector.broadcast %cst_150 : f32 to vector<8x1xf32>
    %325 = arith.divf %323, %324 : vector<8x1xf32>
    %326 = vector.broadcast %318 : vector<8x1xf32> to vector<8x32xf32>
    %327 = arith.subf %312, %326 : vector<8x32xf32>
    %cst_151 = arith.constant 9.99999974E-6 : f32
    %328 = vector.broadcast %cst_151 : f32 to vector<8x1xf32>
    %329 = arith.addf %325, %328 : vector<8x1xf32>
    %330 = math.rsqrt %329 : vector<8x1xf32>
    %331 = vector.broadcast %330 : vector<8x1xf32> to vector<8x32xf32>
    %332 = arith.mulf %327, %331 : vector<8x32xf32>
    %333 = vector.broadcast %313 : vector<1x32xf32> to vector<8x32xf32>
    %334 = arith.mulf %332, %333 : vector<8x32xf32>
    %335 = vector.broadcast %314 : vector<1x32xf32> to vector<8x32xf32>
    %336 = arith.addf %334, %335 : vector<8x32xf32>
    %c0_152 = arith.constant 0 : index
    %c0_153 = arith.constant 0 : index
    %c0_154 = arith.constant 0 : index
    %337 = vector.load %arg23[%c0_152, %c0_153, %c0_154] : memref<1x8x32xf32, #tpu.memory_space<vmem>>, vector<1x8x32xf32>
    %338 = vector.shape_cast %337 : vector<1x8x32xf32> to vector<8x32xf32>
    %339 = vector.shape_cast %336 : vector<8x32xf32> to vector<1x8x32xf32>
    tpu.vector_store %arg23[%c0_152, %c0_153, %c0_154], %339 {strides = array<i32>} : memref<1x8x32xf32, #tpu.memory_space<vmem>>, vector<1x8x32xf32>,
    return
  }
  func.func @transform_0(%arg0: i32) -> (i32, i32, i32, i32) {
    %c0_i32 = arith.constant 0 : i32
    %c0_i32_0 = arith.constant 0 : i32
    %c0_i32_1 = arith.constant 0 : i32
    %c0_i32_2 = arith.constant 0 : i32
    return %arg0, %c0_i32, %c0_i32_0, %c0_i32_1 : i32, i32, i32, i32
  }
  func.func @transform_1(%arg0: i32) -> (i32, i32, i32, i32) {
    %c0_i32 = arith.constant 0 : i32
    %c0_i32_0 = arith.constant 0 : i32
    %c0_i32_1 = arith.constant 0 : i32
    %c0_i32_2 = arith.constant 0 : i32
    return %arg0, %c0_i32, %c0_i32_0, %c0_i32_1 : i32, i32, i32, i32
  }
  func.func @transform_2(%arg0: i32) -> (i32, i32) {
    %c0_i32 = arith.constant 0 : i32
    %c0_i32_0 = arith.constant 0 : i32
    %c0_i32_1 = arith.constant 0 : i32
    return %c0_i32, %c0_i32_0 : i32, i32
  }
  func.func @transform_3(%arg0: i32) -> (i32, i32) {
    %c0_i32 = arith.constant 0 : i32
    %c0_i32_0 = arith.constant 0 : i32
    %c0_i32_1 = arith.constant 0 : i32
    return %c0_i32, %c0_i32_0 : i32, i32
  }
  func.func @transform_4(%arg0: i32) -> (i32, i32, i32) {
    %c0_i32 = arith.constant 0 : i32
    %c0_i32_0 = arith.constant 0 : i32
    %c0_i32_1 = arith.constant 0 : i32
    %c0_i32_2 = arith.constant 0 : i32
    return %c0_i32, %c0_i32_0, %c0_i32_1 : i32, i32, i32
  }
  func.func @transform_5(%arg0: i32) -> (i32, i32, i32) {
    %c0_i32 = arith.constant 0 : i32
    %c0_i32_0 = arith.constant 0 : i32
    %c0_i32_1 = arith.constant 0 : i32
    %c0_i32_2 = arith.constant 0 : i32
    return %c0_i32, %c0_i32_0, %c0_i32_1 : i32, i32, i32
  }
  func.func @transform_6(%arg0: i32) -> (i32, i32, i32) {
    %c0_i32 = arith.constant 0 : i32
    %c0_i32_0 = arith.constant 0 : i32
    %c0_i32_1 = arith.constant 0 : i32
    %c0_i32_2 = arith.constant 0 : i32
    return %c0_i32, %c0_i32_0, %c0_i32_1 : i32, i32, i32
  }
  func.func @transform_7(%arg0: i32) -> (i32, i32, i32) {
    %c0_i32 = arith.constant 0 : i32
    %c0_i32_0 = arith.constant 0 : i32
    %c0_i32_1 = arith.constant 0 : i32
    %c0_i32_2 = arith.constant 0 : i32
    return %c0_i32, %c0_i32_0, %c0_i32_1 : i32, i32, i32
  }
  func.func @transform_8(%arg0: i32) -> (i32, i32, i32) {
    %c0_i32 = arith.constant 0 : i32
    %c0_i32_0 = arith.constant 0 : i32
    %c0_i32_1 = arith.constant 0 : i32
    %c0_i32_2 = arith.constant 0 : i32
    return %c0_i32, %c0_i32_0, %c0_i32_1 : i32, i32, i32
  }
  func.func @transform_9(%arg0: i32) -> (i32, i32, i32) {
    %c0_i32 = arith.constant 0 : i32
    %c0_i32_0 = arith.constant 0 : i32
    %c0_i32_1 = arith.constant 0 : i32
    %c0_i32_2 = arith.constant 0 : i32
    return %c0_i32, %c0_i32_0, %c0_i32_1 : i32, i32, i32
  }
  func.func @transform_10(%arg0: i32) -> (i32, i32, i32) {
    %c0_i32 = arith.constant 0 : i32
    %c0_i32_0 = arith.constant 0 : i32
    %c0_i32_1 = arith.constant 0 : i32
    %c0_i32_2 = arith.constant 0 : i32
    return %c0_i32, %c0_i32_0, %c0_i32_1 : i32, i32, i32
  }
  func.func @transform_11(%arg0: i32) -> (i32, i32, i32) {
    %c0_i32 = arith.constant 0 : i32
    %c0_i32_0 = arith.constant 0 : i32
    %c0_i32_1 = arith.constant 0 : i32
    %c0_i32_2 = arith.constant 0 : i32
    return %c0_i32, %c0_i32_0, %c0_i32_1 : i32, i32, i32
  }
  func.func @transform_12(%arg0: i32) -> (i32, i32, i32) {
    %c0_i32 = arith.constant 0 : i32
    %c0_i32_0 = arith.constant 0 : i32
    %c0_i32_1 = arith.constant 0 : i32
    %c0_i32_2 = arith.constant 0 : i32
    return %c0_i32, %c0_i32_0, %c0_i32_1 : i32, i32, i32
  }
  func.func @transform_13(%arg0: i32) -> (i32, i32, i32) {
    %c0_i32 = arith.constant 0 : i32
    %c0_i32_0 = arith.constant 0 : i32
    %c0_i32_1 = arith.constant 0 : i32
    %c0_i32_2 = arith.constant 0 : i32
    return %c0_i32, %c0_i32_0, %c0_i32_1 : i32, i32, i32
  }
  func.func @transform_14(%arg0: i32) -> (i32, i32, i32) {
    %c0_i32 = arith.constant 0 : i32
    %c0_i32_0 = arith.constant 0 : i32
    %c0_i32_1 = arith.constant 0 : i32
    %c0_i32_2 = arith.constant 0 : i32
    return %c0_i32, %c0_i32_0, %c0_i32_1 : i32, i32, i32
  }
  func.func @transform_15(%arg0: i32) -> (i32, i32, i32) {
    %c0_i32 = arith.constant 0 : i32
    %c0_i32_0 = arith.constant 0 : i32
    %c0_i32_1 = arith.constant 0 : i32
    %c0_i32_2 = arith.constant 0 : i32
    return %c0_i32, %c0_i32_0, %c0_i32_1 : i32, i32, i32
  }
  func.func @transform_16(%arg0: i32) -> (i32, i32) {
    %c0_i32 = arith.constant 0 : i32
    %c0_i32_0 = arith.constant 0 : i32
    %c0_i32_1 = arith.constant 0 : i32
    return %c0_i32, %c0_i32_0 : i32, i32
  }
  func.func @transform_17(%arg0: i32) -> (i32, i32) {
    %c0_i32 = arith.constant 0 : i32
    %c0_i32_0 = arith.constant 0 : i32
    %c0_i32_1 = arith.constant 0 : i32
    return %c0_i32, %c0_i32_0 : i32, i32
  }
  func.func @transform_18(%arg0: i32) -> (i32, i32) {
    %c0_i32 = arith.constant 0 : i32
    %c0_i32_0 = arith.constant 0 : i32
    %c0_i32_1 = arith.constant 0 : i32
    return %c0_i32, %c0_i32_0 : i32, i32
  }
  func.func @transform_19(%arg0: i32) -> (i32, i32) {
    %c0_i32 = arith.constant 0 : i32
    %c0_i32_0 = arith.constant 0 : i32
    %c0_i32_1 = arith.constant 0 : i32
    return %c0_i32, %c0_i32_0 : i32, i32
  }
  func.func @transform_20(%arg0: i32) -> (i32, i32) {
    %c0_i32 = arith.constant 0 : i32
    %c0_i32_0 = arith.constant 0 : i32
    %c0_i32_1 = arith.constant 0 : i32
    return %c0_i32, %c0_i32_0 : i32, i32
  }
  func.func @transform_21(%arg0: i32) -> (i32, i32) {
    %c0_i32 = arith.constant 0 : i32
    %c0_i32_0 = arith.constant 0 : i32
    %c0_i32_1 = arith.constant 0 : i32
    return %c0_i32, %c0_i32_0 : i32, i32
  }
  func.func @transform_22(%arg0: i32) -> (i32, i32, i32) {
    %c0_i32 = arith.constant 0 : i32
    %c0_i32_0 = arith.constant 0 : i32
    %c0_i32_1 = arith.constant 0 : i32
    return %arg0, %c0_i32, %c0_i32_0 : i32, i32, i32
  }
}

</mosaic_0001>

<llo_original>
// kernel: tpu_custom_call.1
$region0: #{tpu_custom_call.1}
  #allocation0 [shape = 'u32[]', space=smem, size = 0x4, offset = 0x4, fixed_abs, tag = 'smem constant byte address 0x4 - core index']
  #allocation1 [shape = 'u32[144,128]{1,0:T(1,128)}', space=vmem, size = 0x12000, scoped, tag = 'internal scratch']
  %s0 = inlined_call_operand.vmem [shape: f32[1,8,8,32], index: 0, kind: input, shape index: {}]
  %s1 = inlined_call_operand.vmem [shape: f32[1,8,8,1], index: 1, kind: input, shape index: {}]
  %s2 = inlined_call_operand.hbm [shape: f32[1,32], index: 2, kind: input, shape index: {}]
  %s3 = inlined_call_operand.hbm [shape: f32[1,32], index: 3, kind: input, shape index: {}]
  %s4 = inlined_call_operand.vmem [shape: bf16[2,32,96], index: 4, kind: input, shape index: {}]
  %s5 = inlined_call_operand.hbm [shape: f32[2,1,96], index: 5, kind: input, shape index: {}]
  %s6 = inlined_call_operand.vmem [shape: bf16[2,32,32], index: 6, kind: input, shape index: {}]
  %s7 = inlined_call_operand.vmem [shape: f32[2,1,32], index: 7, kind: input, shape index: {}]
  %s8 = inlined_call_operand.vmem [shape: f32[2,1,32], index: 8, kind: input, shape index: {}]
  %s9 = inlined_call_operand.vmem [shape: f32[2,1,32], index: 9, kind: input, shape index: {}]
  %s10 = inlined_call_operand.vmem [shape: bf16[2,32,64], index: 10, kind: input, shape index: {}]
  %s11 = inlined_call_operand.vmem [shape: f32[2,1,64], index: 11, kind: input, shape index: {}]
  %s12 = inlined_call_operand.vmem [shape: bf16[2,64,32], index: 12, kind: input, shape index: {}]
  %s13 = inlined_call_operand.vmem [shape: f32[2,1,32], index: 13, kind: input, shape index: {}]
  %s14 = inlined_call_operand.vmem [shape: f32[2,1,32], index: 14, kind: input, shape index: {}]
  %s15 = inlined_call_operand.vmem [shape: f32[2,1,32], index: 15, kind: input, shape index: {}]
  %s16 = inlined_call_operand.hbm [shape: f32[32,32], index: 16, kind: input, shape index: {}]
  %s17 = inlined_call_operand.vmem [shape: f32[1,32], index: 17, kind: input, shape index: {}]
  %s18 = inlined_call_operand.vmem [shape: f32[1,32], index: 18, kind: input, shape index: {}]
  %s19 = inlined_call_operand.vmem [shape: f32[1,32], index: 19, kind: input, shape index: {}]
  %s20 = inlined_call_operand.vmem [shape: bf16[32,4], index: 20, kind: input, shape index: {}]
  %s21 = inlined_call_operand.vmem [shape: bf16[4,32], index: 21, kind: input, shape index: {}]
  %s22 = inlined_call_operand.hbm [shape: f32[1,8,32], index: 22, kind: output, shape index: {}]
  %s23 = sld [smem:[#allocation0]]
  $region114: #{tpu_custom_call.1} parent=0
    _
  %s25 = ssub.s32 1, %s23
  %s26 = scalar_select 0, %s25, %s23
  $region1: #{tpu_custom_call.1} parent=0
    #allocation2 [shape = 'u8[512]{0}', space=vmem, size = 0x400, scoped, tag = 'input window, operand 2, single buffered']
    #allocation3 [shape = 's32[1]{0}', space=sflag, size = 0x4, scoped, tag = 'scoped memory for tpu_custom_call.1']
    #allocation4 [shape = 's32[1]{0}', space=sflag, size = 0x4, scoped, tag = 'scoped memory for tpu_custom_call.1']
    #allocation5 [shape = 'u8[512]{0}', space=vmem, size = 0x400, scoped, tag = 'input window, operand 3, single buffered']
    #allocation6 [shape = 's32[1]{0}', space=sflag, size = 0x4, scoped, tag = 'scoped memory for tpu_custom_call.1']
    #allocation7 [shape = 'u8[1024]{0}', space=vmem, size = 0x400, scoped, tag = 'input window, operand 5, single buffered']
    #allocation8 [shape = 'u8[16384]{0}', space=vmem, size = 0x4000, scoped, tag = 'input window, operand 16, single buffered']
    #allocation9 [shape = 's32[1]{0}', space=sflag, size = 0x4, scoped, tag = 'scoped memory for tpu_custom_call.1']
    #allocation10 [shape = 'u8[4096]{0}', space=vmem, size = 0x1000, scoped, tag = 'output window, operand 0, single buffered']
    %27 = vsyncpa [#allocation3], 0
    %28 = vsyncpa [#allocation6], 0
    %29 = vsyncpa [#allocation9], 0
    %30 = vsyncpa [#allocation4], 0
    // Predicated region
    $region2: #{tpu_custom_call.1} parent=1 // pred_check
      _
    $region3: #{tpu_custom_call.1} parent=1 // pred_check_branch
      %32 = sbr.rel (0) target = $region5
    $region4: #{tpu_custom_call.1} parent=1 // pred_region
      _
    $region5: #{tpu_custom_call.1} parent=1 // pred_fallthru
      _
    // Predicated region
    $region6: #{tpu_custom_call.1} parent=1 // pred_check
      _
    $region7: #{tpu_custom_call.1} parent=1 // pred_check_branch
      %34 = sbr.rel (0) target = $region9
    $region8: #{tpu_custom_call.1} parent=1 // pred_region
      _
    $region9: #{tpu_custom_call.1} parent=1 // pred_fallthru
      _
    // Predicated region
    $region10: #{tpu_custom_call.1} parent=1 // pred_check
      _
    $region11: #{tpu_custom_call.1} parent=1 // pred_check_branch
      %36 = sbr.rel (0) target = $region13
    $region12: #{tpu_custom_call.1} parent=1 // pred_region
      %s38 = ssub.s32 16, 16
      %39 = vsyncadd [#allocation3], %s38
      %s41 = sshll.u32 [#allocation2], 4
      %s42 = int_to_ptr.vmem [resolvable:$true] %s41
      %44 = dma.hbm_to_vmem [thread:$0]  %s2, 16, %s42, [#allocation3]
    $region13: #{tpu_custom_call.1} parent=1 // pred_fallthru
      _
    // Predicated region
    $region14: #{tpu_custom_call.1} parent=1 // pred_check
      _
    $region15: #{tpu_custom_call.1} parent=1 // pred_check_branch
      %46 = sbr.rel (0) target = $region17
    $region16: #{tpu_custom_call.1} parent=1 // pred_region
      %s48 = ssub.s32 16, 16
      %49 = vsyncadd [#allocation6], %s48
      %s51 = sshll.u32 [#allocation5], 4
      %s52 = int_to_ptr.vmem [resolvable:$true] %s51
      %54 = dma.hbm_to_vmem [thread:$0]  %s3, 16, %s52, [#allocation6]
    $region17: #{tpu_custom_call.1} parent=1 // pred_fallthru
      _
    // Predicated region
    $region18: #{tpu_custom_call.1} parent=1 // pred_check
      _
    $region19: #{tpu_custom_call.1} parent=1 // pred_check_branch
      %56 = sbr.rel (0) target = $region21
    $region20: #{tpu_custom_call.1} parent=1 // pred_region
      _
    $region21: #{tpu_custom_call.1} parent=1 // pred_fallthru
      _
    // Predicated region
    $region22: #{tpu_custom_call.1} parent=1 // pred_check
      _
    $region23: #{tpu_custom_call.1} parent=1 // pred_check_branch
      %58 = sbr.rel (0) target = $region25
    $region24: #{tpu_custom_call.1} parent=1 // pred_region
      %s60 = ssub.s32 32, 32
      %61 = vsyncadd [#allocation6], %s60
      %s62 = sshll.u32 [#allocation7], 4
      %s63 = int_to_ptr.vmem [resolvable:$true] %s62
      %68 = dma.hbm_to_vmem [thread:$0]  %s5, 32, %s63, [#allocation6], 16, 16, 1
    $region25: #{tpu_custom_call.1} parent=1 // pred_fallthru
      _
    // Predicated region
    $region26: #{tpu_custom_call.1} parent=1 // pred_check
      _
    $region27: #{tpu_custom_call.1} parent=1 // pred_check_branch
      %70 = sbr.rel (0) target = $region29
    $region28: #{tpu_custom_call.1} parent=1 // pred_region
      _
    $region29: #{tpu_custom_call.1} parent=1 // pred_fallthru
      _
    // Predicated region
    $region30: #{tpu_custom_call.1} parent=1 // pred_check
      _
    $region31: #{tpu_custom_call.1} parent=1 // pred_check_branch
      %72 = sbr.rel (0) target = $region33
    $region32: #{tpu_custom_call.1} parent=1 // pred_region
      _
    $region33: #{tpu_custom_call.1} parent=1 // pred_fallthru
      _
    // Predicated region
    $region34: #{tpu_custom_call.1} parent=1 // pred_check
      _
    $region35: #{tpu_custom_call.1} parent=1 // pred_check_branch
      %74 = sbr.rel (0) target = $region37
    $region36: #{tpu_custom_call.1} parent=1 // pred_region
      _
    $region37: #{tpu_custom_call.1} parent=1 // pred_fallthru
      _
    // Predicated region
    $region38: #{tpu_custom_call.1} parent=1 // pred_check
      _
    $region39: #{tpu_custom_call.1} parent=1 // pred_check_branch
      %76 = sbr.rel (0) target = $region41
    $region40: #{tpu_custom_call.1} parent=1 // pred_region
      _
    $region41: #{tpu_custom_call.1} parent=1 // pred_fallthru
      _
    // Predicated region
    $region42: #{tpu_custom_call.1} parent=1 // pred_check
      _
    $region43: #{tpu_custom_call.1} parent=1 // pred_check_branch
      %78 = sbr.rel (0) target = $region45
    $region44: #{tpu_custom_call.1} parent=1 // pred_region
      _
    $region45: #{tpu_custom_call.1} parent=1 // pred_fallthru
      _
    // Predicated region
    $region46: #{tpu_custom_call.1} parent=1 // pred_check
      _
    $region47: #{tpu_custom_call.1} parent=1 // pred_check_branch
      %80 = sbr.rel (0) target = $region49
    $region48: #{tpu_custom_call.1} parent=1 // pred_region
      _
    $region49: #{tpu_custom_call.1} parent=1 // pred_fallthru
      _
    // Predicated region
    $region50: #{tpu_custom_call.1} parent=1 // pred_check
      _
    $region51: #{tpu_custom_call.1} parent=1 // pred_check_branch
      %82 = sbr.rel (0) target = $region53
    $region52: #{tpu_custom_call.1} parent=1 // pred_region
      _
    $region53: #{tpu_custom_call.1} parent=1 // pred_fallthru
      _
    // Predicated region
    $region54: #{tpu_custom_call.1} parent=1 // pred_check
      _
    $region55: #{tpu_custom_call.1} parent=1 // pred_check_branch
      %84 = sbr.rel (0) target = $region57
    $region56: #{tpu_custom_call.1} parent=1 // pred_region
      _
    $region57: #{tpu_custom_call.1} parent=1 // pred_fallthru
      _
    // Predicated region
    $region58: #{tpu_custom_call.1} parent=1 // pred_check
      _
    $region59: #{tpu_custom_call.1} parent=1 // pred_check_branch
      %86 = sbr.rel (0) target = $region61
    $region60: #{tpu_custom_call.1} parent=1 // pred_region
      _
    $region61: #{tpu_custom_call.1} parent=1 // pred_fallthru
      _
    // Predicated region
    $region62: #{tpu_custom_call.1} parent=1 // pred_check
      _
    $region63: #{tpu_custom_call.1} parent=1 // pred_check_branch
      %88 = sbr.rel (0) target = $region65
    $region64: #{tpu_custom_call.1} parent=1 // pred_region
      _
    $region65: #{tpu_custom_call.1} parent=1 // pred_fallthru
      _
    // Predicated region
    $region66: #{tpu_custom_call.1} parent=1 // pred_check
      _
    $region67: #{tpu_custom_call.1} parent=1 // pred_check_branch
      %90 = sbr.rel (0) target = $region69
    $region68: #{tpu_custom_call.1} parent=1 // pred_region
      %s92 = ssub.s32 512, 512
      %93 = vsyncadd [#allocation9], %s92
      %s94 = sshll.u32 [#allocation8], 4
      %s95 = int_to_ptr.vmem [resolvable:$true] %s94
      %100 = dma.hbm_to_vmem [thread:$0]  %s16, 512, %s95, [#allocation9], 128, 128, 8
    $region69: #{tpu_custom_call.1} parent=1 // pred_fallthru
      _
    // Predicated region
    $region70: #{tpu_custom_call.1} parent=1 // pred_check
      _
    $region71: #{tpu_custom_call.1} parent=1 // pred_check_branch
      %102 = sbr.rel (0) target = $region73
    $region72: #{tpu_custom_call.1} parent=1 // pred_region
      _
    $region73: #{tpu_custom_call.1} parent=1 // pred_fallthru
      _
    // Predicated region
    $region74: #{tpu_custom_call.1} parent=1 // pred_check
      _
    $region75: #{tpu_custom_call.1} parent=1 // pred_check_branch
      %104 = sbr.rel (0) target = $region77
    $region76: #{tpu_custom_call.1} parent=1 // pred_region
      _
    $region77: #{tpu_custom_call.1} parent=1 // pred_fallthru
      _
    // Predicated region
    $region78: #{tpu_custom_call.1} parent=1 // pred_check
      _
    $region79: #{tpu_custom_call.1} parent=1 // pred_check_branch
      %106 = sbr.rel (0) target = $region81
    $region80: #{tpu_custom_call.1} parent=1 // pred_region
      _
    $region81: #{tpu_custom_call.1} parent=1 // pred_fallthru
      _
    // Predicated region
    $region82: #{tpu_custom_call.1} parent=1 // pred_check
      _
    $region83: #{tpu_custom_call.1} parent=1 // pred_check_branch
      %108 = sbr.rel (0) target = $region85
    $region84: #{tpu_custom_call.1} parent=1 // pred_region
      _
    $region85: #{tpu_custom_call.1} parent=1 // pred_fallthru
      _
    // Predicated region
    $region86: #{tpu_custom_call.1} parent=1 // pred_check
      _
    $region87: #{tpu_custom_call.1} parent=1 // pred_check_branch
      %110 = sbr.rel (0) target = $region89
    $region88: #{tpu_custom_call.1} parent=1 // pred_region
      _
    $region89: #{tpu_custom_call.1} parent=1 // pred_fallthru
      _
    // Predicated region
    $region90: #{tpu_custom_call.1} parent=1 // pred_check
      _
    $region91: #{tpu_custom_call.1} parent=1 // pred_check_branch
      %112 = sbr.rel (0) target = $region93
    $region92: #{tpu_custom_call.1} parent=1 // pred_region
      %113 = dma.done [#allocation3], 16
    $region93: #{tpu_custom_call.1} parent=1 // pred_fallthru
      _
    // Predicated region
    $region94: #{tpu_custom_call.1} parent=1 // pred_check
      _
    $region95: #{tpu_custom_call.1} parent=1 // pred_check_branch
      %115 = sbr.rel (0) target = $region97
    $region96: #{tpu_custom_call.1} parent=1 // pred_region
      %116 = dma.done [#allocation6], 16
    $region97: #{tpu_custom_call.1} parent=1 // pred_fallthru
      _
    // Predicated region
    $region98: #{tpu_custom_call.1} parent=1 // pred_check
      _
    $region99: #{tpu_custom_call.1} parent=1 // pred_check_branch
      %118 = sbr.rel (0) target = $region101
    $region100: #{tpu_custom_call.1} parent=1 // pred_region
      %119 = dma.done [#allocation6], 32
    $region101: #{tpu_custom_call.1} parent=1 // pred_fallthru
      _
    // Predicated region
    $region102: #{tpu_custom_call.1} parent=1 // pred_check
      _
    $region103: #{tpu_custom_call.1} parent=1 // pred_check_branch
      %121 = sbr.rel (0) target = $region105
    $region104: #{tpu_custom_call.1} parent=1 // pred_region
      %122 = dma.done [#allocation9], 512
    $region105: #{tpu_custom_call.1} parent=1 // pred_fallthru
      _
    %v124 = vld [vmem:[%s0] sm:$0xff]
    %v125 = vld [vmem:[%s0 + $0x8] sm:$0xff]
    %v126 = vld [vmem:[%s0 + $0x10] sm:$0xff]
    %v127 = vld [vmem:[%s0 + $0x18] sm:$0xff]
    %v128 = vld [vmem:[%s0 + $0x20] sm:$0xff]
    %v129 = vld [vmem:[%s0 + $0x28] sm:$0xff]
    %v130 = vld [vmem:[%s0 + $0x30] sm:$0xff]
    %v131 = vld [vmem:[%s0 + $0x38] sm:$0xff]
    %v132 = vld [vmem:[%s1] sm:$0xff]
    %v133 = vld [vmem:[%s1 + $0x8] sm:$0xff]
    %v134 = vld [vmem:[%s1 + $0x10] sm:$0xff]
    %v135 = vld [vmem:[%s1 + $0x18] sm:$0xff]
    %v136 = vld [vmem:[%s1 + $0x20] sm:$0xff]
    %v137 = vld [vmem:[%s1 + $0x28] sm:$0xff]
    %v138 = vld [vmem:[%s1 + $0x30] sm:$0xff]
    %v139 = vld [vmem:[%s1 + $0x38] sm:$0xff]
    %v140 = vsub.f32 1.0, %v132
    %v141 = vsub.f32 1.0, %v133
    %v142 = vsub.f32 1.0, %v134
    %v143 = vsub.f32 1.0, %v135
    %v144 = vsub.f32 1.0, %v136
    %v145 = vsub.f32 1.0, %v137
    %v146 = vsub.f32 1.0, %v138
    %v147 = vsub.f32 1.0, %v139
    %v148 = vmul.f32 %v140, -1e+09
    %v149 = vmul.f32 %v141, -1e+09
    %v150 = vmul.f32 %v142, -1e+09
    %v151 = vmul.f32 %v143, -1e+09
    %v152 = vmul.f32 %v144, -1e+09
    %v153 = vmul.f32 %v145, -1e+09
    %v154 = vmul.f32 %v146, -1e+09
    %v155 = vmul.f32 %v147, -1e+09
    %v156 = vld [vmem:[#allocation2] sm:$0x1]
    %v157 = vld [vmem:[#allocation5] sm:$0x1]
    %vm158 = vcmask 261120
    %v159 = vsel %vm158, %v124, 0.0
    %160 = vadd.xlane.f32.xlu0 %v159
    %v161 = vpop.xlane.xlu0 %160
    %v162 = vsel %vm158, %v125, 0.0
    %163 = vadd.xlane.f32.xlu0 %v162
    %v164 = vpop.xlane.xlu0 %163
    %v165 = vsel %vm158, %v126, 0.0
    %166 = vadd.xlane.f32.xlu0 %v165
    %v167 = vpop.xlane.xlu0 %166
    %v168 = vsel %vm158, %v127, 0.0
    %169 = vadd.xlane.f32.xlu0 %v168
    %v170 = vpop.xlane.xlu0 %169
    %v171 = vsel %vm158, %v128, 0.0
    %172 = vadd.xlane.f32.xlu0 %v171
    %v173 = vpop.xlane.xlu0 %172
    %v174 = vsel %vm158, %v129, 0.0
    %175 = vadd.xlane.f32.xlu0 %v174
    %v176 = vpop.xlane.xlu0 %175
    %v177 = vsel %vm158, %v130, 0.0
    %178 = vadd.xlane.f32.xlu0 %v177
    %v179 = vpop.xlane.xlu0 %178
    %v180 = vsel %vm158, %v131, 0.0
    %181 = vadd.xlane.f32.xlu0 %v180
    %v182 = vpop.xlane.xlu0 %181
    %v183 = vrcp.pop 32.0
    %v184 = vmul.f32 %v161, %v183
    %v185 = vmul.f32 %v164, %v183
    %v186 = vmul.f32 %v167, %v183
    %v187 = vmul.f32 %v170, %v183
    %v188 = vmul.f32 %v173, %v183
    %v189 = vmul.f32 %v176, %v183
    %v190 = vmul.f32 %v179, %v183
    %v191 = vmul.f32 %v182, %v183
    %v192 = vsub.f32 %v124, %v184
    %v193 = vsub.f32 %v125, %v185
    %v194 = vsub.f32 %v126, %v186
    %v195 = vsub.f32 %v127, %v187
    %v196 = vsub.f32 %v128, %v188
    %v197 = vsub.f32 %v129, %v189
    %v198 = vsub.f32 %v130, %v190
    %v199 = vsub.f32 %v131, %v191
    %v200 = vmul.f32 %v192, %v192
    %v201 = vmul.f32 %v193, %v193
    %v202 = vmul.f32 %v194, %v194
    %v203 = vmul.f32 %v195, %v195
    %v204 = vmul.f32 %v196, %v196
    %v205 = vmul.f32 %v197, %v197
    %v206 = vmul.f32 %v198, %v198
    %v207 = vmul.f32 %v199, %v199
    %v208 = vsel %vm158, %v200, 0.0
    %209 = vadd.xlane.f32.xlu0 %v208
    %v210 = vpop.xlane.xlu0 %209
    %v211 = vsel %vm158, %v201, 0.0
    %212 = vadd.xlane.f32.xlu0 %v211
    %v213 = vpop.xlane.xlu0 %212
    %v214 = vsel %vm158, %v202, 0.0
    %215 = vadd.xlane.f32.xlu0 %v214
    %v216 = vpop.xlane.xlu0 %215
    %v217 = vsel %vm158, %v203, 0.0
    %218 = vadd.xlane.f32.xlu0 %v217
    %v219 = vpop.xlane.xlu0 %218
    %v220 = vsel %vm158, %v204, 0.0
    %221 = vadd.xlane.f32.xlu0 %v220
    %v222 = vpop.xlane.xlu0 %221
    %v223 = vsel %vm158, %v205, 0.0
    %224 = vadd.xlane.f32.xlu0 %v223
    %v225 = vpop.xlane.xlu0 %224
    %v226 = vsel %vm158, %v206, 0.0
    %227 = vadd.xlane.f32.xlu0 %v226
    %v228 = vpop.xlane.xlu0 %227
    %v229 = vsel %vm158, %v207, 0.0
    %230 = vadd.xlane.f32.xlu0 %v229
    %v231 = vpop.xlane.xlu0 %230
    %v232 = vmul.f32 %v210, %v183
    %v233 = vmul.f32 %v213, %v183
    %v234 = vmul.f32 %v216, %v183
    %v235 = vmul.f32 %v219, %v183
    %v236 = vmul.f32 %v222, %v183
    %v237 = vmul.f32 %v225, %v183
    %v238 = vmul.f32 %v228, %v183
    %v239 = vmul.f32 %v231, %v183
    %v240 = vadd.f32 %v232, 1e-05
    %v241 = vadd.f32 %v233, 1e-05
    %v242 = vadd.f32 %v234, 1e-05
    %v243 = vadd.f32 %v235, 1e-05
    %v244 = vadd.f32 %v236, 1e-05
    %v245 = vadd.f32 %v237, 1e-05
    %v246 = vadd.f32 %v238, 1e-05
    %v247 = vadd.f32 %v239, 1e-05
    %v248 = vrsqrt.pop %v240
    %v249 = vrsqrt.pop %v241
    %v250 = vrsqrt.pop %v242
    %v251 = vrsqrt.pop %v243
    %v252 = vrsqrt.pop %v244
    %v253 = vrsqrt.pop %v245
    %v254 = vrsqrt.pop %v246
    %v255 = vrsqrt.pop %v247
    %v256 = vmul.f32 %v192, %v248
    %v257 = vmul.f32 %v193, %v249
    %v258 = vmul.f32 %v194, %v250
    %v259 = vmul.f32 %v195, %v251
    %v260 = vmul.f32 %v196, %v252
    %v261 = vmul.f32 %v197, %v253
    %v262 = vmul.f32 %v198, %v254
    %v263 = vmul.f32 %v199, %v255
    %v265 = vlaneseq
    %v266 = vshrl.u32 %v265, 7
    %v267 = vsub.s32 0, %v266
    %v268 = vrot.slane %v156, %v267
    %v270 = vmul.f32 %v256, %v268
    %v271 = vmul.f32 %v257, %v268
    %v272 = vmul.f32 %v258, %v268
    %v273 = vmul.f32 %v259, %v268
    %v274 = vmul.f32 %v260, %v268
    %v275 = vmul.f32 %v261, %v268
    %v276 = vmul.f32 %v262, %v268
    %v277 = vmul.f32 %v263, %v268
    %v279 = vlaneseq
    %v280 = vshrl.u32 %v279, 7
    %v281 = vsub.s32 0, %v280
    %v282 = vrot.slane %v157, %v281
    %v284 = vadd.f32 %v270, %v282
    %v285 = vadd.f32 %v271, %v282
    %v286 = vadd.f32 %v272, %v282
    %v287 = vadd.f32 %v273, %v282
    %v288 = vadd.f32 %v274, %v282
    %v289 = vadd.f32 %v275, %v282
    %v290 = vadd.f32 %v276, %v282
    %v291 = vadd.f32 %v277, %v282
    %v292 = vld [vmem:[%s20] sm:$0xf]
    %v293 = vld [vmem:[%s20 + $0x4] sm:$0xf]
    %v294 = vld [vmem:[%s20 + $0x8] sm:$0xf]
    %v295 = vld [vmem:[%s20 + $0xc] sm:$0xf]
    %v296 = vld [vmem:[%s21] sm:$0x3]
    %v297 = vpack.c.bf16 %v285, %v284
    %v298 = vpack.c.bf16 %v287, %v286
    %v299 = vpack.c.bf16 %v289, %v288
    %v300 = vpack.c.bf16 %v291, %v290
    %v301 = vld [vmem:[%s4] sm:$0xf]
    %v302 = vld [vmem:[%s4 + $0x4] sm:$0xf]
    %v303 = vld [vmem:[%s4 + $0x8] sm:$0xf]
    %v304 = vld [vmem:[%s4 + $0xc] sm:$0xf]
    %v305 = vld [vmem:[#allocation7] sm:$0x1]
    %v307 = vlaneseq
    %v308 = vshrl.u32 %v307, 7
    %v309 = vsub.s32 0, %v308
    %v310 = vrot.slane %v305, %v309
    %v316 = vunpack.c.l.b16 %v301
    %v317 = vunpack.c.l.b16 %v302
    %v318 = vunpack.c.l.b16 %v303
    %v319 = vunpack.c.l.b16 %v304
    %v320 = vpack.c.b16 %v317, %v316
    %v321 = vpack.c.b16 %v319, %v318
    %v325 = vsel %vm158, %v297, 0
    %v328 = vsel %vm158, %v298, 0
    %v331 = vsel %vm158, %v299, 0
    %v334 = vsel %vm158, %v300, 0
    %336 = vmatprep.subr.bf16.mxu0 0
    %337 = vmatpush1.bf16.msra.mxu0 0
    %338 = vmatprep.subr.bf16.mxu0 0
    %339 = vmatpush1.bf16.msra.mxu0 0
    %340 = vmatprep.subr.bf16.mxu0 0
    %341 = vmatpush1.bf16.msra.mxu0 0
    %342 = vmatprep.subr.bf16.mxu0 0
    %343 = vmatpush1.bf16.msra.mxu0 0
    %344 = vmatprep.subr.bf16.mxu0 0
    %345 = vmatpush1.bf16.msra.mxu0 0
    %346 = vmatprep.subr.bf16.mxu0 0
    %347 = vmatpush1.bf16.msra.mxu0 0
    %348 = vmatprep.subr.bf16.mxu0 0
    %349 = vmatpush1.bf16.msra.mxu0 %v321
    %350 = vmatprep.subr.bf16.mxu0 0
    %351 = vmatpush1.bf16.msra.mxu0 %v320
    %352 = vmatprep.subr.bf16.mxu0 0
    %353 = vmatpush2.bf16.msra.mxu0 0
    %354 = vmatprep.subr.bf16.mxu0 0
    %355 = vmatpush2.bf16.msra.mxu0 0
    %356 = vmatprep.subr.bf16.mxu0 0
    %357 = vmatpush2.bf16.msra.mxu0 0
    %358 = vmatprep.subr.bf16.mxu0 0
    %359 = vmatpush2.bf16.msra.mxu0 0
    %360 = vmatprep.subr.bf16.mxu0 0
    %361 = vmatpush2.bf16.msra.mxu0 0
    %362 = vmatprep.subr.bf16.mxu0 0
    %363 = vmatpush2.bf16.msra.mxu0 0
    %364 = vmatprep.subr.bf16.mxu0 0
    %365 = vmatpush2.bf16.msra.mxu0 0
    %366 = vmatprep.subr.bf16.mxu0 0
    %367 = vmatpush2.bf16.msra.mxu0 0
    %368 = vmatprep.mubr.bf16.mxu0 0
    %369 = vmatmul.mubr.bf16.gmra.mxu0 %v325
    %v370 = vpop.f32.mrf.mxu0
    %v371 = vadd.f32 %v310, %v370
    %v372 = vpop.f32.mrf.mxu0
    %v373 = vpop.f32.mrf.mxu0
    %v374 = vadd.f32 %v310, %v373
    %v375 = vpop.f32.mrf.mxu0
    %376 = vmatprep.mubr.bf16.mxu0 0
    %377 = vmatmul.mubr.bf16.gmra.mxu0 %v328
    %v378 = vpop.f32.mrf.mxu0
    %v379 = vadd.f32 %v310, %v378
    %v380 = vpop.f32.mrf.mxu0
    %v381 = vpop.f32.mrf.mxu0
    %v382 = vadd.f32 %v310, %v381
    %v383 = vpop.f32.mrf.mxu0
    %384 = vmatprep.mubr.bf16.mxu0 0
    %385 = vmatmul.mubr.bf16.gmra.mxu0 %v331
    %v386 = vpop.f32.mrf.mxu0
    %v387 = vadd.f32 %v310, %v386
    %v388 = vpop.f32.mrf.mxu0
    %v389 = vpop.f32.mrf.mxu0
    %v390 = vadd.f32 %v310, %v389
    %v391 = vpop.f32.mrf.mxu0
    %392 = vmatprep.mubr.bf16.mxu0 0
    %393 = vmatmul.mubr.bf16.gmra.mxu0 %v334
    %v394 = vpop.f32.mrf.mxu0
    %v395 = vadd.f32 %v310, %v394
    %v396 = vpop.f32.mrf.mxu0
    %v397 = vpop.f32.mrf.mxu0
    %v398 = vadd.f32 %v310, %v397
    %v399 = vpop.f32.mrf.mxu0
    %400 = vdwg.mxu0
    %v409 = vcombine.high %v371, %v371
    %v411 = vunpack.c.l.s4 1966171168
    %v412 = vunpack.c.0.s8 %v411
    %v413 = vlaneseq
    %v414 = vshrl.u32 %v413, 7
    %v415 = vsub.s32 %v412, %v414
    %v416 = vrot.slane %v371, %v415
    %v418 = vunpack.c.l.s4 1966171168
    %v419 = vunpack.c.0.s8 %v418
    %v420 = vlaneseq
    %v421 = vshrl.u32 %v420, 7
    %v422 = vsub.s32 %v419, %v421
    %v423 = vrot.slane %v409, %v422
    %v424 = vcombine.high %v416, %v416
    %v425 = vcombine.high %v423, %v423
    %v427 = vunpack.c.l.s4 1966171168
    %v428 = vunpack.c.0.s8 %v427
    %v429 = vlaneseq
    %v430 = vshrl.u32 %v429, 7
    %v431 = vsub.s32 %v428, %v430
    %v432 = vrot.slane %v416, %v431
    %v434 = vunpack.c.l.s4 1966171168
    %v435 = vunpack.c.0.s8 %v434
    %v436 = vlaneseq
    %v437 = vshrl.u32 %v436, 7
    %v438 = vsub.s32 %v435, %v437
    %v439 = vrot.slane %v423, %v438
    %v441 = vunpack.c.l.s4 1966171168
    %v442 = vunpack.c.0.s8 %v441
    %v443 = vlaneseq
    %v444 = vshrl.u32 %v443, 7
    %v445 = vsub.s32 %v442, %v444
    %v446 = vrot.slane %v424, %v445
    %v448 = vunpack.c.l.s4 1966171168
    %v449 = vunpack.c.0.s8 %v448
    %v450 = vlaneseq
    %v451 = vshrl.u32 %v450, 7
    %v452 = vsub.s32 %v449, %v451
    %v453 = vrot.slane %v425, %v452
    %v454 = vcombine.high %v432, %v432
    %v455 = vcombine.high %v439, %v439
    %v456 = vcombine.high %v446, %v446
    %v457 = vcombine.high %v453, %v453
    %v458 = vcombine.high %v374, %v374
    %v460 = vunpack.c.l.s4 1966171168
    %v461 = vunpack.c.0.s8 %v460
    %v462 = vlaneseq
    %v463 = vshrl.u32 %v462, 7
    %v464 = vsub.s32 %v461, %v463
    %v465 = vrot.slane %v374, %v464
    %v467 = vunpack.c.l.s4 1966171168
    %v468 = vunpack.c.0.s8 %v467
    %v469 = vlaneseq
    %v470 = vshrl.u32 %v469, 7
    %v471 = vsub.s32 %v468, %v470
    %v472 = vrot.slane %v458, %v471
    %v473 = vcombine.high %v465, %v465
    %v474 = vcombine.high %v472, %v472
    %v476 = vunpack.c.l.s4 1966171168
    %v477 = vunpack.c.0.s8 %v476
    %v478 = vlaneseq
    %v479 = vshrl.u32 %v478, 7
    %v480 = vsub.s32 %v477, %v479
    %v481 = vrot.slane %v465, %v480
    %v483 = vunpack.c.l.s4 1966171168
    %v484 = vunpack.c.0.s8 %v483
    %v485 = vlaneseq
    %v486 = vshrl.u32 %v485, 7
    %v487 = vsub.s32 %v484, %v486
    %v488 = vrot.slane %v472, %v487
    %v490 = vunpack.c.l.s4 1966171168
    %v491 = vunpack.c.0.s8 %v490
    %v492 = vlaneseq
    %v493 = vshrl.u32 %v492, 7
    %v494 = vsub.s32 %v491, %v493
    %v495 = vrot.slane %v473, %v494
    %v497 = vunpack.c.l.s4 1966171168
    %v498 = vunpack.c.0.s8 %v497
    %v499 = vlaneseq
    %v500 = vshrl.u32 %v499, 7
    %v501 = vsub.s32 %v498, %v500
    %v502 = vrot.slane %v474, %v501
    %v503 = vcombine.high %v481, %v481
    %v504 = vcombine.high %v488, %v488
    %v505 = vcombine.high %v495, %v495
    %v506 = vcombine.high %v502, %v502
    %v507 = vcombine.high %v379, %v379
    %v509 = vunpack.c.l.s4 1966171168
    %v510 = vunpack.c.0.s8 %v509
    %v511 = vlaneseq
    %v512 = vshrl.u32 %v511, 7
    %v513 = vsub.s32 %v510, %v512
    %v514 = vrot.slane %v379, %v513
    %v516 = vunpack.c.l.s4 1966171168
    %v517 = vunpack.c.0.s8 %v516
    %v518 = vlaneseq
    %v519 = vshrl.u32 %v518, 7
    %v520 = vsub.s32 %v517, %v519
    %v521 = vrot.slane %v507, %v520
    %v522 = vcombine.high %v514, %v514
    %v523 = vcombine.high %v521, %v521
    %v525 = vunpack.c.l.s4 1966171168
    %v526 = vunpack.c.0.s8 %v525
    %v527 = vlaneseq
    %v528 = vshrl.u32 %v527, 7
    %v529 = vsub.s32 %v526, %v528
    %v530 = vrot.slane %v514, %v529
    %v532 = vunpack.c.l.s4 1966171168
    %v533 = vunpack.c.0.s8 %v532
    %v534 = vlaneseq
    %v535 = vshrl.u32 %v534, 7
    %v536 = vsub.s32 %v533, %v535
    %v537 = vrot.slane %v521, %v536
    %v539 = vunpack.c.l.s4 1966171168
    %v540 = vunpack.c.0.s8 %v539
    %v541 = vlaneseq
    %v542 = vshrl.u32 %v541, 7
    %v543 = vsub.s32 %v540, %v542
    %v544 = vrot.slane %v522, %v543
    %v546 = vunpack.c.l.s4 1966171168
    %v547 = vunpack.c.0.s8 %v546
    %v548 = vlaneseq
    %v549 = vshrl.u32 %v548, 7
    %v550 = vsub.s32 %v547, %v549
    %v551 = vrot.slane %v523, %v550
    %v552 = vcombine.high %v530, %v530
    %v553 = vcombine.high %v537, %v537
    %v554 = vcombine.high %v544, %v544
    %v555 = vcombine.high %v551, %v551
    %v556 = vcombine.high %v382, %v382
    %v558 = vunpack.c.l.s4 1966171168
    %v559 = vunpack.c.0.s8 %v558
    %v560 = vlaneseq
    %v561 = vshrl.u32 %v560, 7
    %v562 = vsub.s32 %v559, %v561
    %v563 = vrot.slane %v382, %v562
    %v565 = vunpack.c.l.s4 1966171168
    %v566 = vunpack.c.0.s8 %v565
    %v567 = vlaneseq
    %v568 = vshrl.u32 %v567, 7
    %v569 = vsub.s32 %v566, %v568
    %v570 = vrot.slane %v556, %v569
    %v571 = vcombine.high %v563, %v563
    %v572 = vcombine.high %v570, %v570
    %v574 = vunpack.c.l.s4 1966171168
    %v575 = vunpack.c.0.s8 %v574
    %v576 = vlaneseq
    %v577 = vshrl.u32 %v576, 7
    %v578 = vsub.s32 %v575, %v577
    %v579 = vrot.slane %v563, %v578
    %v581 = vunpack.c.l.s4 1966171168
    %v582 = vunpack.c.0.s8 %v581
    %v583 = vlaneseq
    %v584 = vshrl.u32 %v583, 7
    %v585 = vsub.s32 %v582, %v584
    %v586 = vrot.slane %v570, %v585
    %v588 = vunpack.c.l.s4 1966171168
    %v589 = vunpack.c.0.s8 %v588
    %v590 = vlaneseq
    %v591 = vshrl.u32 %v590, 7
    %v592 = vsub.s32 %v589, %v591
    %v593 = vrot.slane %v571, %v592
    %v595 = vunpack.c.l.s4 1966171168
    %v596 = vunpack.c.0.s8 %v595
    %v597 = vlaneseq
    %v598 = vshrl.u32 %v597, 7
    %v599 = vsub.s32 %v596, %v598
    %v600 = vrot.slane %v572, %v599
    %v601 = vcombine.high %v579, %v579
    %v602 = vcombine.high %v586, %v586
    %v603 = vcombine.high %v593, %v593
    %v604 = vcombine.high %v600, %v600
    %v605 = vcombine.high %v387, %v387
    %v607 = vunpack.c.l.s4 1966171168
    %v608 = vunpack.c.0.s8 %v607
    %v609 = vlaneseq
    %v610 = vshrl.u32 %v609, 7
    %v611 = vsub.s32 %v608, %v610
    %v612 = vrot.slane %v387, %v611
    %v614 = vunpack.c.l.s4 1966171168
    %v615 = vunpack.c.0.s8 %v614
    %v616 = vlaneseq
    %v617 = vshrl.u32 %v616, 7
    %v618 = vsub.s32 %v615, %v617
    %v619 = vrot.slane %v605, %v618
    %v620 = vcombine.high %v612, %v612
    %v621 = vcombine.high %v619, %v619
    %v623 = vunpack.c.l.s4 1966171168
    %v624 = vunpack.c.0.s8 %v623
    %v625 = vlaneseq
    %v626 = vshrl.u32 %v625, 7
    %v627 = vsub.s32 %v624, %v626
    %v628 = vrot.slane %v612, %v627
    %v630 = vunpack.c.l.s4 1966171168
    %v631 = vunpack.c.0.s8 %v630
    %v632 = vlaneseq
    %v633 = vshrl.u32 %v632, 7
    %v634 = vsub.s32 %v631, %v633
    %v635 = vrot.slane %v619, %v634
    %v637 = vunpack.c.l.s4 1966171168
    %v638 = vunpack.c.0.s8 %v637
    %v639 = vlaneseq
    %v640 = vshrl.u32 %v639, 7
    %v641 = vsub.s32 %v638, %v640
    %v642 = vrot.slane %v620, %v641
    %v644 = vunpack.c.l.s4 1966171168
    %v645 = vunpack.c.0.s8 %v644
    %v646 = vlaneseq
    %v647 = vshrl.u32 %v646, 7
    %v648 = vsub.s32 %v645, %v647
    %v649 = vrot.slane %v621, %v648
    %v650 = vcombine.high %v628, %v628
    %v651 = vcombine.high %v635, %v635
    %v652 = vcombine.high %v642, %v642
    %v653 = vcombine.high %v649, %v649
    %v654 = vcombine.high %v390, %v390
    %v656 = vunpack.c.l.s4 1966171168
    %v657 = vunpack.c.0.s8 %v656
    %v658 = vlaneseq
    %v659 = vshrl.u32 %v658, 7
    %v660 = vsub.s32 %v657, %v659
    %v661 = vrot.slane %v390, %v660
    %v663 = vunpack.c.l.s4 1966171168
    %v664 = vunpack.c.0.s8 %v663
    %v665 = vlaneseq
    %v666 = vshrl.u32 %v665, 7
    %v667 = vsub.s32 %v664, %v666
    %v668 = vrot.slane %v654, %v667
    %v669 = vcombine.high %v661, %v661
    %v670 = vcombine.high %v668, %v668
    %v672 = vunpack.c.l.s4 1966171168
    %v673 = vunpack.c.0.s8 %v672
    %v674 = vlaneseq
    %v675 = vshrl.u32 %v674, 7
    %v676 = vsub.s32 %v673, %v675
    %v677 = vrot.slane %v661, %v676
    %v679 = vunpack.c.l.s4 1966171168
    %v680 = vunpack.c.0.s8 %v679
    %v681 = vlaneseq
    %v682 = vshrl.u32 %v681, 7
    %v683 = vsub.s32 %v680, %v682
    %v684 = vrot.slane %v668, %v683
    %v686 = vunpack.c.l.s4 1966171168
    %v687 = vunpack.c.0.s8 %v686
    %v688 = vlaneseq
    %v689 = vshrl.u32 %v688, 7
    %v690 = vsub.s32 %v687, %v689
    %v691 = vrot.slane %v669, %v690
    %v693 = vunpack.c.l.s4 1966171168
    %v694 = vunpack.c.0.s8 %v693
    %v695 = vlaneseq
    %v696 = vshrl.u32 %v695, 7
    %v697 = vsub.s32 %v694, %v696
    %v698 = vrot.slane %v670, %v697
    %v699 = vcombine.high %v677, %v677
    %v700 = vcombine.high %v684, %v684
    %v701 = vcombine.high %v691, %v691
    %v702 = vcombine.high %v698, %v698
    %v703 = vcombine.high %v395, %v395
    %v705 = vunpack.c.l.s4 1966171168
    %v706 = vunpack.c.0.s8 %v705
    %v707 = vlaneseq
    %v708 = vshrl.u32 %v707, 7
    %v709 = vsub.s32 %v706, %v708
    %v710 = vrot.slane %v395, %v709
    %v712 = vunpack.c.l.s4 1966171168
    %v713 = vunpack.c.0.s8 %v712
    %v714 = vlaneseq
    %v715 = vshrl.u32 %v714, 7
    %v716 = vsub.s32 %v713, %v715
    %v717 = vrot.slane %v703, %v716
    %v718 = vcombine.high %v710, %v710
    %v719 = vcombine.high %v717, %v717
    %v721 = vunpack.c.l.s4 1966171168
    %v722 = vunpack.c.0.s8 %v721
    %v723 = vlaneseq
    %v724 = vshrl.u32 %v723, 7
    %v725 = vsub.s32 %v722, %v724
    %v726 = vrot.slane %v710, %v725
    %v728 = vunpack.c.l.s4 1966171168
    %v729 = vunpack.c.0.s8 %v728
    %v730 = vlaneseq
    %v731 = vshrl.u32 %v730, 7
    %v732 = vsub.s32 %v729, %v731
    %v733 = vrot.slane %v717, %v732
    %v735 = vunpack.c.l.s4 1966171168
    %v736 = vunpack.c.0.s8 %v735
    %v737 = vlaneseq
    %v738 = vshrl.u32 %v737, 7
    %v739 = vsub.s32 %v736, %v738
    %v740 = vrot.slane %v718, %v739
    %v742 = vunpack.c.l.s4 1966171168
    %v743 = vunpack.c.0.s8 %v742
    %v744 = vlaneseq
    %v745 = vshrl.u32 %v744, 7
    %v746 = vsub.s32 %v743, %v745
    %v747 = vrot.slane %v719, %v746
    %v748 = vcombine.high %v726, %v726
    %v749 = vcombine.high %v733, %v733
    %v750 = vcombine.high %v740, %v740
    %v751 = vcombine.high %v747, %v747
    %v752 = vcombine.high %v398, %v398
    %v754 = vunpack.c.l.s4 1966171168
    %v755 = vunpack.c.0.s8 %v754
    %v756 = vlaneseq
    %v757 = vshrl.u32 %v756, 7
    %v758 = vsub.s32 %v755, %v757
    %v759 = vrot.slane %v398, %v758
    %v761 = vunpack.c.l.s4 1966171168
    %v762 = vunpack.c.0.s8 %v761
    %v763 = vlaneseq
    %v764 = vshrl.u32 %v763, 7
    %v765 = vsub.s32 %v762, %v764
    %v766 = vrot.slane %v752, %v765
    %v767 = vcombine.high %v759, %v759
    %v768 = vcombine.high %v766, %v766
    %v770 = vunpack.c.l.s4 1966171168
    %v771 = vunpack.c.0.s8 %v770
    %v772 = vlaneseq
    %v773 = vshrl.u32 %v772, 7
    %v774 = vsub.s32 %v771, %v773
    %v775 = vrot.slane %v759, %v774
    %v777 = vunpack.c.l.s4 1966171168
    %v778 = vunpack.c.0.s8 %v777
    %v779 = vlaneseq
    %v780 = vshrl.u32 %v779, 7
    %v781 = vsub.s32 %v778, %v780
    %v782 = vrot.slane %v766, %v781
    %v784 = vunpack.c.l.s4 1966171168
    %v785 = vunpack.c.0.s8 %v784
    %v786 = vlaneseq
    %v787 = vshrl.u32 %v786, 7
    %v788 = vsub.s32 %v785, %v787
    %v789 = vrot.slane %v767, %v788
    %v791 = vunpack.c.l.s4 1966171168
    %v792 = vunpack.c.0.s8 %v791
    %v793 = vlaneseq
    %v794 = vshrl.u32 %v793, 7
    %v795 = vsub.s32 %v792, %v794
    %v796 = vrot.slane %v768, %v795
    %v797 = vcombine.high %v775, %v775
    %v798 = vcombine.high %v782, %v782
    %v799 = vcombine.high %v789, %v789
    %v800 = vcombine.high %v796, %v796
    %v801 = vlaneseq
    %v802 = vshrl.u32 %v801, 7
    %v803 = vsub.s32 0, %v802
    %v804 = vrot.slane %v432, %v803
    %v805 = vlaneseq
    %v806 = vshrl.u32 %v805, 7
    %v807 = vsub.s32 0, %v806
    %v808 = vrot.slane %v446, %v807
    %v809 = vlaneseq
    %v810 = vshrl.u32 %v809, 7
    %v811 = vsub.s32 0, %v810
    %v812 = vrot.slane %v454, %v811
    %v813 = vlaneseq
    %v814 = vshrl.u32 %v813, 7
    %v815 = vsub.s32 0, %v814
    %v816 = vrot.slane %v456, %v815
    %v817 = vlaneseq
    %v818 = vshrl.u32 %v817, 7
    %v819 = vsub.s32 0, %v818
    %v820 = vrot.slane %v439, %v819
    %v821 = vlaneseq
    %v822 = vshrl.u32 %v821, 7
    %v823 = vsub.s32 0, %v822
    %v824 = vrot.slane %v453, %v823
    %v825 = vlaneseq
    %v826 = vshrl.u32 %v825, 7
    %v827 = vsub.s32 0, %v826
    %v828 = vrot.slane %v455, %v827
    %v829 = vlaneseq
    %v830 = vshrl.u32 %v829, 7
    %v831 = vsub.s32 0, %v830
    %v832 = vrot.slane %v457, %v831
    %v833 = vlaneseq
    %v834 = vshrl.u32 %v833, 7
    %v835 = vsub.s32 0, %v834
    %v836 = vrot.slane %v481, %v835
    %v837 = vlaneseq
    %v838 = vshrl.u32 %v837, 7
    %v839 = vsub.s32 0, %v838
    %v840 = vrot.slane %v495, %v839
    %v841 = vlaneseq
    %v842 = vshrl.u32 %v841, 7
    %v843 = vsub.s32 0, %v842
    %v844 = vrot.slane %v503, %v843
    %v845 = vlaneseq
    %v846 = vshrl.u32 %v845, 7
    %v847 = vsub.s32 0, %v846
    %v848 = vrot.slane %v505, %v847
    %v849 = vlaneseq
    %v850 = vshrl.u32 %v849, 7
    %v851 = vsub.s32 0, %v850
    %v852 = vrot.slane %v488, %v851
    %v853 = vlaneseq
    %v854 = vshrl.u32 %v853, 7
    %v855 = vsub.s32 0, %v854
    %v856 = vrot.slane %v502, %v855
    %v857 = vlaneseq
    %v858 = vshrl.u32 %v857, 7
    %v859 = vsub.s32 0, %v858
    %v860 = vrot.slane %v504, %v859
    %v861 = vlaneseq
    %v862 = vshrl.u32 %v861, 7
    %v863 = vsub.s32 0, %v862
    %v864 = vrot.slane %v506, %v863
    %v865 = vlaneseq
    %v866 = vshrl.u32 %v865, 7
    %v867 = vsub.s32 0, %v866
    %v868 = vrot.slane %v530, %v867
    %v869 = vlaneseq
    %v870 = vshrl.u32 %v869, 7
    %v871 = vsub.s32 0, %v870
    %v872 = vrot.slane %v544, %v871
    %v873 = vlaneseq
    %v874 = vshrl.u32 %v873, 7
    %v875 = vsub.s32 0, %v874
    %v876 = vrot.slane %v552, %v875
    %v877 = vlaneseq
    %v878 = vshrl.u32 %v877, 7
    %v879 = vsub.s32 0, %v878
    %v880 = vrot.slane %v554, %v879
    %v881 = vlaneseq
    %v882 = vshrl.u32 %v881, 7
    %v883 = vsub.s32 0, %v882
    %v884 = vrot.slane %v537, %v883
    %v885 = vlaneseq
    %v886 = vshrl.u32 %v885, 7
    %v887 = vsub.s32 0, %v886
    %v888 = vrot.slane %v551, %v887
    %v889 = vlaneseq
    %v890 = vshrl.u32 %v889, 7
    %v891 = vsub.s32 0, %v890
    %v892 = vrot.slane %v553, %v891
    %v893 = vlaneseq
    %v894 = vshrl.u32 %v893, 7
    %v895 = vsub.s32 0, %v894
    %v896 = vrot.slane %v555, %v895
    %v897 = vlaneseq
    %v898 = vshrl.u32 %v897, 7
    %v899 = vsub.s32 0, %v898
    %v900 = vrot.slane %v579, %v899
    %v901 = vlaneseq
    %v902 = vshrl.u32 %v901, 7
    %v903 = vsub.s32 0, %v902
    %v904 = vrot.slane %v593, %v903
    %v905 = vlaneseq
    %v906 = vshrl.u32 %v905, 7
    %v907 = vsub.s32 0, %v906
    %v908 = vrot.slane %v601, %v907
    %v909 = vlaneseq
    %v910 = vshrl.u32 %v909, 7
    %v911 = vsub.s32 0, %v910
    %v912 = vrot.slane %v603, %v911
    %v913 = vlaneseq
    %v914 = vshrl.u32 %v913, 7
    %v915 = vsub.s32 0, %v914
    %v916 = vrot.slane %v586, %v915
    %v917 = vlaneseq
    %v918 = vshrl.u32 %v917, 7
    %v919 = vsub.s32 0, %v918
    %v920 = vrot.slane %v600, %v919
    %v921 = vlaneseq
    %v922 = vshrl.u32 %v921, 7
    %v923 = vsub.s32 0, %v922
    %v924 = vrot.slane %v602, %v923
    %v925 = vlaneseq
    %v926 = vshrl.u32 %v925, 7
    %v927 = vsub.s32 0, %v926
    %v928 = vrot.slane %v604, %v927
    %v929 = vlaneseq
    %v930 = vshrl.u32 %v929, 7
    %v931 = vsub.s32 0, %v930
    %v932 = vrot.slane %v628, %v931
    %v933 = vlaneseq
    %v934 = vshrl.u32 %v933, 7
    %v935 = vsub.s32 0, %v934
    %v936 = vrot.slane %v642, %v935
    %v937 = vlaneseq
    %v938 = vshrl.u32 %v937, 7
    %v939 = vsub.s32 0, %v938
    %v940 = vrot.slane %v650, %v939
    %v941 = vlaneseq
    %v942 = vshrl.u32 %v941, 7
    %v943 = vsub.s32 0, %v942
    %v944 = vrot.slane %v652, %v943
    %v945 = vlaneseq
    %v946 = vshrl.u32 %v945, 7
    %v947 = vsub.s32 0, %v946
    %v948 = vrot.slane %v635, %v947
    %v949 = vlaneseq
    %v950 = vshrl.u32 %v949, 7
    %v951 = vsub.s32 0, %v950
    %v952 = vrot.slane %v649, %v951
    %v953 = vlaneseq
    %v954 = vshrl.u32 %v953, 7
    %v955 = vsub.s32 0, %v954
    %v956 = vrot.slane %v651, %v955
    %v957 = vlaneseq
    %v958 = vshrl.u32 %v957, 7
    %v959 = vsub.s32 0, %v958
    %v960 = vrot.slane %v653, %v959
    %v961 = vlaneseq
    %v962 = vshrl.u32 %v961, 7
    %v963 = vsub.s32 0, %v962
    %v964 = vrot.slane %v677, %v963
    %v965 = vlaneseq
    %v966 = vshrl.u32 %v965, 7
    %v967 = vsub.s32 0, %v966
    %v968 = vrot.slane %v691, %v967
    %v969 = vlaneseq
    %v970 = vshrl.u32 %v969, 7
    %v971 = vsub.s32 0, %v970
    %v972 = vrot.slane %v699, %v971
    %v973 = vlaneseq
    %v974 = vshrl.u32 %v973, 7
    %v975 = vsub.s32 0, %v974
    %v976 = vrot.slane %v701, %v975
    %v977 = vlaneseq
    %v978 = vshrl.u32 %v977, 7
    %v979 = vsub.s32 0, %v978
    %v980 = vrot.slane %v684, %v979
    %v981 = vlaneseq
    %v982 = vshrl.u32 %v981, 7
    %v983 = vsub.s32 0, %v982
    %v984 = vrot.slane %v698, %v983
    %v985 = vlaneseq
    %v986 = vshrl.u32 %v985, 7
    %v987 = vsub.s32 0, %v986
    %v988 = vrot.slane %v700, %v987
    %v989 = vlaneseq
    %v990 = vshrl.u32 %v989, 7
    %v991 = vsub.s32 0, %v990
    %v992 = vrot.slane %v702, %v991
    %v993 = vlaneseq
    %v994 = vshrl.u32 %v993, 7
    %v995 = vsub.s32 0, %v994
    %v996 = vrot.slane %v726, %v995
    %v997 = vlaneseq
    %v998 = vshrl.u32 %v997, 7
    %v999 = vsub.s32 0, %v998
    %v1000 = vrot.slane %v740, %v999
    %v1001 = vlaneseq
    %v1002 = vshrl.u32 %v1001, 7
    %v1003 = vsub.s32 0, %v1002
    %v1004 = vrot.slane %v748, %v1003
    %v1005 = vlaneseq
    %v1006 = vshrl.u32 %v1005, 7
    %v1007 = vsub.s32 0, %v1006
    %v1008 = vrot.slane %v750, %v1007
    %v1009 = vlaneseq
    %v1010 = vshrl.u32 %v1009, 7
    %v1011 = vsub.s32 0, %v1010
    %v1012 = vrot.slane %v733, %v1011
    %v1013 = vlaneseq
    %v1014 = vshrl.u32 %v1013, 7
    %v1015 = vsub.s32 0, %v1014
    %v1016 = vrot.slane %v747, %v1015
    %v1017 = vlaneseq
    %v1018 = vshrl.u32 %v1017, 7
    %v1019 = vsub.s32 0, %v1018
    %v1020 = vrot.slane %v749, %v1019
    %v1021 = vlaneseq
    %v1022 = vshrl.u32 %v1021, 7
    %v1023 = vsub.s32 0, %v1022
    %v1024 = vrot.slane %v751, %v1023
    %v1025 = vlaneseq
    %v1026 = vshrl.u32 %v1025, 7
    %v1027 = vsub.s32 0, %v1026
    %v1028 = vrot.slane %v775, %v1027
    %v1029 = vlaneseq
    %v1030 = vshrl.u32 %v1029, 7
    %v1031 = vsub.s32 0, %v1030
    %v1032 = vrot.slane %v789, %v1031
    %v1033 = vlaneseq
    %v1034 = vshrl.u32 %v1033, 7
    %v1035 = vsub.s32 0, %v1034
    %v1036 = vrot.slane %v797, %v1035
    %v1037 = vlaneseq
    %v1038 = vshrl.u32 %v1037, 7
    %v1039 = vsub.s32 0, %v1038
    %v1040 = vrot.slane %v799, %v1039
    %v1041 = vlaneseq
    %v1042 = vshrl.u32 %v1041, 7
    %v1043 = vsub.s32 0, %v1042
    %v1044 = vrot.slane %v782, %v1043
    %v1045 = vlaneseq
    %v1046 = vshrl.u32 %v1045, 7
    %v1047 = vsub.s32 0, %v1046
    %v1048 = vrot.slane %v796, %v1047
    %v1049 = vlaneseq
    %v1050 = vshrl.u32 %v1049, 7
    %v1051 = vsub.s32 0, %v1050
    %v1052 = vrot.slane %v798, %v1051
    %v1053 = vlaneseq
    %v1054 = vshrl.u32 %v1053, 7
    %v1055 = vsub.s32 0, %v1054
    %v1056 = vrot.slane %v800, %v1055
    %1121 = vrot.lane.b32.xlu0 %v371, 96
    %v1122 = vpop.permute.xlu0 %1121
    %1123 = vrot.lane.b32.xlu0 %v374, 96
    %v1124 = vpop.permute.xlu0 %1123
    %1125 = vrot.lane.b32.xlu0 %v379, 96
    %v1126 = vpop.permute.xlu0 %1125
    %1127 = vrot.lane.b32.xlu0 %v382, 96
    %v1128 = vpop.permute.xlu0 %1127
    %1129 = vrot.lane.b32.xlu0 %v387, 96
    %v1130 = vpop.permute.xlu0 %1129
    %1131 = vrot.lane.b32.xlu0 %v390, 96
    %v1132 = vpop.permute.xlu0 %1131
    %1133 = vrot.lane.b32.xlu0 %v395, 96
    %v1134 = vpop.permute.xlu0 %1133
    %1135 = vrot.lane.b32.xlu0 %v398, 96
    %v1136 = vpop.permute.xlu0 %1135
    %v1145 = vmul.f32 %v804, %v1122
    %v1146 = vmul.f32 %v808, %v1122
    %v1147 = vmul.f32 %v812, %v1122
    %v1148 = vmul.f32 %v816, %v1122
    %v1149 = vmul.f32 %v820, %v1122
    %v1150 = vmul.f32 %v824, %v1122
    %v1151 = vmul.f32 %v828, %v1122
    %v1152 = vmul.f32 %v832, %v1122
    %v1153 = vmul.f32 %v836, %v1124
    %v1154 = vmul.f32 %v840, %v1124
    %v1155 = vmul.f32 %v844, %v1124
    %v1156 = vmul.f32 %v848, %v1124
    %v1157 = vmul.f32 %v852, %v1124
    %v1158 = vmul.f32 %v856, %v1124
    %v1159 = vmul.f32 %v860, %v1124
    %v1160 = vmul.f32 %v864, %v1124
    %v1161 = vmul.f32 %v868, %v1126
    %v1162 = vmul.f32 %v872, %v1126
    %v1163 = vmul.f32 %v876, %v1126
    %v1164 = vmul.f32 %v880, %v1126
    %v1165 = vmul.f32 %v884, %v1126
    %v1166 = vmul.f32 %v888, %v1126
    %v1167 = vmul.f32 %v892, %v1126
    %v1168 = vmul.f32 %v896, %v1126
    %v1169 = vmul.f32 %v900, %v1128
    %v1170 = vmul.f32 %v904, %v1128
    %v1171 = vmul.f32 %v908, %v1128
    %v1172 = vmul.f32 %v912, %v1128
    %v1173 = vmul.f32 %v916, %v1128
    %v1174 = vmul.f32 %v920, %v1128
    %v1175 = vmul.f32 %v924, %v1128
    %v1176 = vmul.f32 %v928, %v1128
    %v1177 = vmul.f32 %v932, %v1130
    %v1178 = vmul.f32 %v936, %v1130
    %v1179 = vmul.f32 %v940, %v1130
    %v1180 = vmul.f32 %v944, %v1130
    %v1181 = vmul.f32 %v948, %v1130
    %v1182 = vmul.f32 %v952, %v1130
    %v1183 = vmul.f32 %v956, %v1130
    %v1184 = vmul.f32 %v960, %v1130
    %v1185 = vmul.f32 %v964, %v1132
    %v1186 = vmul.f32 %v968, %v1132
    %v1187 = vmul.f32 %v972, %v1132
    %v1188 = vmul.f32 %v976, %v1132
    %v1189 = vmul.f32 %v980, %v1132
    %v1190 = vmul.f32 %v984, %v1132
    %v1191 = vmul.f32 %v988, %v1132
    %v1192 = vmul.f32 %v992, %v1132
    %v1193 = vmul.f32 %v996, %v1134
    %v1194 = vmul.f32 %v1000, %v1134
    %v1195 = vmul.f32 %v1004, %v1134
    %v1196 = vmul.f32 %v1008, %v1134
    %v1197 = vmul.f32 %v1012, %v1134
    %v1198 = vmul.f32 %v1016, %v1134
    %v1199 = vmul.f32 %v1020, %v1134
    %v1200 = vmul.f32 %v1024, %v1134
    %v1201 = vmul.f32 %v1028, %v1136
    %v1202 = vmul.f32 %v1032, %v1136
    %v1203 = vmul.f32 %v1036, %v1136
    %v1204 = vmul.f32 %v1040, %v1136
    %v1205 = vmul.f32 %v1044, %v1136
    %v1206 = vmul.f32 %v1048, %v1136
    %v1207 = vmul.f32 %v1052, %v1136
    %v1208 = vmul.f32 %v1056, %v1136
    %v1209 = vpack.c.bf16 %v1146, %v1145
    %v1210 = vpack.c.bf16 %v1148, %v1147
    %v1211 = vpack.c.bf16 %v1150, %v1149
    %v1212 = vpack.c.bf16 %v1152, %v1151
    %v1213 = vpack.c.bf16 %v1154, %v1153
    %v1214 = vpack.c.bf16 %v1156, %v1155
    %v1215 = vpack.c.bf16 %v1158, %v1157
    %v1216 = vpack.c.bf16 %v1160, %v1159
    %v1217 = vpack.c.bf16 %v1162, %v1161
    %v1218 = vpack.c.bf16 %v1164, %v1163
    %v1219 = vpack.c.bf16 %v1166, %v1165
    %v1220 = vpack.c.bf16 %v1168, %v1167
    %v1221 = vpack.c.bf16 %v1170, %v1169
    %v1222 = vpack.c.bf16 %v1172, %v1171
    %v1223 = vpack.c.bf16 %v1174, %v1173
    %v1224 = vpack.c.bf16 %v1176, %v1175
    %v1225 = vpack.c.bf16 %v1178, %v1177
    %v1226 = vpack.c.bf16 %v1180, %v1179
    %v1227 = vpack.c.bf16 %v1182, %v1181
    %v1228 = vpack.c.bf16 %v1184, %v1183
    %v1229 = vpack.c.bf16 %v1186, %v1185
    %v1230 = vpack.c.bf16 %v1188, %v1187
    %v1231 = vpack.c.bf16 %v1190, %v1189
    %v1232 = vpack.c.bf16 %v1192, %v1191
    %v1233 = vpack.c.bf16 %v1194, %v1193
    %v1234 = vpack.c.bf16 %v1196, %v1195
    %v1235 = vpack.c.bf16 %v1198, %v1197
    %v1236 = vpack.c.bf16 %v1200, %v1199
    %v1237 = vpack.c.bf16 %v1202, %v1201
    %v1238 = vpack.c.bf16 %v1204, %v1203
    %v1239 = vpack.c.bf16 %v1206, %v1205
    %v1240 = vpack.c.bf16 %v1208, %v1207
    %v1245 = vunpack.c.l.b16 %v292
    %v1246 = vunpack.c.l.b16 %v293
    %v1247 = vunpack.c.l.b16 %v294
    %v1248 = vunpack.c.l.b16 %v295
    %v1249 = vpack.c.b16 %v1246, %v1245
    %v1250 = vpack.c.b16 %v1248, %v1247
    %v1254 = vsel %vm158, %v1209, 0
    %v1257 = vsel %vm158, %v1210, 0
    %v1260 = vsel %vm158, %v1211, 0
    %v1263 = vsel %vm158, %v1212, 0
    %v1266 = vsel %vm158, %v1213, 0
    %v1269 = vsel %vm158, %v1214, 0
    %v1272 = vsel %vm158, %v1215, 0
    %v1275 = vsel %vm158, %v1216, 0
    %v1278 = vsel %vm158, %v1217, 0
    %v1281 = vsel %vm158, %v1218, 0
    %v1284 = vsel %vm158, %v1219, 0
    %v1287 = vsel %vm158, %v1220, 0
    %v1290 = vsel %vm158, %v1221, 0
    %v1293 = vsel %vm158, %v1222, 0
    %v1296 = vsel %vm158, %v1223, 0
    %v1299 = vsel %vm158, %v1224, 0
    %v1302 = vsel %vm158, %v1225, 0
    %v1305 = vsel %vm158, %v1226, 0
    %v1308 = vsel %vm158, %v1227, 0
    %v1311 = vsel %vm158, %v1228, 0
    %v1314 = vsel %vm158, %v1229, 0
    %v1317 = vsel %vm158, %v1230, 0
    %v1320 = vsel %vm158, %v1231, 0
    %v1323 = vsel %vm158, %v1232, 0
    %v1326 = vsel %vm158, %v1233, 0
    %v1329 = vsel %vm158, %v1234, 0
    %v1332 = vsel %vm158, %v1235, 0
    %v1335 = vsel %vm158, %v1236, 0
    %v1338 = vsel %vm158, %v1237, 0
    %v1341 = vsel %vm158, %v1238, 0
    %v1344 = vsel %vm158, %v1239, 0
    %v1347 = vsel %vm158, %v1240, 0
    %1349 = vmatprep.subr.bf16.mxu0 0
    %1350 = vmatpush1.bf16.msra.mxu0 0
    %1351 = vmatprep.subr.bf16.mxu0 0
    %1352 = vmatpush1.bf16.msra.mxu0 0
    %1353 = vmatprep.subr.bf16.mxu0 0
    %1354 = vmatpush1.bf16.msra.mxu0 0
    %1355 = vmatprep.subr.bf16.mxu0 0
    %1356 = vmatpush1.bf16.msra.mxu0 0
    %1357 = vmatprep.subr.bf16.mxu0 0
    %1358 = vmatpush1.bf16.msra.mxu0 0
    %1359 = vmatprep.subr.bf16.mxu0 0
    %1360 = vmatpush1.bf16.msra.mxu0 0
    %1361 = vmatprep.subr.bf16.mxu0 0
    %1362 = vmatpush1.bf16.msra.mxu0 %v1250
    %1363 = vmatprep.subr.bf16.mxu0 0
    %1364 = vmatpush1.bf16.msra.mxu0 %v1249
    %1365 = vmatprep.subr.bf16.mxu0 0
    %1366 = vmatpush2.bf16.msra.mxu0 0
    %1367 = vmatprep.subr.bf16.mxu0 0
    %1368 = vmatpush2.bf16.msra.mxu0 0
    %1369 = vmatprep.subr.bf16.mxu0 0
    %1370 = vmatpush2.bf16.msra.mxu0 0
    %1371 = vmatprep.subr.bf16.mxu0 0
    %1372 = vmatpush2.bf16.msra.mxu0 0
    %1373 = vmatprep.subr.bf16.mxu0 0
    %1374 = vmatpush2.bf16.msra.mxu0 0
    %1375 = vmatprep.subr.bf16.mxu0 0
    %1376 = vmatpush2.bf16.msra.mxu0 0
    %1377 = vmatprep.subr.bf16.mxu0 0
    %1378 = vmatpush2.bf16.msra.mxu0 0
    %1379 = vmatprep.subr.bf16.mxu0 0
    %1380 = vmatpush2.bf16.msra.mxu0 0
    %1381 = vmatprep.mubr.bf16.mxu0 0
    %1382 = vmatmul.mubr.bf16.gmra.mxu0 %v1254
    %v1383 = vpop.f32.mrf.mxu0
    %v1384 = vadd.f32 0.0, %v1383
    %v1385 = vpop.f32.mrf.mxu0
    %v1386 = vpop.f32.mrf.mxu0
    %v1387 = vadd.f32 0.0, %v1386
    %v1388 = vpop.f32.mrf.mxu0
    %1389 = vmatprep.mubr.bf16.mxu0 0
    %1390 = vmatmul.mubr.bf16.gmra.mxu0 %v1257
    %v1391 = vpop.f32.mrf.mxu0
    %v1392 = vadd.f32 0.0, %v1391
    %v1393 = vpop.f32.mrf.mxu0
    %v1394 = vpop.f32.mrf.mxu0
    %v1395 = vadd.f32 0.0, %v1394
    %v1396 = vpop.f32.mrf.mxu0
    %1397 = vmatprep.mubr.bf16.mxu0 0
    %1398 = vmatmul.mubr.bf16.gmra.mxu0 %v1260
    %v1399 = vpop.f32.mrf.mxu0
    %v1400 = vadd.f32 0.0, %v1399
    %v1401 = vpop.f32.mrf.mxu0
    %v1402 = vpop.f32.mrf.mxu0
    %v1403 = vadd.f32 0.0, %v1402
    %v1404 = vpop.f32.mrf.mxu0
    %1405 = vmatprep.mubr.bf16.mxu0 0
    %1406 = vmatmul.mubr.bf16.gmra.mxu0 %v1263
    %v1407 = vpop.f32.mrf.mxu0
    %v1408 = vadd.f32 0.0, %v1407
    %v1409 = vpop.f32.mrf.mxu0
    %v1410 = vpop.f32.mrf.mxu0
    %v1411 = vadd.f32 0.0, %v1410
    %v1412 = vpop.f32.mrf.mxu0
    %1413 = vmatprep.mubr.bf16.mxu0 0
    %1414 = vmatmul.mubr.bf16.gmra.mxu0 %v1266
    %v1415 = vpop.f32.mrf.mxu0
    %v1416 = vadd.f32 0.0, %v1415
    %v1417 = vpop.f32.mrf.mxu0
    %v1418 = vpop.f32.mrf.mxu0
    %v1419 = vadd.f32 0.0, %v1418
    %v1420 = vpop.f32.mrf.mxu0
    %1421 = vmatprep.mubr.bf16.mxu0 0
    %1422 = vmatmul.mubr.bf16.gmra.mxu0 %v1269
    %v1423 = vpop.f32.mrf.mxu0
    %v1424 = vadd.f32 0.0, %v1423
    %v1425 = vpop.f32.mrf.mxu0
    %v1426 = vpop.f32.mrf.mxu0
    %v1427 = vadd.f32 0.0, %v1426
    %v1428 = vpop.f32.mrf.mxu0
    %1429 = vmatprep.mubr.bf16.mxu0 0
    %1430 = vmatmul.mubr.bf16.gmra.mxu0 %v1272
    %v1431 = vpop.f32.mrf.mxu0
    %v1432 = vadd.f32 0.0, %v1431
    %v1433 = vpop.f32.mrf.mxu0
    %v1434 = vpop.f32.mrf.mxu0
    %v1435 = vadd.f32 0.0, %v1434
    %v1436 = vpop.f32.mrf.mxu0
    %1437 = vmatprep.mubr.bf16.mxu0 0
    %1438 = vmatmul.mubr.bf16.gmra.mxu0 %v1275
    %v1439 = vpop.f32.mrf.mxu0
    %v1440 = vadd.f32 0.0, %v1439
    %v1441 = vpop.f32.mrf.mxu0
    %v1442 = vpop.f32.mrf.mxu0
    %v1443 = vadd.f32 0.0, %v1442
    %v1444 = vpop.f32.mrf.mxu0
    %1445 = vmatprep.mubr.bf16.mxu0 0
    %1446 = vmatmul.mubr.bf16.gmra.mxu0 %v1278
    %v1447 = vpop.f32.mrf.mxu0
    %v1448 = vadd.f32 0.0, %v1447
    %v1449 = vpop.f32.mrf.mxu0
    %v1450 = vpop.f32.mrf.mxu0
    %v1451 = vadd.f32 0.0, %v1450
    %v1452 = vpop.f32.mrf.mxu0
    %1453 = vmatprep.mubr.bf16.mxu0 0
    %1454 = vmatmul.mubr.bf16.gmra.mxu0 %v1281
    %v1455 = vpop.f32.mrf.mxu0
    %v1456 = vadd.f32 0.0, %v1455
    %v1457 = vpop.f32.mrf.mxu0
    %v1458 = vpop.f32.mrf.mxu0
    %v1459 = vadd.f32 0.0, %v1458
    %v1460 = vpop.f32.mrf.mxu0
    %1461 = vmatprep.mubr.bf16.mxu0 0
    %1462 = vmatmul.mubr.bf16.gmra.mxu0 %v1284
    %v1463 = vpop.f32.mrf.mxu0
    %v1464 = vadd.f32 0.0, %v1463
    %v1465 = vpop.f32.mrf.mxu0
    %v1466 = vpop.f32.mrf.mxu0
    %v1467 = vadd.f32 0.0, %v1466
    %v1468 = vpop.f32.mrf.mxu0
    %1469 = vmatprep.mubr.bf16.mxu0 0
    %1470 = vmatmul.mubr.bf16.gmra.mxu0 %v1287
    %v1471 = vpop.f32.mrf.mxu0
    %v1472 = vadd.f32 0.0, %v1471
    %v1473 = vpop.f32.mrf.mxu0
    %v1474 = vpop.f32.mrf.mxu0
    %v1475 = vadd.f32 0.0, %v1474
    %v1476 = vpop.f32.mrf.mxu0
    %1477 = vmatprep.mubr.bf16.mxu0 0
    %1478 = vmatmul.mubr.bf16.gmra.mxu0 %v1290
    %v1479 = vpop.f32.mrf.mxu0
    %v1480 = vadd.f32 0.0, %v1479
    %v1481 = vpop.f32.mrf.mxu0
    %v1482 = vpop.f32.mrf.mxu0
    %v1483 = vadd.f32 0.0, %v1482
    %v1484 = vpop.f32.mrf.mxu0
    %1485 = vmatprep.mubr.bf16.mxu0 0
    %1486 = vmatmul.mubr.bf16.gmra.mxu0 %v1293
    %v1487 = vpop.f32.mrf.mxu0
    %v1488 = vadd.f32 0.0, %v1487
    %v1489 = vpop.f32.mrf.mxu0
    %v1490 = vpop.f32.mrf.mxu0
    %v1491 = vadd.f32 0.0, %v1490
    %v1492 = vpop.f32.mrf.mxu0
    %1493 = vmatprep.mubr.bf16.mxu0 0
    %1494 = vmatmul.mubr.bf16.gmra.mxu0 %v1296
    %v1495 = vpop.f32.mrf.mxu0
    %v1496 = vadd.f32 0.0, %v1495
    %v1497 = vpop.f32.mrf.mxu0
    %v1498 = vpop.f32.mrf.mxu0
    %v1499 = vadd.f32 0.0, %v1498
    %v1500 = vpop.f32.mrf.mxu0
    %1501 = vmatprep.mubr.bf16.mxu0 0
    %1502 = vmatmul.mubr.bf16.gmra.mxu0 %v1299
    %v1503 = vpop.f32.mrf.mxu0
    %v1504 = vadd.f32 0.0, %v1503
    %v1505 = vpop.f32.mrf.mxu0
    %v1506 = vpop.f32.mrf.mxu0
    %v1507 = vadd.f32 0.0, %v1506
    %v1508 = vpop.f32.mrf.mxu0
    %1509 = vmatprep.mubr.bf16.mxu0 0
    %1510 = vmatmul.mubr.bf16.gmra.mxu0 %v1302
    %v1511 = vpop.f32.mrf.mxu0
    %v1512 = vadd.f32 0.0, %v1511
    %v1513 = vpop.f32.mrf.mxu0
    %v1514 = vpop.f32.mrf.mxu0
    %v1515 = vadd.f32 0.0, %v1514
    %v1516 = vpop.f32.mrf.mxu0
    %1517 = vmatprep.mubr.bf16.mxu0 0
    %1518 = vmatmul.mubr.bf16.gmra.mxu0 %v1305
    %v1519 = vpop.f32.mrf.mxu0
    %v1520 = vadd.f32 0.0, %v1519
    %v1521 = vpop.f32.mrf.mxu0
    %v1522 = vpop.f32.mrf.mxu0
    %v1523 = vadd.f32 0.0, %v1522
    %v1524 = vpop.f32.mrf.mxu0
    %1525 = vmatprep.mubr.bf16.mxu0 0
    %1526 = vmatmul.mubr.bf16.gmra.mxu0 %v1308
    %v1527 = vpop.f32.mrf.mxu0
    %v1528 = vadd.f32 0.0, %v1527
    %v1529 = vpop.f32.mrf.mxu0
    %v1530 = vpop.f32.mrf.mxu0
    %v1531 = vadd.f32 0.0, %v1530
    %v1532 = vpop.f32.mrf.mxu0
    %1533 = vmatprep.mubr.bf16.mxu0 0
    %1534 = vmatmul.mubr.bf16.gmra.mxu0 %v1311
    %v1535 = vpop.f32.mrf.mxu0
    %v1536 = vadd.f32 0.0, %v1535
    %v1537 = vpop.f32.mrf.mxu0
    %v1538 = vpop.f32.mrf.mxu0
    %v1539 = vadd.f32 0.0, %v1538
    %v1540 = vpop.f32.mrf.mxu0
    %1541 = vmatprep.mubr.bf16.mxu0 0
    %1542 = vmatmul.mubr.bf16.gmra.mxu0 %v1314
    %v1543 = vpop.f32.mrf.mxu0
    %v1544 = vadd.f32 0.0, %v1543
    %v1545 = vpop.f32.mrf.mxu0
    %v1546 = vpop.f32.mrf.mxu0
    %v1547 = vadd.f32 0.0, %v1546
    %v1548 = vpop.f32.mrf.mxu0
    %1549 = vmatprep.mubr.bf16.mxu0 0
    %1550 = vmatmul.mubr.bf16.gmra.mxu0 %v1317
    %v1551 = vpop.f32.mrf.mxu0
    %v1552 = vadd.f32 0.0, %v1551
    %v1553 = vpop.f32.mrf.mxu0
    %v1554 = vpop.f32.mrf.mxu0
    %v1555 = vadd.f32 0.0, %v1554
    %v1556 = vpop.f32.mrf.mxu0
    %1557 = vmatprep.mubr.bf16.mxu0 0
    %1558 = vmatmul.mubr.bf16.gmra.mxu0 %v1320
    %v1559 = vpop.f32.mrf.mxu0
    %v1560 = vadd.f32 0.0, %v1559
    %v1561 = vpop.f32.mrf.mxu0
    %v1562 = vpop.f32.mrf.mxu0
    %v1563 = vadd.f32 0.0, %v1562
    %v1564 = vpop.f32.mrf.mxu0
    %1565 = vmatprep.mubr.bf16.mxu0 0
    %1566 = vmatmul.mubr.bf16.gmra.mxu0 %v1323
    %v1567 = vpop.f32.mrf.mxu0
    %v1568 = vadd.f32 0.0, %v1567
    %v1569 = vpop.f32.mrf.mxu0
    %v1570 = vpop.f32.mrf.mxu0
    %v1571 = vadd.f32 0.0, %v1570
    %v1572 = vpop.f32.mrf.mxu0
    %1573 = vmatprep.mubr.bf16.mxu0 0
    %1574 = vmatmul.mubr.bf16.gmra.mxu0 %v1326
    %v1575 = vpop.f32.mrf.mxu0
    %v1576 = vadd.f32 0.0, %v1575
    %v1577 = vpop.f32.mrf.mxu0
    %v1578 = vpop.f32.mrf.mxu0
    %v1579 = vadd.f32 0.0, %v1578
    %v1580 = vpop.f32.mrf.mxu0
    %1581 = vmatprep.mubr.bf16.mxu0 0
    %1582 = vmatmul.mubr.bf16.gmra.mxu0 %v1329
    %v1583 = vpop.f32.mrf.mxu0
    %v1584 = vadd.f32 0.0, %v1583
    %v1585 = vpop.f32.mrf.mxu0
    %v1586 = vpop.f32.mrf.mxu0
    %v1587 = vadd.f32 0.0, %v1586
    %v1588 = vpop.f32.mrf.mxu0
    %1589 = vmatprep.mubr.bf16.mxu0 0
    %1590 = vmatmul.mubr.bf16.gmra.mxu0 %v1332
    %v1591 = vpop.f32.mrf.mxu0
    %v1592 = vadd.f32 0.0, %v1591
    %v1593 = vpop.f32.mrf.mxu0
    %v1594 = vpop.f32.mrf.mxu0
    %v1595 = vadd.f32 0.0, %v1594
    %v1596 = vpop.f32.mrf.mxu0
    %1597 = vmatprep.mubr.bf16.mxu0 0
    %1598 = vmatmul.mubr.bf16.gmra.mxu0 %v1335
    %v1599 = vpop.f32.mrf.mxu0
    %v1600 = vadd.f32 0.0, %v1599
    %v1601 = vpop.f32.mrf.mxu0
    %v1602 = vpop.f32.mrf.mxu0
    %v1603 = vadd.f32 0.0, %v1602
    %v1604 = vpop.f32.mrf.mxu0
    %1605 = vmatprep.mubr.bf16.mxu0 0
    %1606 = vmatmul.mubr.bf16.gmra.mxu0 %v1338
    %v1607 = vpop.f32.mrf.mxu0
    %v1608 = vadd.f32 0.0, %v1607
    %v1609 = vpop.f32.mrf.mxu0
    %v1610 = vpop.f32.mrf.mxu0
    %v1611 = vadd.f32 0.0, %v1610
    %v1612 = vpop.f32.mrf.mxu0
    %1613 = vmatprep.mubr.bf16.mxu0 0
    %1614 = vmatmul.mubr.bf16.gmra.mxu0 %v1341
    %v1615 = vpop.f32.mrf.mxu0
    %v1616 = vadd.f32 0.0, %v1615
    %v1617 = vpop.f32.mrf.mxu0
    %v1618 = vpop.f32.mrf.mxu0
    %v1619 = vadd.f32 0.0, %v1618
    %v1620 = vpop.f32.mrf.mxu0
    %1621 = vmatprep.mubr.bf16.mxu0 0
    %1622 = vmatmul.mubr.bf16.gmra.mxu0 %v1344
    %v1623 = vpop.f32.mrf.mxu0
    %v1624 = vadd.f32 0.0, %v1623
    %v1625 = vpop.f32.mrf.mxu0
    %v1626 = vpop.f32.mrf.mxu0
    %v1627 = vadd.f32 0.0, %v1626
    %v1628 = vpop.f32.mrf.mxu0
    %1629 = vmatprep.mubr.bf16.mxu0 0
    %1630 = vmatmul.mubr.bf16.gmra.mxu0 %v1347
    %v1631 = vpop.f32.mrf.mxu0
    %v1632 = vadd.f32 0.0, %v1631
    %v1633 = vpop.f32.mrf.mxu0
    %v1634 = vpop.f32.mrf.mxu0
    %v1635 = vadd.f32 0.0, %v1634
    %v1636 = vpop.f32.mrf.mxu0
    %1637 = vdwg.mxu0
    %1639 = vset.pattern.permute.xlu0 0
    %1640 = vperm.xlu0 %1639, %v148
    %v1641 = vpop.permute.xlu0 %1640
    %1644 = vset.pattern.permute.xlu0 0
    %1645 = vperm.xlu0 %1644, %v149
    %v1646 = vpop.permute.xlu0 %1645
    %1649 = vset.pattern.permute.xlu0 0
    %1650 = vperm.xlu0 %1649, %v150
    %v1651 = vpop.permute.xlu0 %1650
    %1654 = vset.pattern.permute.xlu0 0
    %1655 = vperm.xlu0 %1654, %v151
    %v1656 = vpop.permute.xlu0 %1655
    %1659 = vset.pattern.permute.xlu0 0
    %1660 = vperm.xlu0 %1659, %v152
    %v1661 = vpop.permute.xlu0 %1660
    %1664 = vset.pattern.permute.xlu0 0
    %1665 = vperm.xlu0 %1664, %v153
    %v1666 = vpop.permute.xlu0 %1665
    %1669 = vset.pattern.permute.xlu0 0
    %1670 = vperm.xlu0 %1669, %v154
    %v1671 = vpop.permute.xlu0 %1670
    %1674 = vset.pattern.permute.xlu0 0
    %1675 = vperm.xlu0 %1674, %v155
    %v1676 = vpop.permute.xlu0 %1675
    %v1678 = vadd.f32 %v1384, %v1641
    %v1679 = vadd.f32 %v1387, %v1641
    %v1680 = vadd.f32 %v1392, %v1641
    %v1681 = vadd.f32 %v1395, %v1641
    %v1682 = vadd.f32 %v1400, %v1641
    %v1683 = vadd.f32 %v1403, %v1641
    %v1684 = vadd.f32 %v1408, %v1641
    %v1685 = vadd.f32 %v1411, %v1641
    %v1686 = vadd.f32 %v1416, %v1646
    %v1687 = vadd.f32 %v1419, %v1646
    %v1688 = vadd.f32 %v1424, %v1646
    %v1689 = vadd.f32 %v1427, %v1646
    %v1690 = vadd.f32 %v1432, %v1646
    %v1691 = vadd.f32 %v1435, %v1646
    %v1692 = vadd.f32 %v1440, %v1646
    %v1693 = vadd.f32 %v1443, %v1646
    %v1694 = vadd.f32 %v1448, %v1651
    %v1695 = vadd.f32 %v1451, %v1651
    %v1696 = vadd.f32 %v1456, %v1651
    %v1697 = vadd.f32 %v1459, %v1651
    %v1698 = vadd.f32 %v1464, %v1651
    %v1699 = vadd.f32 %v1467, %v1651
    %v1700 = vadd.f32 %v1472, %v1651
    %v1701 = vadd.f32 %v1475, %v1651
    %v1702 = vadd.f32 %v1480, %v1656
    %v1703 = vadd.f32 %v1483, %v1656
    %v1704 = vadd.f32 %v1488, %v1656
    %v1705 = vadd.f32 %v1491, %v1656
    %v1706 = vadd.f32 %v1496, %v1656
    %v1707 = vadd.f32 %v1499, %v1656
    %v1708 = vadd.f32 %v1504, %v1656
    %v1709 = vadd.f32 %v1507, %v1656
    %v1710 = vadd.f32 %v1512, %v1661
    %v1711 = vadd.f32 %v1515, %v1661
    %v1712 = vadd.f32 %v1520, %v1661
    %v1713 = vadd.f32 %v1523, %v1661
    %v1714 = vadd.f32 %v1528, %v1661
    %v1715 = vadd.f32 %v1531, %v1661
    %v1716 = vadd.f32 %v1536, %v1661
    %v1717 = vadd.f32 %v1539, %v1661
    %v1718 = vadd.f32 %v1544, %v1666
    %v1719 = vadd.f32 %v1547, %v1666
    %v1720 = vadd.f32 %v1552, %v1666
    %v1721 = vadd.f32 %v1555, %v1666
    %v1722 = vadd.f32 %v1560, %v1666
    %v1723 = vadd.f32 %v1563, %v1666
    %v1724 = vadd.f32 %v1568, %v1666
    %v1725 = vadd.f32 %v1571, %v1666
    %v1726 = vadd.f32 %v1576, %v1671
    %v1727 = vadd.f32 %v1579, %v1671
    %v1728 = vadd.f32 %v1584, %v1671
    %v1729 = vadd.f32 %v1587, %v1671
    %v1730 = vadd.f32 %v1592, %v1671
    %v1731 = vadd.f32 %v1595, %v1671
    %v1732 = vadd.f32 %v1600, %v1671
    %v1733 = vadd.f32 %v1603, %v1671
    %v1734 = vadd.f32 %v1608, %v1676
    %v1735 = vadd.f32 %v1611, %v1676
    %v1736 = vadd.f32 %v1616, %v1676
    %v1737 = vadd.f32 %v1619, %v1676
    %v1738 = vadd.f32 %v1624, %v1676
    %v1739 = vadd.f32 %v1627, %v1676
    %v1740 = vadd.f32 %v1632, %v1676
    %v1741 = vadd.f32 %v1635, %v1676
    %vm1742 = vcmask 31744
    %v1743 = vsel %vm1742, %v1678, -inf
    %v1744 = vrot.slane %v1743, 4
    %v1745 = vmax.f32 %v1743, %v1744
    %v1746 = vrot.slane %v1745, 2
    %v1747 = vmax.f32 %v1745, %v1746
    %v1748 = vrot.slane %v1747, 1
    %v1749 = vmax.f32 %v1747, %v1748
    %v1750 = vsel %vm1742, %v1679, -inf
    %v1751 = vrot.slane %v1750, 4
    %v1752 = vmax.f32 %v1750, %v1751
    %v1753 = vrot.slane %v1752, 2
    %v1754 = vmax.f32 %v1752, %v1753
    %v1755 = vrot.slane %v1754, 1
    %v1756 = vmax.f32 %v1754, %v1755
    %v1757 = vsel %vm1742, %v1680, -inf
    %v1758 = vrot.slane %v1757, 4
    %v1759 = vmax.f32 %v1757, %v1758
    %v1760 = vrot.slane %v1759, 2
    %v1761 = vmax.f32 %v1759, %v1760
    %v1762 = vrot.slane %v1761, 1
    %v1763 = vmax.f32 %v1761, %v1762
    %v1764 = vsel %vm1742, %v1681, -inf
    %v1765 = vrot.slane %v1764, 4
    %v1766 = vmax.f32 %v1764, %v1765
    %v1767 = vrot.slane %v1766, 2
    %v1768 = vmax.f32 %v1766, %v1767
    %v1769 = vrot.slane %v1768, 1
    %v1770 = vmax.f32 %v1768, %v1769
    %v1771 = vsel %vm1742, %v1682, -inf
    %v1772 = vrot.slane %v1771, 4
    %v1773 = vmax.f32 %v1771, %v1772
    %v1774 = vrot.slane %v1773, 2
    %v1775 = vmax.f32 %v1773, %v1774
    %v1776 = vrot.slane %v1775, 1
    %v1777 = vmax.f32 %v1775, %v1776
    %v1778 = vsel %vm1742, %v1683, -inf
    %v1779 = vrot.slane %v1778, 4
    %v1780 = vmax.f32 %v1778, %v1779
    %v1781 = vrot.slane %v1780, 2
    %v1782 = vmax.f32 %v1780, %v1781
    %v1783 = vrot.slane %v1782, 1
    %v1784 = vmax.f32 %v1782, %v1783
    %v1785 = vsel %vm1742, %v1684, -inf
    %v1786 = vrot.slane %v1785, 4
    %v1787 = vmax.f32 %v1785, %v1786
    %v1788 = vrot.slane %v1787, 2
    %v1789 = vmax.f32 %v1787, %v1788
    %v1790 = vrot.slane %v1789, 1
    %v1791 = vmax.f32 %v1789, %v1790
    %v1792 = vsel %vm1742, %v1685, -inf
    %v1793 = vrot.slane %v1792, 4
    %v1794 = vmax.f32 %v1792, %v1793
    %v1795 = vrot.slane %v1794, 2
    %v1796 = vmax.f32 %v1794, %v1795
    %v1797 = vrot.slane %v1796, 1
    %v1798 = vmax.f32 %v1796, %v1797
    %v1799 = vsel %vm1742, %v1686, -inf
    %v1800 = vrot.slane %v1799, 4
    %v1801 = vmax.f32 %v1799, %v1800
    %v1802 = vrot.slane %v1801, 2
    %v1803 = vmax.f32 %v1801, %v1802
    %v1804 = vrot.slane %v1803, 1
    %v1805 = vmax.f32 %v1803, %v1804
    %v1806 = vsel %vm1742, %v1687, -inf
    %v1807 = vrot.slane %v1806, 4
    %v1808 = vmax.f32 %v1806, %v1807
    %v1809 = vrot.slane %v1808, 2
    %v1810 = vmax.f32 %v1808, %v1809
    %v1811 = vrot.slane %v1810, 1
    %v1812 = vmax.f32 %v1810, %v1811
    %v1813 = vsel %vm1742, %v1688, -inf
    %v1814 = vrot.slane %v1813, 4
    %v1815 = vmax.f32 %v1813, %v1814
    %v1816 = vrot.slane %v1815, 2
    %v1817 = vmax.f32 %v1815, %v1816
    %v1818 = vrot.slane %v1817, 1
    %v1819 = vmax.f32 %v1817, %v1818
    %v1820 = vsel %vm1742, %v1689, -inf
    %v1821 = vrot.slane %v1820, 4
    %v1822 = vmax.f32 %v1820, %v1821
    %v1823 = vrot.slane %v1822, 2
    %v1824 = vmax.f32 %v1822, %v1823
    %v1825 = vrot.slane %v1824, 1
    %v1826 = vmax.f32 %v1824, %v1825
    %v1827 = vsel %vm1742, %v1690, -inf
    %v1828 = vrot.slane %v1827, 4
    %v1829 = vmax.f32 %v1827, %v1828
    %v1830 = vrot.slane %v1829, 2
    %v1831 = vmax.f32 %v1829, %v1830
    %v1832 = vrot.slane %v1831, 1
    %v1833 = vmax.f32 %v1831, %v1832
    %v1834 = vsel %vm1742, %v1691, -inf
    %v1835 = vrot.slane %v1834, 4
    %v1836 = vmax.f32 %v1834, %v1835
    %v1837 = vrot.slane %v1836, 2
    %v1838 = vmax.f32 %v1836, %v1837
    %v1839 = vrot.slane %v1838, 1
    %v1840 = vmax.f32 %v1838, %v1839
    %v1841 = vsel %vm1742, %v1692, -inf
    %v1842 = vrot.slane %v1841, 4
    %v1843 = vmax.f32 %v1841, %v1842
    %v1844 = vrot.slane %v1843, 2
    %v1845 = vmax.f32 %v1843, %v1844
    %v1846 = vrot.slane %v1845, 1
    %v1847 = vmax.f32 %v1845, %v1846
    %v1848 = vsel %vm1742, %v1693, -inf
    %v1849 = vrot.slane %v1848, 4
    %v1850 = vmax.f32 %v1848, %v1849
    %v1851 = vrot.slane %v1850, 2
    %v1852 = vmax.f32 %v1850, %v1851
    %v1853 = vrot.slane %v1852, 1
    %v1854 = vmax.f32 %v1852, %v1853
    %v1855 = vsel %vm1742, %v1694, -inf
    %v1856 = vrot.slane %v1855, 4
    %v1857 = vmax.f32 %v1855, %v1856
    %v1858 = vrot.slane %v1857, 2
    %v1859 = vmax.f32 %v1857, %v1858
    %v1860 = vrot.slane %v1859, 1
    %v1861 = vmax.f32 %v1859, %v1860
    %v1862 = vsel %vm1742, %v1695, -inf
    %v1863 = vrot.slane %v1862, 4
    %v1864 = vmax.f32 %v1862, %v1863
    %v1865 = vrot.slane %v1864, 2
    %v1866 = vmax.f32 %v1864, %v1865
    %v1867 = vrot.slane %v1866, 1
    %v1868 = vmax.f32 %v1866, %v1867
    %v1869 = vsel %vm1742, %v1696, -inf
    %v1870 = vrot.slane %v1869, 4
    %v1871 = vmax.f32 %v1869, %v1870
    %v1872 = vrot.slane %v1871, 2
    %v1873 = vmax.f32 %v1871, %v1872
    %v1874 = vrot.slane %v1873, 1
    %v1875 = vmax.f32 %v1873, %v1874
    %v1876 = vsel %vm1742, %v1697, -inf
    %v1877 = vrot.slane %v1876, 4
    %v1878 = vmax.f32 %v1876, %v1877
    %v1879 = vrot.slane %v1878, 2
    %v1880 = vmax.f32 %v1878, %v1879
    %v1881 = vrot.slane %v1880, 1
    %v1882 = vmax.f32 %v1880, %v1881
    %v1883 = vsel %vm1742, %v1698, -inf
    %v1884 = vrot.slane %v1883, 4
    %v1885 = vmax.f32 %v1883, %v1884
    %v1886 = vrot.slane %v1885, 2
    %v1887 = vmax.f32 %v1885, %v1886
    %v1888 = vrot.slane %v1887, 1
    %v1889 = vmax.f32 %v1887, %v1888
    %v1890 = vsel %vm1742, %v1699, -inf
    %v1891 = vrot.slane %v1890, 4
    %v1892 = vmax.f32 %v1890, %v1891
    %v1893 = vrot.slane %v1892, 2
    %v1894 = vmax.f32 %v1892, %v1893
    %v1895 = vrot.slane %v1894, 1
    %v1896 = vmax.f32 %v1894, %v1895
    %v1897 = vsel %vm1742, %v1700, -inf
    %v1898 = vrot.slane %v1897, 4
    %v1899 = vmax.f32 %v1897, %v1898
    %v1900 = vrot.slane %v1899, 2
    %v1901 = vmax.f32 %v1899, %v1900
    %v1902 = vrot.slane %v1901, 1
    %v1903 = vmax.f32 %v1901, %v1902
    %v1904 = vsel %vm1742, %v1701, -inf
    %v1905 = vrot.slane %v1904, 4
    %v1906 = vmax.f32 %v1904, %v1905
    %v1907 = vrot.slane %v1906, 2
    %v1908 = vmax.f32 %v1906, %v1907
    %v1909 = vrot.slane %v1908, 1
    %v1910 = vmax.f32 %v1908, %v1909
    %v1911 = vsel %vm1742, %v1702, -inf
    %v1912 = vrot.slane %v1911, 4
    %v1913 = vmax.f32 %v1911, %v1912
    %v1914 = vrot.slane %v1913, 2
    %v1915 = vmax.f32 %v1913, %v1914
    %v1916 = vrot.slane %v1915, 1
    %v1917 = vmax.f32 %v1915, %v1916
    %v1918 = vsel %vm1742, %v1703, -inf
    %v1919 = vrot.slane %v1918, 4
    %v1920 = vmax.f32 %v1918, %v1919
    %v1921 = vrot.slane %v1920, 2
    %v1922 = vmax.f32 %v1920, %v1921
    %v1923 = vrot.slane %v1922, 1
    %v1924 = vmax.f32 %v1922, %v1923
    %v1925 = vsel %vm1742, %v1704, -inf
    %v1926 = vrot.slane %v1925, 4
    %v1927 = vmax.f32 %v1925, %v1926
    %v1928 = vrot.slane %v1927, 2
    %v1929 = vmax.f32 %v1927, %v1928
    %v1930 = vrot.slane %v1929, 1
    %v1931 = vmax.f32 %v1929, %v1930
    %v1932 = vsel %vm1742, %v1705, -inf
    %v1933 = vrot.slane %v1932, 4
    %v1934 = vmax.f32 %v1932, %v1933
    %v1935 = vrot.slane %v1934, 2
    %v1936 = vmax.f32 %v1934, %v1935
    %v1937 = vrot.slane %v1936, 1
    %v1938 = vmax.f32 %v1936, %v1937
    %v1939 = vsel %vm1742, %v1706, -inf
    %v1940 = vrot.slane %v1939, 4
    %v1941 = vmax.f32 %v1939, %v1940
    %v1942 = vrot.slane %v1941, 2
    %v1943 = vmax.f32 %v1941, %v1942
    %v1944 = vrot.slane %v1943, 1
    %v1945 = vmax.f32 %v1943, %v1944
    %v1946 = vsel %vm1742, %v1707, -inf
    %v1947 = vrot.slane %v1946, 4
    %v1948 = vmax.f32 %v1946, %v1947
    %v1949 = vrot.slane %v1948, 2
    %v1950 = vmax.f32 %v1948, %v1949
    %v1951 = vrot.slane %v1950, 1
    %v1952 = vmax.f32 %v1950, %v1951
    %v1953 = vsel %vm1742, %v1708, -inf
    %v1954 = vrot.slane %v1953, 4
    %v1955 = vmax.f32 %v1953, %v1954
    %v1956 = vrot.slane %v1955, 2
    %v1957 = vmax.f32 %v1955, %v1956
    %v1958 = vrot.slane %v1957, 1
    %v1959 = vmax.f32 %v1957, %v1958
    %v1960 = vsel %vm1742, %v1709, -inf
    %v1961 = vrot.slane %v1960, 4
    %v1962 = vmax.f32 %v1960, %v1961
    %v1963 = vrot.slane %v1962, 2
    %v1964 = vmax.f32 %v1962, %v1963
    %v1965 = vrot.slane %v1964, 1
    %v1966 = vmax.f32 %v1964, %v1965
    %v1967 = vsel %vm1742, %v1710, -inf
    %v1968 = vrot.slane %v1967, 4
    %v1969 = vmax.f32 %v1967, %v1968
    %v1970 = vrot.slane %v1969, 2
    %v1971 = vmax.f32 %v1969, %v1970
    %v1972 = vrot.slane %v1971, 1
    %v1973 = vmax.f32 %v1971, %v1972
    %v1974 = vsel %vm1742, %v1711, -inf
    %v1975 = vrot.slane %v1974, 4
    %v1976 = vmax.f32 %v1974, %v1975
    %v1977 = vrot.slane %v1976, 2
    %v1978 = vmax.f32 %v1976, %v1977
    %v1979 = vrot.slane %v1978, 1
    %v1980 = vmax.f32 %v1978, %v1979
    %v1981 = vsel %vm1742, %v1712, -inf
    %v1982 = vrot.slane %v1981, 4
    %v1983 = vmax.f32 %v1981, %v1982
    %v1984 = vrot.slane %v1983, 2
    %v1985 = vmax.f32 %v1983, %v1984
    %v1986 = vrot.slane %v1985, 1
    %v1987 = vmax.f32 %v1985, %v1986
    %v1988 = vsel %vm1742, %v1713, -inf
    %v1989 = vrot.slane %v1988, 4
    %v1990 = vmax.f32 %v1988, %v1989
    %v1991 = vrot.slane %v1990, 2
    %v1992 = vmax.f32 %v1990, %v1991
    %v1993 = vrot.slane %v1992, 1
    %v1994 = vmax.f32 %v1992, %v1993
    %v1995 = vsel %vm1742, %v1714, -inf
    %v1996 = vrot.slane %v1995, 4
    %v1997 = vmax.f32 %v1995, %v1996
    %v1998 = vrot.slane %v1997, 2
    %v1999 = vmax.f32 %v1997, %v1998
    %v2000 = vrot.slane %v1999, 1
    %v2001 = vmax.f32 %v1999, %v2000
    %v2002 = vsel %vm1742, %v1715, -inf
    %v2003 = vrot.slane %v2002, 4
    %v2004 = vmax.f32 %v2002, %v2003
    %v2005 = vrot.slane %v2004, 2
    %v2006 = vmax.f32 %v2004, %v2005
    %v2007 = vrot.slane %v2006, 1
    %v2008 = vmax.f32 %v2006, %v2007
    %v2009 = vsel %vm1742, %v1716, -inf
    %v2010 = vrot.slane %v2009, 4
    %v2011 = vmax.f32 %v2009, %v2010
    %v2012 = vrot.slane %v2011, 2
    %v2013 = vmax.f32 %v2011, %v2012
    %v2014 = vrot.slane %v2013, 1
    %v2015 = vmax.f32 %v2013, %v2014
    %v2016 = vsel %vm1742, %v1717, -inf
    %v2017 = vrot.slane %v2016, 4
    %v2018 = vmax.f32 %v2016, %v2017
    %v2019 = vrot.slane %v2018, 2
    %v2020 = vmax.f32 %v2018, %v2019
    %v2021 = vrot.slane %v2020, 1
    %v2022 = vmax.f32 %v2020, %v2021
    %v2023 = vsel %vm1742, %v1718, -inf
    %v2024 = vrot.slane %v2023, 4
    %v2025 = vmax.f32 %v2023, %v2024
    %v2026 = vrot.slane %v2025, 2
    %v2027 = vmax.f32 %v2025, %v2026
    %v2028 = vrot.slane %v2027, 1
    %v2029 = vmax.f32 %v2027, %v2028
    %v2030 = vsel %vm1742, %v1719, -inf
    %v2031 = vrot.slane %v2030, 4
    %v2032 = vmax.f32 %v2030, %v2031
    %v2033 = vrot.slane %v2032, 2
    %v2034 = vmax.f32 %v2032, %v2033
    %v2035 = vrot.slane %v2034, 1
    %v2036 = vmax.f32 %v2034, %v2035
    %v2037 = vsel %vm1742, %v1720, -inf
    %v2038 = vrot.slane %v2037, 4
    %v2039 = vmax.f32 %v2037, %v2038
    %v2040 = vrot.slane %v2039, 2
    %v2041 = vmax.f32 %v2039, %v2040
    %v2042 = vrot.slane %v2041, 1
    %v2043 = vmax.f32 %v2041, %v2042
    %v2044 = vsel %vm1742, %v1721, -inf
    %v2045 = vrot.slane %v2044, 4
    %v2046 = vmax.f32 %v2044, %v2045
    %v2047 = vrot.slane %v2046, 2
    %v2048 = vmax.f32 %v2046, %v2047
    %v2049 = vrot.slane %v2048, 1
    %v2050 = vmax.f32 %v2048, %v2049
    %v2051 = vsel %vm1742, %v1722, -inf
    %v2052 = vrot.slane %v2051, 4
    %v2053 = vmax.f32 %v2051, %v2052
    %v2054 = vrot.slane %v2053, 2
    %v2055 = vmax.f32 %v2053, %v2054
    %v2056 = vrot.slane %v2055, 1
    %v2057 = vmax.f32 %v2055, %v2056
    %v2058 = vsel %vm1742, %v1723, -inf
    %v2059 = vrot.slane %v2058, 4
    %v2060 = vmax.f32 %v2058, %v2059
    %v2061 = vrot.slane %v2060, 2
    %v2062 = vmax.f32 %v2060, %v2061
    %v2063 = vrot.slane %v2062, 1
    %v2064 = vmax.f32 %v2062, %v2063
    %v2065 = vsel %vm1742, %v1724, -inf
    %v2066 = vrot.slane %v2065, 4
    %v2067 = vmax.f32 %v2065, %v2066
    %v2068 = vrot.slane %v2067, 2
    %v2069 = vmax.f32 %v2067, %v2068
    %v2070 = vrot.slane %v2069, 1
    %v2071 = vmax.f32 %v2069, %v2070
    %v2072 = vsel %vm1742, %v1725, -inf
    %v2073 = vrot.slane %v2072, 4
    %v2074 = vmax.f32 %v2072, %v2073
    %v2075 = vrot.slane %v2074, 2
    %v2076 = vmax.f32 %v2074, %v2075
    %v2077 = vrot.slane %v2076, 1
    %v2078 = vmax.f32 %v2076, %v2077
    %v2079 = vsel %vm1742, %v1726, -inf
    %v2080 = vrot.slane %v2079, 4
    %v2081 = vmax.f32 %v2079, %v2080
    %v2082 = vrot.slane %v2081, 2
    %v2083 = vmax.f32 %v2081, %v2082
    %v2084 = vrot.slane %v2083, 1
    %v2085 = vmax.f32 %v2083, %v2084
    %v2086 = vsel %vm1742, %v1727, -inf
    %v2087 = vrot.slane %v2086, 4
    %v2088 = vmax.f32 %v2086, %v2087
    %v2089 = vrot.slane %v2088, 2
    %v2090 = vmax.f32 %v2088, %v2089
    %v2091 = vrot.slane %v2090, 1
    %v2092 = vmax.f32 %v2090, %v2091
    %v2093 = vsel %vm1742, %v1728, -inf
    %v2094 = vrot.slane %v2093, 4
    %v2095 = vmax.f32 %v2093, %v2094
    %v2096 = vrot.slane %v2095, 2
    %v2097 = vmax.f32 %v2095, %v2096
    %v2098 = vrot.slane %v2097, 1
    %v2099 = vmax.f32 %v2097, %v2098
    %v2100 = vsel %vm1742, %v1729, -inf
    %v2101 = vrot.slane %v2100, 4
    %v2102 = vmax.f32 %v2100, %v2101
    %v2103 = vrot.slane %v2102, 2
    %v2104 = vmax.f32 %v2102, %v2103
    %v2105 = vrot.slane %v2104, 1
    %v2106 = vmax.f32 %v2104, %v2105
    %v2107 = vsel %vm1742, %v1730, -inf
    %v2108 = vrot.slane %v2107, 4
    %v2109 = vmax.f32 %v2107, %v2108
    %v2110 = vrot.slane %v2109, 2
    %v2111 = vmax.f32 %v2109, %v2110
    %v2112 = vrot.slane %v2111, 1
    %v2113 = vmax.f32 %v2111, %v2112
    %v2114 = vsel %vm1742, %v1731, -inf
    %v2115 = vrot.slane %v2114, 4
    %v2116 = vmax.f32 %v2114, %v2115
    %v2117 = vrot.slane %v2116, 2
    %v2118 = vmax.f32 %v2116, %v2117
    %v2119 = vrot.slane %v2118, 1
    %v2120 = vmax.f32 %v2118, %v2119
    %v2121 = vsel %vm1742, %v1732, -inf
    %v2122 = vrot.slane %v2121, 4
    %v2123 = vmax.f32 %v2121, %v2122
    %v2124 = vrot.slane %v2123, 2
    %v2125 = vmax.f32 %v2123, %v2124
    %v2126 = vrot.slane %v2125, 1
    %v2127 = vmax.f32 %v2125, %v2126
    %v2128 = vsel %vm1742, %v1733, -inf
    %v2129 = vrot.slane %v2128, 4
    %v2130 = vmax.f32 %v2128, %v2129
    %v2131 = vrot.slane %v2130, 2
    %v2132 = vmax.f32 %v2130, %v2131
    %v2133 = vrot.slane %v2132, 1
    %v2134 = vmax.f32 %v2132, %v2133
    %v2135 = vsel %vm1742, %v1734, -inf
    %v2136 = vrot.slane %v2135, 4
    %v2137 = vmax.f32 %v2135, %v2136
    %v2138 = vrot.slane %v2137, 2
    %v2139 = vmax.f32 %v2137, %v2138
    %v2140 = vrot.slane %v2139, 1
    %v2141 = vmax.f32 %v2139, %v2140
    %v2142 = vsel %vm1742, %v1735, -inf
    %v2143 = vrot.slane %v2142, 4
    %v2144 = vmax.f32 %v2142, %v2143
    %v2145 = vrot.slane %v2144, 2
    %v2146 = vmax.f32 %v2144, %v2145
    %v2147 = vrot.slane %v2146, 1
    %v2148 = vmax.f32 %v2146, %v2147
    %v2149 = vsel %vm1742, %v1736, -inf
    %v2150 = vrot.slane %v2149, 4
    %v2151 = vmax.f32 %v2149, %v2150
    %v2152 = vrot.slane %v2151, 2
    %v2153 = vmax.f32 %v2151, %v2152
    %v2154 = vrot.slane %v2153, 1
    %v2155 = vmax.f32 %v2153, %v2154
    %v2156 = vsel %vm1742, %v1737, -inf
    %v2157 = vrot.slane %v2156, 4
    %v2158 = vmax.f32 %v2156, %v2157
    %v2159 = vrot.slane %v2158, 2
    %v2160 = vmax.f32 %v2158, %v2159
    %v2161 = vrot.slane %v2160, 1
    %v2162 = vmax.f32 %v2160, %v2161
    %v2163 = vsel %vm1742, %v1738, -inf
    %v2164 = vrot.slane %v2163, 4
    %v2165 = vmax.f32 %v2163, %v2164
    %v2166 = vrot.slane %v2165, 2
    %v2167 = vmax.f32 %v2165, %v2166
    %v2168 = vrot.slane %v2167, 1
    %v2169 = vmax.f32 %v2167, %v2168
    %v2170 = vsel %vm1742, %v1739, -inf
    %v2171 = vrot.slane %v2170, 4
    %v2172 = vmax.f32 %v2170, %v2171
    %v2173 = vrot.slane %v2172, 2
    %v2174 = vmax.f32 %v2172, %v2173
    %v2175 = vrot.slane %v2174, 1
    %v2176 = vmax.f32 %v2174, %v2175
    %v2177 = vsel %vm1742, %v1740, -inf
    %v2178 = vrot.slane %v2177, 4
    %v2179 = vmax.f32 %v2177, %v2178
    %v2180 = vrot.slane %v2179, 2
    %v2181 = vmax.f32 %v2179, %v2180
    %v2182 = vrot.slane %v2181, 1
    %v2183 = vmax.f32 %v2181, %v2182
    %v2184 = vsel %vm1742, %v1741, -inf
    %v2185 = vrot.slane %v2184, 4
    %v2186 = vmax.f32 %v2184, %v2185
    %v2187 = vrot.slane %v2186, 2
    %v2188 = vmax.f32 %v2186, %v2187
    %v2189 = vrot.slane %v2188, 1
    %v2190 = vmax.f32 %v2188, %v2189
    %v2191 = vsub.f32 %v1678, %v1749
    %v2192 = vsub.f32 %v1679, %v1756
    %v2193 = vsub.f32 %v1680, %v1763
    %v2194 = vsub.f32 %v1681, %v1770
    %v2195 = vsub.f32 %v1682, %v1777
    %v2196 = vsub.f32 %v1683, %v1784
    %v2197 = vsub.f32 %v1684, %v1791
    %v2198 = vsub.f32 %v1685, %v1798
    %v2199 = vsub.f32 %v1686, %v1805
    %v2200 = vsub.f32 %v1687, %v1812
    %v2201 = vsub.f32 %v1688, %v1819
    %v2202 = vsub.f32 %v1689, %v1826
    %v2203 = vsub.f32 %v1690, %v1833
    %v2204 = vsub.f32 %v1691, %v1840
    %v2205 = vsub.f32 %v1692, %v1847
    %v2206 = vsub.f32 %v1693, %v1854
    %v2207 = vsub.f32 %v1694, %v1861
    %v2208 = vsub.f32 %v1695, %v1868
    %v2209 = vsub.f32 %v1696, %v1875
    %v2210 = vsub.f32 %v1697, %v1882
    %v2211 = vsub.f32 %v1698, %v1889
    %v2212 = vsub.f32 %v1699, %v1896
    %v2213 = vsub.f32 %v1700, %v1903
    %v2214 = vsub.f32 %v1701, %v1910
    %v2215 = vsub.f32 %v1702, %v1917
    %v2216 = vsub.f32 %v1703, %v1924
    %v2217 = vsub.f32 %v1704, %v1931
    %v2218 = vsub.f32 %v1705, %v1938
    %v2219 = vsub.f32 %v1706, %v1945
    %v2220 = vsub.f32 %v1707, %v1952
    %v2221 = vsub.f32 %v1708, %v1959
    %v2222 = vsub.f32 %v1709, %v1966
    %v2223 = vsub.f32 %v1710, %v1973
    %v2224 = vsub.f32 %v1711, %v1980
    %v2225 = vsub.f32 %v1712, %v1987
    %v2226 = vsub.f32 %v1713, %v1994
    %v2227 = vsub.f32 %v1714, %v2001
    %v2228 = vsub.f32 %v1715, %v2008
    %v2229 = vsub.f32 %v1716, %v2015
    %v2230 = vsub.f32 %v1717, %v2022
    %v2231 = vsub.f32 %v1718, %v2029
    %v2232 = vsub.f32 %v1719, %v2036
    %v2233 = vsub.f32 %v1720, %v2043
    %v2234 = vsub.f32 %v1721, %v2050
    %v2235 = vsub.f32 %v1722, %v2057
    %v2236 = vsub.f32 %v1723, %v2064
    %v2237 = vsub.f32 %v1724, %v2071
    %v2238 = vsub.f32 %v1725, %v2078
    %v2239 = vsub.f32 %v1726, %v2085
    %v2240 = vsub.f32 %v1727, %v2092
    %v2241 = vsub.f32 %v1728, %v2099
    %v2242 = vsub.f32 %v1729, %v2106
    %v2243 = vsub.f32 %v1730, %v2113
    %v2244 = vsub.f32 %v1731, %v2120
    %v2245 = vsub.f32 %v1732, %v2127
    %v2246 = vsub.f32 %v1733, %v2134
    %v2247 = vsub.f32 %v1734, %v2141
    %v2248 = vsub.f32 %v1735, %v2148
    %v2249 = vsub.f32 %v1736, %v2155
    %v2250 = vsub.f32 %v1737, %v2162
    %v2251 = vsub.f32 %v1738, %v2169
    %v2252 = vsub.f32 %v1739, %v2176
    %v2253 = vsub.f32 %v1740, %v2183
    %v2254 = vsub.f32 %v1741, %v2190
    %v2255 = vmul.f32 %v2191, 1.442695
    %v2256 = vpow.pop %v2255
    %v2257 = vmul.f32 %v2192, 1.442695
    %v2258 = vpow.pop %v2257
    %v2259 = vmul.f32 %v2193, 1.442695
    %v2260 = vpow.pop %v2259
    %v2261 = vmul.f32 %v2194, 1.442695
    %v2262 = vpow.pop %v2261
    %v2263 = vmul.f32 %v2195, 1.442695
    %v2264 = vpow.pop %v2263
    %v2265 = vmul.f32 %v2196, 1.442695
    %v2266 = vpow.pop %v2265
    %v2267 = vmul.f32 %v2197, 1.442695
    %v2268 = vpow.pop %v2267
    %v2269 = vmul.f32 %v2198, 1.442695
    %v2270 = vpow.pop %v2269
    %v2271 = vmul.f32 %v2199, 1.442695
    %v2272 = vpow.pop %v2271
    %v2273 = vmul.f32 %v2200, 1.442695
    %v2274 = vpow.pop %v2273
    %v2275 = vmul.f32 %v2201, 1.442695
    %v2276 = vpow.pop %v2275
    %v2277 = vmul.f32 %v2202, 1.442695
    %v2278 = vpow.pop %v2277
    %v2279 = vmul.f32 %v2203, 1.442695
    %v2280 = vpow.pop %v2279
    %v2281 = vmul.f32 %v2204, 1.442695
    %v2282 = vpow.pop %v2281
    %v2283 = vmul.f32 %v2205, 1.442695
    %v2284 = vpow.pop %v2283
    %v2285 = vmul.f32 %v2206, 1.442695
    %v2286 = vpow.pop %v2285
    %v2287 = vmul.f32 %v2207, 1.442695
    %v2288 = vpow.pop %v2287
    %v2289 = vmul.f32 %v2208, 1.442695
    %v2290 = vpow.pop %v2289
    %v2291 = vmul.f32 %v2209, 1.442695
    %v2292 = vpow.pop %v2291
    %v2293 = vmul.f32 %v2210, 1.442695
    %v2294 = vpow.pop %v2293
    %v2295 = vmul.f32 %v2211, 1.442695
    %v2296 = vpow.pop %v2295
    %v2297 = vmul.f32 %v2212, 1.442695
    %v2298 = vpow.pop %v2297
    %v2299 = vmul.f32 %v2213, 1.442695
    %v2300 = vpow.pop %v2299
    %v2301 = vmul.f32 %v2214, 1.442695
    %v2302 = vpow.pop %v2301
    %v2303 = vmul.f32 %v2215, 1.442695
    %v2304 = vpow.pop %v2303
    %v2305 = vmul.f32 %v2216, 1.442695
    %v2306 = vpow.pop %v2305
    %v2307 = vmul.f32 %v2217, 1.442695
    %v2308 = vpow.pop %v2307
    %v2309 = vmul.f32 %v2218, 1.442695
    %v2310 = vpow.pop %v2309
    %v2311 = vmul.f32 %v2219, 1.442695
    %v2312 = vpow.pop %v2311
    %v2313 = vmul.f32 %v2220, 1.442695
    %v2314 = vpow.pop %v2313
    %v2315 = vmul.f32 %v2221, 1.442695
    %v2316 = vpow.pop %v2315
    %v2317 = vmul.f32 %v2222, 1.442695
    %v2318 = vpow.pop %v2317
    %v2319 = vmul.f32 %v2223, 1.442695
    %v2320 = vpow.pop %v2319
    %v2321 = vmul.f32 %v2224, 1.442695
    %v2322 = vpow.pop %v2321
    %v2323 = vmul.f32 %v2225, 1.442695
    %v2324 = vpow.pop %v2323
    %v2325 = vmul.f32 %v2226, 1.442695
    %v2326 = vpow.pop %v2325
    %v2327 = vmul.f32 %v2227, 1.442695
    %v2328 = vpow.pop %v2327
    %v2329 = vmul.f32 %v2228, 1.442695
    %v2330 = vpow.pop %v2329
    %v2331 = vmul.f32 %v2229, 1.442695
    %v2332 = vpow.pop %v2331
    %v2333 = vmul.f32 %v2230, 1.442695
    %v2334 = vpow.pop %v2333
    %v2335 = vmul.f32 %v2231, 1.442695
    %v2336 = vpow.pop %v2335
    %v2337 = vmul.f32 %v2232, 1.442695
    %v2338 = vpow.pop %v2337
    %v2339 = vmul.f32 %v2233, 1.442695
    %v2340 = vpow.pop %v2339
    %v2341 = vmul.f32 %v2234, 1.442695
    %v2342 = vpow.pop %v2341
    %v2343 = vmul.f32 %v2235, 1.442695
    %v2344 = vpow.pop %v2343
    %v2345 = vmul.f32 %v2236, 1.442695
    %v2346 = vpow.pop %v2345
    %v2347 = vmul.f32 %v2237, 1.442695
    %v2348 = vpow.pop %v2347
    %v2349 = vmul.f32 %v2238, 1.442695
    %v2350 = vpow.pop %v2349
    %v2351 = vmul.f32 %v2239, 1.442695
    %v2352 = vpow.pop %v2351
    %v2353 = vmul.f32 %v2240, 1.442695
    %v2354 = vpow.pop %v2353
    %v2355 = vmul.f32 %v2241, 1.442695
    %v2356 = vpow.pop %v2355
    %v2357 = vmul.f32 %v2242, 1.442695
    %v2358 = vpow.pop %v2357
    %v2359 = vmul.f32 %v2243, 1.442695
    %v2360 = vpow.pop %v2359
    %v2361 = vmul.f32 %v2244, 1.442695
    %v2362 = vpow.pop %v2361
    %v2363 = vmul.f32 %v2245, 1.442695
    %v2364 = vpow.pop %v2363
    %v2365 = vmul.f32 %v2246, 1.442695
    %v2366 = vpow.pop %v2365
    %v2367 = vmul.f32 %v2247, 1.442695
    %v2368 = vpow.pop %v2367
    %v2369 = vmul.f32 %v2248, 1.442695
    %v2370 = vpow.pop %v2369
    %v2371 = vmul.f32 %v2249, 1.442695
    %v2372 = vpow.pop %v2371
    %v2373 = vmul.f32 %v2250, 1.442695
    %v2374 = vpow.pop %v2373
    %v2375 = vmul.f32 %v2251, 1.442695
    %v2376 = vpow.pop %v2375
    %v2377 = vmul.f32 %v2252, 1.442695
    %v2378 = vpow.pop %v2377
    %v2379 = vmul.f32 %v2253, 1.442695
    %v2380 = vpow.pop %v2379
    %v2381 = vmul.f32 %v2254, 1.442695
    %v2382 = vpow.pop %v2381
    %v2383 = vsel %vm1742, %v2256, 0.0
    %v2384 = vrot.slane %v2383, 4
    %v2385 = vadd.f32 %v2383, %v2384
    %v2386 = vrot.slane %v2385, 2
    %v2387 = vadd.f32 %v2385, %v2386
    %v2388 = vrot.slane %v2387, 1
    %v2389 = vadd.f32 %v2387, %v2388
    %v2390 = vsel %vm1742, %v2258, 0.0
    %v2391 = vrot.slane %v2390, 4
    %v2392 = vadd.f32 %v2390, %v2391
    %v2393 = vrot.slane %v2392, 2
    %v2394 = vadd.f32 %v2392, %v2393
    %v2395 = vrot.slane %v2394, 1
    %v2396 = vadd.f32 %v2394, %v2395
    %v2397 = vsel %vm1742, %v2260, 0.0
    %v2398 = vrot.slane %v2397, 4
    %v2399 = vadd.f32 %v2397, %v2398
    %v2400 = vrot.slane %v2399, 2
    %v2401 = vadd.f32 %v2399, %v2400
    %v2402 = vrot.slane %v2401, 1
    %v2403 = vadd.f32 %v2401, %v2402
    %v2404 = vsel %vm1742, %v2262, 0.0
    %v2405 = vrot.slane %v2404, 4
    %v2406 = vadd.f32 %v2404, %v2405
    %v2407 = vrot.slane %v2406, 2
    %v2408 = vadd.f32 %v2406, %v2407
    %v2409 = vrot.slane %v2408, 1
    %v2410 = vadd.f32 %v2408, %v2409
    %v2411 = vsel %vm1742, %v2264, 0.0
    %v2412 = vrot.slane %v2411, 4
    %v2413 = vadd.f32 %v2411, %v2412
    %v2414 = vrot.slane %v2413, 2
    %v2415 = vadd.f32 %v2413, %v2414
    %v2416 = vrot.slane %v2415, 1
    %v2417 = vadd.f32 %v2415, %v2416
    %v2418 = vsel %vm1742, %v2266, 0.0
    %v2419 = vrot.slane %v2418, 4
    %v2420 = vadd.f32 %v2418, %v2419
    %v2421 = vrot.slane %v2420, 2
    %v2422 = vadd.f32 %v2420, %v2421
    %v2423 = vrot.slane %v2422, 1
    %v2424 = vadd.f32 %v2422, %v2423
    %v2425 = vsel %vm1742, %v2268, 0.0
    %v2426 = vrot.slane %v2425, 4
    %v2427 = vadd.f32 %v2425, %v2426
    %v2428 = vrot.slane %v2427, 2
    %v2429 = vadd.f32 %v2427, %v2428
    %v2430 = vrot.slane %v2429, 1
    %v2431 = vadd.f32 %v2429, %v2430
    %v2432 = vsel %vm1742, %v2270, 0.0
    %v2433 = vrot.slane %v2432, 4
    %v2434 = vadd.f32 %v2432, %v2433
    %v2435 = vrot.slane %v2434, 2
    %v2436 = vadd.f32 %v2434, %v2435
    %v2437 = vrot.slane %v2436, 1
    %v2438 = vadd.f32 %v2436, %v2437
    %v2439 = vsel %vm1742, %v2272, 0.0
    %v2440 = vrot.slane %v2439, 4
    %v2441 = vadd.f32 %v2439, %v2440
    %v2442 = vrot.slane %v2441, 2
    %v2443 = vadd.f32 %v2441, %v2442
    %v2444 = vrot.slane %v2443, 1
    %v2445 = vadd.f32 %v2443, %v2444
    %v2446 = vsel %vm1742, %v2274, 0.0
    %v2447 = vrot.slane %v2446, 4
    %v2448 = vadd.f32 %v2446, %v2447
    %v2449 = vrot.slane %v2448, 2
    %v2450 = vadd.f32 %v2448, %v2449
    %v2451 = vrot.slane %v2450, 1
    %v2452 = vadd.f32 %v2450, %v2451
    %v2453 = vsel %vm1742, %v2276, 0.0
    %v2454 = vrot.slane %v2453, 4
    %v2455 = vadd.f32 %v2453, %v2454
    %v2456 = vrot.slane %v2455, 2
    %v2457 = vadd.f32 %v2455, %v2456
    %v2458 = vrot.slane %v2457, 1
    %v2459 = vadd.f32 %v2457, %v2458
    %v2460 = vsel %vm1742, %v2278, 0.0
    %v2461 = vrot.slane %v2460, 4
    %v2462 = vadd.f32 %v2460, %v2461
    %v2463 = vrot.slane %v2462, 2
    %v2464 = vadd.f32 %v2462, %v2463
    %v2465 = vrot.slane %v2464, 1
    %v2466 = vadd.f32 %v2464, %v2465
    %v2467 = vsel %vm1742, %v2280, 0.0
    %v2468 = vrot.slane %v2467, 4
    %v2469 = vadd.f32 %v2467, %v2468
    %v2470 = vrot.slane %v2469, 2
    %v2471 = vadd.f32 %v2469, %v2470
    %v2472 = vrot.slane %v2471, 1
    %v2473 = vadd.f32 %v2471, %v2472
    %v2474 = vsel %vm1742, %v2282, 0.0
    %v2475 = vrot.slane %v2474, 4
    %v2476 = vadd.f32 %v2474, %v2475
    %v2477 = vrot.slane %v2476, 2
    %v2478 = vadd.f32 %v2476, %v2477
    %v2479 = vrot.slane %v2478, 1
    %v2480 = vadd.f32 %v2478, %v2479
    %v2481 = vsel %vm1742, %v2284, 0.0
    %v2482 = vrot.slane %v2481, 4
    %v2483 = vadd.f32 %v2481, %v2482
    %v2484 = vrot.slane %v2483, 2
    %v2485 = vadd.f32 %v2483, %v2484
    %v2486 = vrot.slane %v2485, 1
    %v2487 = vadd.f32 %v2485, %v2486
    %v2488 = vsel %vm1742, %v2286, 0.0
    %v2489 = vrot.slane %v2488, 4
    %v2490 = vadd.f32 %v2488, %v2489
    %v2491 = vrot.slane %v2490, 2
    %v2492 = vadd.f32 %v2490, %v2491
    %v2493 = vrot.slane %v2492, 1
    %v2494 = vadd.f32 %v2492, %v2493
    %v2495 = vsel %vm1742, %v2288, 0.0
    %v2496 = vrot.slane %v2495, 4
    %v2497 = vadd.f32 %v2495, %v2496
    %v2498 = vrot.slane %v2497, 2
    %v2499 = vadd.f32 %v2497, %v2498
    %v2500 = vrot.slane %v2499, 1
    %v2501 = vadd.f32 %v2499, %v2500
    %v2502 = vsel %vm1742, %v2290, 0.0
    %v2503 = vrot.slane %v2502, 4
    %v2504 = vadd.f32 %v2502, %v2503
    %v2505 = vrot.slane %v2504, 2
    %v2506 = vadd.f32 %v2504, %v2505
    %v2507 = vrot.slane %v2506, 1
    %v2508 = vadd.f32 %v2506, %v2507
    %v2509 = vsel %vm1742, %v2292, 0.0
    %v2510 = vrot.slane %v2509, 4
    %v2511 = vadd.f32 %v2509, %v2510
    %v2512 = vrot.slane %v2511, 2
    %v2513 = vadd.f32 %v2511, %v2512
    %v2514 = vrot.slane %v2513, 1
    %v2515 = vadd.f32 %v2513, %v2514
    %v2516 = vsel %vm1742, %v2294, 0.0
    %v2517 = vrot.slane %v2516, 4
    %v2518 = vadd.f32 %v2516, %v2517
    %v2519 = vrot.slane %v2518, 2
    %v2520 = vadd.f32 %v2518, %v2519
    %v2521 = vrot.slane %v2520, 1
    %v2522 = vadd.f32 %v2520, %v2521
    %v2523 = vsel %vm1742, %v2296, 0.0
    %v2524 = vrot.slane %v2523, 4
    %v2525 = vadd.f32 %v2523, %v2524
    %v2526 = vrot.slane %v2525, 2
    %v2527 = vadd.f32 %v2525, %v2526
    %v2528 = vrot.slane %v2527, 1
    %v2529 = vadd.f32 %v2527, %v2528
    %v2530 = vsel %vm1742, %v2298, 0.0
    %v2531 = vrot.slane %v2530, 4
    %v2532 = vadd.f32 %v2530, %v2531
    %v2533 = vrot.slane %v2532, 2
    %v2534 = vadd.f32 %v2532, %v2533
    %v2535 = vrot.slane %v2534, 1
    %v2536 = vadd.f32 %v2534, %v2535
    %v2537 = vsel %vm1742, %v2300, 0.0
    %v2538 = vrot.slane %v2537, 4
    %v2539 = vadd.f32 %v2537, %v2538
    %v2540 = vrot.slane %v2539, 2
    %v2541 = vadd.f32 %v2539, %v2540
    %v2542 = vrot.slane %v2541, 1
    %v2543 = vadd.f32 %v2541, %v2542
    %v2544 = vsel %vm1742, %v2302, 0.0
    %v2545 = vrot.slane %v2544, 4
    %v2546 = vadd.f32 %v2544, %v2545
    %v2547 = vrot.slane %v2546, 2
    %v2548 = vadd.f32 %v2546, %v2547
    %v2549 = vrot.slane %v2548, 1
    %v2550 = vadd.f32 %v2548, %v2549
    %v2551 = vsel %vm1742, %v2304, 0.0
    %v2552 = vrot.slane %v2551, 4
    %v2553 = vadd.f32 %v2551, %v2552
    %v2554 = vrot.slane %v2553, 2
    %v2555 = vadd.f32 %v2553, %v2554
    %v2556 = vrot.slane %v2555, 1
    %v2557 = vadd.f32 %v2555, %v2556
    %v2558 = vsel %vm1742, %v2306, 0.0
    %v2559 = vrot.slane %v2558, 4
    %v2560 = vadd.f32 %v2558, %v2559
    %v2561 = vrot.slane %v2560, 2
    %v2562 = vadd.f32 %v2560, %v2561
    %v2563 = vrot.slane %v2562, 1
    %v2564 = vadd.f32 %v2562, %v2563
    %v2565 = vsel %vm1742, %v2308, 0.0
    %v2566 = vrot.slane %v2565, 4
    %v2567 = vadd.f32 %v2565, %v2566
    %v2568 = vrot.slane %v2567, 2
    %v2569 = vadd.f32 %v2567, %v2568
    %v2570 = vrot.slane %v2569, 1
    %v2571 = vadd.f32 %v2569, %v2570
    %v2572 = vsel %vm1742, %v2310, 0.0
    %v2573 = vrot.slane %v2572, 4
    %v2574 = vadd.f32 %v2572, %v2573
    %v2575 = vrot.slane %v2574, 2
    %v2576 = vadd.f32 %v2574, %v2575
    %v2577 = vrot.slane %v2576, 1
    %v2578 = vadd.f32 %v2576, %v2577
    %v2579 = vsel %vm1742, %v2312, 0.0
    %v2580 = vrot.slane %v2579, 4
    %v2581 = vadd.f32 %v2579, %v2580
    %v2582 = vrot.slane %v2581, 2
    %v2583 = vadd.f32 %v2581, %v2582
    %v2584 = vrot.slane %v2583, 1
    %v2585 = vadd.f32 %v2583, %v2584
    %v2586 = vsel %vm1742, %v2314, 0.0
    %v2587 = vrot.slane %v2586, 4
    %v2588 = vadd.f32 %v2586, %v2587
    %v2589 = vrot.slane %v2588, 2
    %v2590 = vadd.f32 %v2588, %v2589
    %v2591 = vrot.slane %v2590, 1
    %v2592 = vadd.f32 %v2590, %v2591
    %v2593 = vsel %vm1742, %v2316, 0.0
    %v2594 = vrot.slane %v2593, 4
    %v2595 = vadd.f32 %v2593, %v2594
    %v2596 = vrot.slane %v2595, 2
    %v2597 = vadd.f32 %v2595, %v2596
    %v2598 = vrot.slane %v2597, 1
    %v2599 = vadd.f32 %v2597, %v2598
    %v2600 = vsel %vm1742, %v2318, 0.0
    %v2601 = vrot.slane %v2600, 4
    %v2602 = vadd.f32 %v2600, %v2601
    %v2603 = vrot.slane %v2602, 2
    %v2604 = vadd.f32 %v2602, %v2603
    %v2605 = vrot.slane %v2604, 1
    %v2606 = vadd.f32 %v2604, %v2605
    %v2607 = vsel %vm1742, %v2320, 0.0
    %v2608 = vrot.slane %v2607, 4
    %v2609 = vadd.f32 %v2607, %v2608
    %v2610 = vrot.slane %v2609, 2
    %v2611 = vadd.f32 %v2609, %v2610
    %v2612 = vrot.slane %v2611, 1
    %v2613 = vadd.f32 %v2611, %v2612
    %v2614 = vsel %vm1742, %v2322, 0.0
    %v2615 = vrot.slane %v2614, 4
    %v2616 = vadd.f32 %v2614, %v2615
    %v2617 = vrot.slane %v2616, 2
    %v2618 = vadd.f32 %v2616, %v2617
    %v2619 = vrot.slane %v2618, 1
    %v2620 = vadd.f32 %v2618, %v2619
    %v2621 = vsel %vm1742, %v2324, 0.0
    %v2622 = vrot.slane %v2621, 4
    %v2623 = vadd.f32 %v2621, %v2622
    %v2624 = vrot.slane %v2623, 2
    %v2625 = vadd.f32 %v2623, %v2624
    %v2626 = vrot.slane %v2625, 1
    %v2627 = vadd.f32 %v2625, %v2626
    %v2628 = vsel %vm1742, %v2326, 0.0
    %v2629 = vrot.slane %v2628, 4
    %v2630 = vadd.f32 %v2628, %v2629
    %v2631 = vrot.slane %v2630, 2
    %v2632 = vadd.f32 %v2630, %v2631
    %v2633 = vrot.slane %v2632, 1
    %v2634 = vadd.f32 %v2632, %v2633
    %v2635 = vsel %vm1742, %v2328, 0.0
    %v2636 = vrot.slane %v2635, 4
    %v2637 = vadd.f32 %v2635, %v2636
    %v2638 = vrot.slane %v2637, 2
    %v2639 = vadd.f32 %v2637, %v2638
    %v2640 = vrot.slane %v2639, 1
    %v2641 = vadd.f32 %v2639, %v2640
    %v2642 = vsel %vm1742, %v2330, 0.0
    %v2643 = vrot.slane %v2642, 4
    %v2644 = vadd.f32 %v2642, %v2643
    %v2645 = vrot.slane %v2644, 2
    %v2646 = vadd.f32 %v2644, %v2645
    %v2647 = vrot.slane %v2646, 1
    %v2648 = vadd.f32 %v2646, %v2647
    %v2649 = vsel %vm1742, %v2332, 0.0
    %v2650 = vrot.slane %v2649, 4
    %v2651 = vadd.f32 %v2649, %v2650
    %v2652 = vrot.slane %v2651, 2
    %v2653 = vadd.f32 %v2651, %v2652
    %v2654 = vrot.slane %v2653, 1
    %v2655 = vadd.f32 %v2653, %v2654
    %v2656 = vsel %vm1742, %v2334, 0.0
    %v2657 = vrot.slane %v2656, 4
    %v2658 = vadd.f32 %v2656, %v2657
    %v2659 = vrot.slane %v2658, 2
    %v2660 = vadd.f32 %v2658, %v2659
    %v2661 = vrot.slane %v2660, 1
    %v2662 = vadd.f32 %v2660, %v2661
    %v2663 = vsel %vm1742, %v2336, 0.0
    %v2664 = vrot.slane %v2663, 4
    %v2665 = vadd.f32 %v2663, %v2664
    %v2666 = vrot.slane %v2665, 2
    %v2667 = vadd.f32 %v2665, %v2666
    %v2668 = vrot.slane %v2667, 1
    %v2669 = vadd.f32 %v2667, %v2668
    %v2670 = vsel %vm1742, %v2338, 0.0
    %v2671 = vrot.slane %v2670, 4
    %v2672 = vadd.f32 %v2670, %v2671
    %v2673 = vrot.slane %v2672, 2
    %v2674 = vadd.f32 %v2672, %v2673
    %v2675 = vrot.slane %v2674, 1
    %v2676 = vadd.f32 %v2674, %v2675
    %v2677 = vsel %vm1742, %v2340, 0.0
    %v2678 = vrot.slane %v2677, 4
    %v2679 = vadd.f32 %v2677, %v2678
    %v2680 = vrot.slane %v2679, 2
    %v2681 = vadd.f32 %v2679, %v2680
    %v2682 = vrot.slane %v2681, 1
    %v2683 = vadd.f32 %v2681, %v2682
    %v2684 = vsel %vm1742, %v2342, 0.0
    %v2685 = vrot.slane %v2684, 4
    %v2686 = vadd.f32 %v2684, %v2685
    %v2687 = vrot.slane %v2686, 2
    %v2688 = vadd.f32 %v2686, %v2687
    %v2689 = vrot.slane %v2688, 1
    %v2690 = vadd.f32 %v2688, %v2689
    %v2691 = vsel %vm1742, %v2344, 0.0
    %v2692 = vrot.slane %v2691, 4
    %v2693 = vadd.f32 %v2691, %v2692
    %v2694 = vrot.slane %v2693, 2
    %v2695 = vadd.f32 %v2693, %v2694
    %v2696 = vrot.slane %v2695, 1
    %v2697 = vadd.f32 %v2695, %v2696
    %v2698 = vsel %vm1742, %v2346, 0.0
    %v2699 = vrot.slane %v2698, 4
    %v2700 = vadd.f32 %v2698, %v2699
    %v2701 = vrot.slane %v2700, 2
    %v2702 = vadd.f32 %v2700, %v2701
    %v2703 = vrot.slane %v2702, 1
    %v2704 = vadd.f32 %v2702, %v2703
    %v2705 = vsel %vm1742, %v2348, 0.0
    %v2706 = vrot.slane %v2705, 4
    %v2707 = vadd.f32 %v2705, %v2706
    %v2708 = vrot.slane %v2707, 2
    %v2709 = vadd.f32 %v2707, %v2708
    %v2710 = vrot.slane %v2709, 1
    %v2711 = vadd.f32 %v2709, %v2710
    %v2712 = vsel %vm1742, %v2350, 0.0
    %v2713 = vrot.slane %v2712, 4
    %v2714 = vadd.f32 %v2712, %v2713
    %v2715 = vrot.slane %v2714, 2
    %v2716 = vadd.f32 %v2714, %v2715
    %v2717 = vrot.slane %v2716, 1
    %v2718 = vadd.f32 %v2716, %v2717
    %v2719 = vsel %vm1742, %v2352, 0.0
    %v2720 = vrot.slane %v2719, 4
    %v2721 = vadd.f32 %v2719, %v2720
    %v2722 = vrot.slane %v2721, 2
    %v2723 = vadd.f32 %v2721, %v2722
    %v2724 = vrot.slane %v2723, 1
    %v2725 = vadd.f32 %v2723, %v2724
    %v2726 = vsel %vm1742, %v2354, 0.0
    %v2727 = vrot.slane %v2726, 4
    %v2728 = vadd.f32 %v2726, %v2727
    %v2729 = vrot.slane %v2728, 2
    %v2730 = vadd.f32 %v2728, %v2729
    %v2731 = vrot.slane %v2730, 1
    %v2732 = vadd.f32 %v2730, %v2731
    %v2733 = vsel %vm1742, %v2356, 0.0
    %v2734 = vrot.slane %v2733, 4
    %v2735 = vadd.f32 %v2733, %v2734
    %v2736 = vrot.slane %v2735, 2
    %v2737 = vadd.f32 %v2735, %v2736
    %v2738 = vrot.slane %v2737, 1
    %v2739 = vadd.f32 %v2737, %v2738
    %v2740 = vsel %vm1742, %v2358, 0.0
    %v2741 = vrot.slane %v2740, 4
    %v2742 = vadd.f32 %v2740, %v2741
    %v2743 = vrot.slane %v2742, 2
    %v2744 = vadd.f32 %v2742, %v2743
    %v2745 = vrot.slane %v2744, 1
    %v2746 = vadd.f32 %v2744, %v2745
    %v2747 = vsel %vm1742, %v2360, 0.0
    %v2748 = vrot.slane %v2747, 4
    %v2749 = vadd.f32 %v2747, %v2748
    %v2750 = vrot.slane %v2749, 2
    %v2751 = vadd.f32 %v2749, %v2750
    %v2752 = vrot.slane %v2751, 1
    %v2753 = vadd.f32 %v2751, %v2752
    %v2754 = vsel %vm1742, %v2362, 0.0
    %v2755 = vrot.slane %v2754, 4
    %v2756 = vadd.f32 %v2754, %v2755
    %v2757 = vrot.slane %v2756, 2
    %v2758 = vadd.f32 %v2756, %v2757
    %v2759 = vrot.slane %v2758, 1
    %v2760 = vadd.f32 %v2758, %v2759
    %v2761 = vsel %vm1742, %v2364, 0.0
    %v2762 = vrot.slane %v2761, 4
    %v2763 = vadd.f32 %v2761, %v2762
    %v2764 = vrot.slane %v2763, 2
    %v2765 = vadd.f32 %v2763, %v2764
    %v2766 = vrot.slane %v2765, 1
    %v2767 = vadd.f32 %v2765, %v2766
    %v2768 = vsel %vm1742, %v2366, 0.0
    %v2769 = vrot.slane %v2768, 4
    %v2770 = vadd.f32 %v2768, %v2769
    %v2771 = vrot.slane %v2770, 2
    %v2772 = vadd.f32 %v2770, %v2771
    %v2773 = vrot.slane %v2772, 1
    %v2774 = vadd.f32 %v2772, %v2773
    %v2775 = vsel %vm1742, %v2368, 0.0
    %v2776 = vrot.slane %v2775, 4
    %v2777 = vadd.f32 %v2775, %v2776
    %v2778 = vrot.slane %v2777, 2
    %v2779 = vadd.f32 %v2777, %v2778
    %v2780 = vrot.slane %v2779, 1
    %v2781 = vadd.f32 %v2779, %v2780
    %v2782 = vsel %vm1742, %v2370, 0.0
    %v2783 = vrot.slane %v2782, 4
    %v2784 = vadd.f32 %v2782, %v2783
    %v2785 = vrot.slane %v2784, 2
    %v2786 = vadd.f32 %v2784, %v2785
    %v2787 = vrot.slane %v2786, 1
    %v2788 = vadd.f32 %v2786, %v2787
    %v2789 = vsel %vm1742, %v2372, 0.0
    %v2790 = vrot.slane %v2789, 4
    %v2791 = vadd.f32 %v2789, %v2790
    %v2792 = vrot.slane %v2791, 2
    %v2793 = vadd.f32 %v2791, %v2792
    %v2794 = vrot.slane %v2793, 1
    %v2795 = vadd.f32 %v2793, %v2794
    %v2796 = vsel %vm1742, %v2374, 0.0
    %v2797 = vrot.slane %v2796, 4
    %v2798 = vadd.f32 %v2796, %v2797
    %v2799 = vrot.slane %v2798, 2
    %v2800 = vadd.f32 %v2798, %v2799
    %v2801 = vrot.slane %v2800, 1
    %v2802 = vadd.f32 %v2800, %v2801
    %v2803 = vsel %vm1742, %v2376, 0.0
    %v2804 = vrot.slane %v2803, 4
    %v2805 = vadd.f32 %v2803, %v2804
    %v2806 = vrot.slane %v2805, 2
    %v2807 = vadd.f32 %v2805, %v2806
    %v2808 = vrot.slane %v2807, 1
    %v2809 = vadd.f32 %v2807, %v2808
    %v2810 = vsel %vm1742, %v2378, 0.0
    %v2811 = vrot.slane %v2810, 4
    %v2812 = vadd.f32 %v2810, %v2811
    %v2813 = vrot.slane %v2812, 2
    %v2814 = vadd.f32 %v2812, %v2813
    %v2815 = vrot.slane %v2814, 1
    %v2816 = vadd.f32 %v2814, %v2815
    %v2817 = vsel %vm1742, %v2380, 0.0
    %v2818 = vrot.slane %v2817, 4
    %v2819 = vadd.f32 %v2817, %v2818
    %v2820 = vrot.slane %v2819, 2
    %v2821 = vadd.f32 %v2819, %v2820
    %v2822 = vrot.slane %v2821, 1
    %v2823 = vadd.f32 %v2821, %v2822
    %v2824 = vsel %vm1742, %v2382, 0.0
    %v2825 = vrot.slane %v2824, 4
    %v2826 = vadd.f32 %v2824, %v2825
    %v2827 = vrot.slane %v2826, 2
    %v2828 = vadd.f32 %v2826, %v2827
    %v2829 = vrot.slane %v2828, 1
    %v2830 = vadd.f32 %v2828, %v2829
    %v2831 = vrcp.pop %v2389
    %v2832 = vrcp.pop %v2396
    %v2833 = vrcp.pop %v2403
    %v2834 = vrcp.pop %v2410
    %v2835 = vrcp.pop %v2417
    %v2836 = vrcp.pop %v2424
    %v2837 = vrcp.pop %v2431
    %v2838 = vrcp.pop %v2438
    %v2839 = vrcp.pop %v2445
    %v2840 = vrcp.pop %v2452
    %v2841 = vrcp.pop %v2459
    %v2842 = vrcp.pop %v2466
    %v2843 = vrcp.pop %v2473
    %v2844 = vrcp.pop %v2480
    %v2845 = vrcp.pop %v2487
    %v2846 = vrcp.pop %v2494
    %v2847 = vrcp.pop %v2501
    %v2848 = vrcp.pop %v2508
    %v2849 = vrcp.pop %v2515
    %v2850 = vrcp.pop %v2522
    %v2851 = vrcp.pop %v2529
    %v2852 = vrcp.pop %v2536
    %v2853 = vrcp.pop %v2543
    %v2854 = vrcp.pop %v2550
    %v2855 = vrcp.pop %v2557
    %v2856 = vrcp.pop %v2564
    %v2857 = vrcp.pop %v2571
    %v2858 = vrcp.pop %v2578
    %v2859 = vrcp.pop %v2585
    %v2860 = vrcp.pop %v2592
    %v2861 = vrcp.pop %v2599
    %v2862 = vrcp.pop %v2606
    %v2863 = vrcp.pop %v2613
    %v2864 = vrcp.pop %v2620
    %v2865 = vrcp.pop %v2627
    %v2866 = vrcp.pop %v2634
    %v2867 = vrcp.pop %v2641
    %v2868 = vrcp.pop %v2648
    %v2869 = vrcp.pop %v2655
    %v2870 = vrcp.pop %v2662
    %v2871 = vrcp.pop %v2669
    %v2872 = vrcp.pop %v2676
    %v2873 = vrcp.pop %v2683
    %v2874 = vrcp.pop %v2690
    %v2875 = vrcp.pop %v2697
    %v2876 = vrcp.pop %v2704
    %v2877 = vrcp.pop %v2711
    %v2878 = vrcp.pop %v2718
    %v2879 = vrcp.pop %v2725
    %v2880 = vrcp.pop %v2732
    %v2881 = vrcp.pop %v2739
    %v2882 = vrcp.pop %v2746
    %v2883 = vrcp.pop %v2753
    %v2884 = vrcp.pop %v2760
    %v2885 = vrcp.pop %v2767
    %v2886 = vrcp.pop %v2774
    %v2887 = vrcp.pop %v2781
    %v2888 = vrcp.pop %v2788
    %v2889 = vrcp.pop %v2795
    %v2890 = vrcp.pop %v2802
    %v2891 = vrcp.pop %v2809
    %v2892 = vrcp.pop %v2816
    %v2893 = vrcp.pop %v2823
    %v2894 = vrcp.pop %v2830
    %v2895 = vmul.f32 %v2256, %v2831
    %v2896 = vmul.f32 %v2258, %v2832
    %v2897 = vmul.f32 %v2260, %v2833
    %v2898 = vmul.f32 %v2262, %v2834
    %v2899 = vmul.f32 %v2264, %v2835
    %v2900 = vmul.f32 %v2266, %v2836
    %v2901 = vmul.f32 %v2268, %v2837
    %v2902 = vmul.f32 %v2270, %v2838
    %v2903 = vmul.f32 %v2272, %v2839
    %v2904 = vmul.f32 %v2274, %v2840
    %v2905 = vmul.f32 %v2276, %v2841
    %v2906 = vmul.f32 %v2278, %v2842
    %v2907 = vmul.f32 %v2280, %v2843
    %v2908 = vmul.f32 %v2282, %v2844
    %v2909 = vmul.f32 %v2284, %v2845
    %v2910 = vmul.f32 %v2286, %v2846
    %v2911 = vmul.f32 %v2288, %v2847
    %v2912 = vmul.f32 %v2290, %v2848
    %v2913 = vmul.f32 %v2292, %v2849
    %v2914 = vmul.f32 %v2294, %v2850
    %v2915 = vmul.f32 %v2296, %v2851
    %v2916 = vmul.f32 %v2298, %v2852
    %v2917 = vmul.f32 %v2300, %v2853
    %v2918 = vmul.f32 %v2302, %v2854
    %v2919 = vmul.f32 %v2304, %v2855
    %v2920 = vmul.f32 %v2306, %v2856
    %v2921 = vmul.f32 %v2308, %v2857
    %v2922 = vmul.f32 %v2310, %v2858
    %v2923 = vmul.f32 %v2312, %v2859
    %v2924 = vmul.f32 %v2314, %v2860
    %v2925 = vmul.f32 %v2316, %v2861
    %v2926 = vmul.f32 %v2318, %v2862
    %v2927 = vmul.f32 %v2320, %v2863
    %v2928 = vmul.f32 %v2322, %v2864
    %v2929 = vmul.f32 %v2324, %v2865
    %v2930 = vmul.f32 %v2326, %v2866
    %v2931 = vmul.f32 %v2328, %v2867
    %v2932 = vmul.f32 %v2330, %v2868
    %v2933 = vmul.f32 %v2332, %v2869
    %v2934 = vmul.f32 %v2334, %v2870
    %v2935 = vmul.f32 %v2336, %v2871
    %v2936 = vmul.f32 %v2338, %v2872
    %v2937 = vmul.f32 %v2340, %v2873
    %v2938 = vmul.f32 %v2342, %v2874
    %v2939 = vmul.f32 %v2344, %v2875
    %v2940 = vmul.f32 %v2346, %v2876
    %v2941 = vmul.f32 %v2348, %v2877
    %v2942 = vmul.f32 %v2350, %v2878
    %v2943 = vmul.f32 %v2352, %v2879
    %v2944 = vmul.f32 %v2354, %v2880
    %v2945 = vmul.f32 %v2356, %v2881
    %v2946 = vmul.f32 %v2358, %v2882
    %v2947 = vmul.f32 %v2360, %v2883
    %v2948 = vmul.f32 %v2362, %v2884
    %v2949 = vmul.f32 %v2364, %v2885
    %v2950 = vmul.f32 %v2366, %v2886
    %v2951 = vmul.f32 %v2368, %v2887
    %v2952 = vmul.f32 %v2370, %v2888
    %v2953 = vmul.f32 %v2372, %v2889
    %v2954 = vmul.f32 %v2374, %v2890
    %v2955 = vmul.f32 %v2376, %v2891
    %v2956 = vmul.f32 %v2378, %v2892
    %v2957 = vmul.f32 %v2380, %v2893
    %v2958 = vmul.f32 %v2382, %v2894
    %v2959 = vpack.c.bf16 %v2896, %v2895
    %v2960 = vpack.c.bf16 %v2898, %v2897
    %v2961 = vpack.c.bf16 %v2900, %v2899
    %v2962 = vpack.c.bf16 %v2902, %v2901
    %v2963 = vpack.c.bf16 %v2904, %v2903
    %v2964 = vpack.c.bf16 %v2906, %v2905
    %v2965 = vpack.c.bf16 %v2908, %v2907
    %v2966 = vpack.c.bf16 %v2910, %v2909
    %v2967 = vpack.c.bf16 %v2912, %v2911
    %v2968 = vpack.c.bf16 %v2914, %v2913
    %v2969 = vpack.c.bf16 %v2916, %v2915
    %v2970 = vpack.c.bf16 %v2918, %v2917
    %v2971 = vpack.c.bf16 %v2920, %v2919
    %v2972 = vpack.c.bf16 %v2922, %v2921
    %v2973 = vpack.c.bf16 %v2924, %v2923
    %v2974 = vpack.c.bf16 %v2926, %v2925
    %v2975 = vpack.c.bf16 %v2928, %v2927
    %v2976 = vpack.c.bf16 %v2930, %v2929
    %v2977 = vpack.c.bf16 %v2932, %v2931
    %v2978 = vpack.c.bf16 %v2934, %v2933
    %v2979 = vpack.c.bf16 %v2936, %v2935
    %v2980 = vpack.c.bf16 %v2938, %v2937
    %v2981 = vpack.c.bf16 %v2940, %v2939
    %v2982 = vpack.c.bf16 %v2942, %v2941
    %v2983 = vpack.c.bf16 %v2944, %v2943
    %v2984 = vpack.c.bf16 %v2946, %v2945
    %v2985 = vpack.c.bf16 %v2948, %v2947
    %v2986 = vpack.c.bf16 %v2950, %v2949
    %v2987 = vpack.c.bf16 %v2952, %v2951
    %v2988 = vpack.c.bf16 %v2954, %v2953
    %v2989 = vpack.c.bf16 %v2956, %v2955
    %v2990 = vpack.c.bf16 %v2958, %v2957
    %v2992 = vsel %vm1742, %v2959, 0
    %v2995 = vsel %vm1742, %v2960, 0
    %v2998 = vsel %vm1742, %v2961, 0
    %v3001 = vsel %vm1742, %v2962, 0
    %v3004 = vsel %vm1742, %v2963, 0
    %v3007 = vsel %vm1742, %v2964, 0
    %v3010 = vsel %vm1742, %v2965, 0
    %v3013 = vsel %vm1742, %v2966, 0
    %v3016 = vsel %vm1742, %v2967, 0
    %v3019 = vsel %vm1742, %v2968, 0
    %v3022 = vsel %vm1742, %v2969, 0
    %v3025 = vsel %vm1742, %v2970, 0
    %v3028 = vsel %vm1742, %v2971, 0
    %v3031 = vsel %vm1742, %v2972, 0
    %v3034 = vsel %vm1742, %v2973, 0
    %v3037 = vsel %vm1742, %v2974, 0
    %v3040 = vsel %vm1742, %v2975, 0
    %v3043 = vsel %vm1742, %v2976, 0
    %v3046 = vsel %vm1742, %v2977, 0
    %v3049 = vsel %vm1742, %v2978, 0
    %v3052 = vsel %vm1742, %v2979, 0
    %v3055 = vsel %vm1742, %v2980, 0
    %v3058 = vsel %vm1742, %v2981, 0
    %v3061 = vsel %vm1742, %v2982, 0
    %v3064 = vsel %vm1742, %v2983, 0
    %v3067 = vsel %vm1742, %v2984, 0
    %v3070 = vsel %vm1742, %v2985, 0
    %v3073 = vsel %vm1742, %v2986, 0
    %v3076 = vsel %vm1742, %v2987, 0
    %v3079 = vsel %vm1742, %v2988, 0
    %v3082 = vsel %vm1742, %v2989, 0
    %v3085 = vsel %vm1742, %v2990, 0
    %vm3087 = vcmask 1041408
    %v3089 = vsel %vm3087, %v296, 0
    %3091 = vmatprep.subr.bf16.mxu0 0
    %3092 = vmatpush1.bf16.msra.mxu0 0
    %3093 = vmatprep.subr.bf16.mxu0 0
    %3094 = vmatpush1.bf16.msra.mxu0 0
    %3095 = vmatprep.subr.bf16.mxu0 0
    %3096 = vmatpush1.bf16.msra.mxu0 0
    %3097 = vmatprep.subr.bf16.mxu0 0
    %3098 = vmatpush1.bf16.msra.mxu0 0
    %3099 = vmatprep.subr.bf16.mxu0 0
    %3100 = vmatpush1.bf16.msra.mxu0 0
    %3101 = vmatprep.subr.bf16.mxu0 0
    %3102 = vmatpush1.bf16.msra.mxu0 0
    %3103 = vmatprep.subr.bf16.mxu0 0
    %3104 = vmatpush1.bf16.msra.mxu0 0
    %3105 = vmatprep.subr.bf16.mxu0 0
    %3106 = vmatpush1.bf16.msra.mxu0 %v3089
    %3107 = vmatprep.subr.bf16.mxu0 0
    %3108 = vmatpush2.bf16.msra.mxu0 0
    %3109 = vmatprep.subr.bf16.mxu0 0
    %3110 = vmatpush2.bf16.msra.mxu0 0
    %3111 = vmatprep.subr.bf16.mxu0 0
    %3112 = vmatpush2.bf16.msra.mxu0 0
    %3113 = vmatprep.subr.bf16.mxu0 0
    %3114 = vmatpush2.bf16.msra.mxu0 0
    %3115 = vmatprep.subr.bf16.mxu0 0
    %3116 = vmatpush2.bf16.msra.mxu0 0
    %3117 = vmatprep.subr.bf16.mxu0 0
    %3118 = vmatpush2.bf16.msra.mxu0 0
    %3119 = vmatprep.subr.bf16.mxu0 0
    %3120 = vmatpush2.bf16.msra.mxu0 0
    %3121 = vmatprep.subr.bf16.mxu0 0
    %3122 = vmatpush2.bf16.msra.mxu0 0
    %3123 = vmatprep.mubr.bf16.mxu0 0
    %3124 = vmatmul.mubr.bf16.gmra.mxu0 %v2992
    %v3125 = vpop.f32.mrf.mxu0
    %v3126 = vadd.f32 0.0, %v3125
    %v3127 = vpop.f32.mrf.mxu0
    %v3128 = vpop.f32.mrf.mxu0
    %v3129 = vadd.f32 0.0, %v3128
    %v3130 = vpop.f32.mrf.mxu0
    %3131 = vmatprep.mubr.bf16.mxu0 0
    %3132 = vmatmul.mubr.bf16.gmra.mxu0 %v2995
    %v3133 = vpop.f32.mrf.mxu0
    %v3134 = vadd.f32 0.0, %v3133
    %v3135 = vpop.f32.mrf.mxu0
    %v3136 = vpop.f32.mrf.mxu0
    %v3137 = vadd.f32 0.0, %v3136
    %v3138 = vpop.f32.mrf.mxu0
    %3139 = vmatprep.mubr.bf16.mxu0 0
    %3140 = vmatmul.mubr.bf16.gmra.mxu0 %v2998
    %v3141 = vpop.f32.mrf.mxu0
    %v3142 = vadd.f32 0.0, %v3141
    %v3143 = vpop.f32.mrf.mxu0
    %v3144 = vpop.f32.mrf.mxu0
    %v3145 = vadd.f32 0.0, %v3144
    %v3146 = vpop.f32.mrf.mxu0
    %3147 = vmatprep.mubr.bf16.mxu0 0
    %3148 = vmatmul.mubr.bf16.gmra.mxu0 %v3001
    %v3149 = vpop.f32.mrf.mxu0
    %v3150 = vadd.f32 0.0, %v3149
    %v3151 = vpop.f32.mrf.mxu0
    %v3152 = vpop.f32.mrf.mxu0
    %v3153 = vadd.f32 0.0, %v3152
    %v3154 = vpop.f32.mrf.mxu0
    %3155 = vmatprep.mubr.bf16.mxu0 0
    %3156 = vmatmul.mubr.bf16.gmra.mxu0 %v3004
    %v3157 = vpop.f32.mrf.mxu0
    %v3158 = vadd.f32 0.0, %v3157
    %v3159 = vpop.f32.mrf.mxu0
    %v3160 = vpop.f32.mrf.mxu0
    %v3161 = vadd.f32 0.0, %v3160
    %v3162 = vpop.f32.mrf.mxu0
    %3163 = vmatprep.mubr.bf16.mxu0 0
    %3164 = vmatmul.mubr.bf16.gmra.mxu0 %v3007
    %v3165 = vpop.f32.mrf.mxu0
    %v3166 = vadd.f32 0.0, %v3165
    %v3167 = vpop.f32.mrf.mxu0
    %v3168 = vpop.f32.mrf.mxu0
    %v3169 = vadd.f32 0.0, %v3168
    %v3170 = vpop.f32.mrf.mxu0
    %3171 = vmatprep.mubr.bf16.mxu0 0
    %3172 = vmatmul.mubr.bf16.gmra.mxu0 %v3010
    %v3173 = vpop.f32.mrf.mxu0
    %v3174 = vadd.f32 0.0, %v3173
    %v3175 = vpop.f32.mrf.mxu0
    %v3176 = vpop.f32.mrf.mxu0
    %v3177 = vadd.f32 0.0, %v3176
    %v3178 = vpop.f32.mrf.mxu0
    %3179 = vmatprep.mubr.bf16.mxu0 0
    %3180 = vmatmul.mubr.bf16.gmra.mxu0 %v3013
    %v3181 = vpop.f32.mrf.mxu0
    %v3182 = vadd.f32 0.0, %v3181
    %v3183 = vpop.f32.mrf.mxu0
    %v3184 = vpop.f32.mrf.mxu0
    %v3185 = vadd.f32 0.0, %v3184
    %v3186 = vpop.f32.mrf.mxu0
    %3187 = vmatprep.mubr.bf16.mxu0 0
    %3188 = vmatmul.mubr.bf16.gmra.mxu0 %v3016
    %v3189 = vpop.f32.mrf.mxu0
    %v3190 = vadd.f32 0.0, %v3189
    %v3191 = vpop.f32.mrf.mxu0
    %v3192 = vpop.f32.mrf.mxu0
    %v3193 = vadd.f32 0.0, %v3192
    %v3194 = vpop.f32.mrf.mxu0
    %3195 = vmatprep.mubr.bf16.mxu0 0
    %3196 = vmatmul.mubr.bf16.gmra.mxu0 %v3019
    %v3197 = vpop.f32.mrf.mxu0
    %v3198 = vadd.f32 0.0, %v3197
    %v3199 = vpop.f32.mrf.mxu0
    %v3200 = vpop.f32.mrf.mxu0
    %v3201 = vadd.f32 0.0, %v3200
    %v3202 = vpop.f32.mrf.mxu0
    %3203 = vmatprep.mubr.bf16.mxu0 0
    %3204 = vmatmul.mubr.bf16.gmra.mxu0 %v3022
    %v3205 = vpop.f32.mrf.mxu0
    %v3206 = vadd.f32 0.0, %v3205
    %v3207 = vpop.f32.mrf.mxu0
    %v3208 = vpop.f32.mrf.mxu0
    %v3209 = vadd.f32 0.0, %v3208
    %v3210 = vpop.f32.mrf.mxu0
    %3211 = vmatprep.mubr.bf16.mxu0 0
    %3212 = vmatmul.mubr.bf16.gmra.mxu0 %v3025
    %v3213 = vpop.f32.mrf.mxu0
    %v3214 = vadd.f32 0.0, %v3213
    %v3215 = vpop.f32.mrf.mxu0
    %v3216 = vpop.f32.mrf.mxu0
    %v3217 = vadd.f32 0.0, %v3216
    %v3218 = vpop.f32.mrf.mxu0
    %3219 = vmatprep.mubr.bf16.mxu0 0
    %3220 = vmatmul.mubr.bf16.gmra.mxu0 %v3028
    %v3221 = vpop.f32.mrf.mxu0
    %v3222 = vadd.f32 0.0, %v3221
    %v3223 = vpop.f32.mrf.mxu0
    %v3224 = vpop.f32.mrf.mxu0
    %v3225 = vadd.f32 0.0, %v3224
    %v3226 = vpop.f32.mrf.mxu0
    %3227 = vmatprep.mubr.bf16.mxu0 0
    %3228 = vmatmul.mubr.bf16.gmra.mxu0 %v3031
    %v3229 = vpop.f32.mrf.mxu0
    %v3230 = vadd.f32 0.0, %v3229
    %v3231 = vpop.f32.mrf.mxu0
    %v3232 = vpop.f32.mrf.mxu0
    %v3233 = vadd.f32 0.0, %v3232
    %v3234 = vpop.f32.mrf.mxu0
    %3235 = vmatprep.mubr.bf16.mxu0 0
    %3236 = vmatmul.mubr.bf16.gmra.mxu0 %v3034
    %v3237 = vpop.f32.mrf.mxu0
    %v3238 = vadd.f32 0.0, %v3237
    %v3239 = vpop.f32.mrf.mxu0
    %v3240 = vpop.f32.mrf.mxu0
    %v3241 = vadd.f32 0.0, %v3240
    %v3242 = vpop.f32.mrf.mxu0
    %3243 = vmatprep.mubr.bf16.mxu0 0
    %3244 = vmatmul.mubr.bf16.gmra.mxu0 %v3037
    %v3245 = vpop.f32.mrf.mxu0
    %v3246 = vadd.f32 0.0, %v3245
    %v3247 = vpop.f32.mrf.mxu0
    %v3248 = vpop.f32.mrf.mxu0
    %v3249 = vadd.f32 0.0, %v3248
    %v3250 = vpop.f32.mrf.mxu0
    %3251 = vmatprep.mubr.bf16.mxu0 0
    %3252 = vmatmul.mubr.bf16.gmra.mxu0 %v3040
    %v3253 = vpop.f32.mrf.mxu0
    %v3254 = vadd.f32 0.0, %v3253
    %v3255 = vpop.f32.mrf.mxu0
    %v3256 = vpop.f32.mrf.mxu0
    %v3257 = vadd.f32 0.0, %v3256
    %v3258 = vpop.f32.mrf.mxu0
    %3259 = vmatprep.mubr.bf16.mxu0 0
    %3260 = vmatmul.mubr.bf16.gmra.mxu0 %v3043
    %v3261 = vpop.f32.mrf.mxu0
    %v3262 = vadd.f32 0.0, %v3261
    %v3263 = vpop.f32.mrf.mxu0
    %v3264 = vpop.f32.mrf.mxu0
    %v3265 = vadd.f32 0.0, %v3264
    %v3266 = vpop.f32.mrf.mxu0
    %3267 = vmatprep.mubr.bf16.mxu0 0
    %3268 = vmatmul.mubr.bf16.gmra.mxu0 %v3046
    %v3269 = vpop.f32.mrf.mxu0
    %v3270 = vadd.f32 0.0, %v3269
    %v3271 = vpop.f32.mrf.mxu0
    %v3272 = vpop.f32.mrf.mxu0
    %v3273 = vadd.f32 0.0, %v3272
    %v3274 = vpop.f32.mrf.mxu0
    %3275 = vmatprep.mubr.bf16.mxu0 0
    %3276 = vmatmul.mubr.bf16.gmra.mxu0 %v3049
    %v3277 = vpop.f32.mrf.mxu0
    %v3278 = vadd.f32 0.0, %v3277
    %v3279 = vpop.f32.mrf.mxu0
    %v3280 = vpop.f32.mrf.mxu0
    %v3281 = vadd.f32 0.0, %v3280
    %v3282 = vpop.f32.mrf.mxu0
    %3283 = vmatprep.mubr.bf16.mxu0 0
    %3284 = vmatmul.mubr.bf16.gmra.mxu0 %v3052
    %v3285 = vpop.f32.mrf.mxu0
    %v3286 = vadd.f32 0.0, %v3285
    %v3287 = vpop.f32.mrf.mxu0
    %v3288 = vpop.f32.mrf.mxu0
    %v3289 = vadd.f32 0.0, %v3288
    %v3290 = vpop.f32.mrf.mxu0
    %3291 = vmatprep.mubr.bf16.mxu0 0
    %3292 = vmatmul.mubr.bf16.gmra.mxu0 %v3055
    %v3293 = vpop.f32.mrf.mxu0
    %v3294 = vadd.f32 0.0, %v3293
    %v3295 = vpop.f32.mrf.mxu0
    %v3296 = vpop.f32.mrf.mxu0
    %v3297 = vadd.f32 0.0, %v3296
    %v3298 = vpop.f32.mrf.mxu0
    %3299 = vmatprep.mubr.bf16.mxu0 0
    %3300 = vmatmul.mubr.bf16.gmra.mxu0 %v3058
    %v3301 = vpop.f32.mrf.mxu0
    %v3302 = vadd.f32 0.0, %v3301
    %v3303 = vpop.f32.mrf.mxu0
    %v3304 = vpop.f32.mrf.mxu0
    %v3305 = vadd.f32 0.0, %v3304
    %v3306 = vpop.f32.mrf.mxu0
    %3307 = vmatprep.mubr.bf16.mxu0 0
    %3308 = vmatmul.mubr.bf16.gmra.mxu0 %v3061
    %v3309 = vpop.f32.mrf.mxu0
    %v3310 = vadd.f32 0.0, %v3309
    %v3311 = vpop.f32.mrf.mxu0
    %v3312 = vpop.f32.mrf.mxu0
    %v3313 = vadd.f32 0.0, %v3312
    %v3314 = vpop.f32.mrf.mxu0
    %3315 = vmatprep.mubr.bf16.mxu0 0
    %3316 = vmatmul.mubr.bf16.gmra.mxu0 %v3064
    %v3317 = vpop.f32.mrf.mxu0
    %v3318 = vadd.f32 0.0, %v3317
    %v3319 = vpop.f32.mrf.mxu0
    %v3320 = vpop.f32.mrf.mxu0
    %v3321 = vadd.f32 0.0, %v3320
    %v3322 = vpop.f32.mrf.mxu0
    %3323 = vmatprep.mubr.bf16.mxu0 0
    %3324 = vmatmul.mubr.bf16.gmra.mxu0 %v3067
    %v3325 = vpop.f32.mrf.mxu0
    %v3326 = vadd.f32 0.0, %v3325
    %v3327 = vpop.f32.mrf.mxu0
    %v3328 = vpop.f32.mrf.mxu0
    %v3329 = vadd.f32 0.0, %v3328
    %v3330 = vpop.f32.mrf.mxu0
    %3331 = vmatprep.mubr.bf16.mxu0 0
    %3332 = vmatmul.mubr.bf16.gmra.mxu0 %v3070
    %v3333 = vpop.f32.mrf.mxu0
    %v3334 = vadd.f32 0.0, %v3333
    %v3335 = vpop.f32.mrf.mxu0
    %v3336 = vpop.f32.mrf.mxu0
    %v3337 = vadd.f32 0.0, %v3336
    %v3338 = vpop.f32.mrf.mxu0
    %3339 = vmatprep.mubr.bf16.mxu0 0
    %3340 = vmatmul.mubr.bf16.gmra.mxu0 %v3073
    %v3341 = vpop.f32.mrf.mxu0
    %v3342 = vadd.f32 0.0, %v3341
    %v3343 = vpop.f32.mrf.mxu0
    %v3344 = vpop.f32.mrf.mxu0
    %v3345 = vadd.f32 0.0, %v3344
    %v3346 = vpop.f32.mrf.mxu0
    %3347 = vmatprep.mubr.bf16.mxu0 0
    %3348 = vmatmul.mubr.bf16.gmra.mxu0 %v3076
    %v3349 = vpop.f32.mrf.mxu0
    %v3350 = vadd.f32 0.0, %v3349
    %v3351 = vpop.f32.mrf.mxu0
    %v3352 = vpop.f32.mrf.mxu0
    %v3353 = vadd.f32 0.0, %v3352
    %v3354 = vpop.f32.mrf.mxu0
    %3355 = vmatprep.mubr.bf16.mxu0 0
    %3356 = vmatmul.mubr.bf16.gmra.mxu0 %v3079
    %v3357 = vpop.f32.mrf.mxu0
    %v3358 = vadd.f32 0.0, %v3357
    %v3359 = vpop.f32.mrf.mxu0
    %v3360 = vpop.f32.mrf.mxu0
    %v3361 = vadd.f32 0.0, %v3360
    %v3362 = vpop.f32.mrf.mxu0
    %3363 = vmatprep.mubr.bf16.mxu0 0
    %3364 = vmatmul.mubr.bf16.gmra.mxu0 %v3082
    %v3365 = vpop.f32.mrf.mxu0
    %v3366 = vadd.f32 0.0, %v3365
    %v3367 = vpop.f32.mrf.mxu0
    %v3368 = vpop.f32.mrf.mxu0
    %v3369 = vadd.f32 0.0, %v3368
    %v3370 = vpop.f32.mrf.mxu0
    %3371 = vmatprep.mubr.bf16.mxu0 0
    %3372 = vmatmul.mubr.bf16.gmra.mxu0 %v3085
    %v3373 = vpop.f32.mrf.mxu0
    %v3374 = vadd.f32 0.0, %v3373
    %v3375 = vpop.f32.mrf.mxu0
    %v3376 = vpop.f32.mrf.mxu0
    %v3377 = vadd.f32 0.0, %v3376
    %v3378 = vpop.f32.mrf.mxu0
    %3379 = vdwg.mxu0
    %3380 = vrot.lane.b32.xlu0 %v371, 64
    %v3381 = vpop.permute.xlu0 %3380
    %3382 = vrot.lane.b32.xlu0 %v374, 64
    %v3383 = vpop.permute.xlu0 %3382
    %3384 = vrot.lane.b32.xlu0 %v379, 64
    %v3385 = vpop.permute.xlu0 %3384
    %3386 = vrot.lane.b32.xlu0 %v382, 64
    %v3387 = vpop.permute.xlu0 %3386
    %3388 = vrot.lane.b32.xlu0 %v387, 64
    %v3389 = vpop.permute.xlu0 %3388
    %3390 = vrot.lane.b32.xlu0 %v390, 64
    %v3391 = vpop.permute.xlu0 %3390
    %3392 = vrot.lane.b32.xlu0 %v395, 64
    %v3393 = vpop.permute.xlu0 %3392
    %3394 = vrot.lane.b32.xlu0 %v398, 64
    %v3395 = vpop.permute.xlu0 %3394
    %v3404 = vmul.f32 %v3126, %v3381
    %v3405 = vmul.f32 %v3129, %v3381
    %v3406 = vmul.f32 %v3134, %v3381
    %v3407 = vmul.f32 %v3137, %v3381
    %v3408 = vmul.f32 %v3142, %v3381
    %v3409 = vmul.f32 %v3145, %v3381
    %v3410 = vmul.f32 %v3150, %v3381
    %v3411 = vmul.f32 %v3153, %v3381
    %v3412 = vmul.f32 %v3158, %v3383
    %v3413 = vmul.f32 %v3161, %v3383
    %v3414 = vmul.f32 %v3166, %v3383
    %v3415 = vmul.f32 %v3169, %v3383
    %v3416 = vmul.f32 %v3174, %v3383
    %v3417 = vmul.f32 %v3177, %v3383
    %v3418 = vmul.f32 %v3182, %v3383
    %v3419 = vmul.f32 %v3185, %v3383
    %v3420 = vmul.f32 %v3190, %v3385
    %v3421 = vmul.f32 %v3193, %v3385
    %v3422 = vmul.f32 %v3198, %v3385
    %v3423 = vmul.f32 %v3201, %v3385
    %v3424 = vmul.f32 %v3206, %v3385
    %v3425 = vmul.f32 %v3209, %v3385
    %v3426 = vmul.f32 %v3214, %v3385
    %v3427 = vmul.f32 %v3217, %v3385
    %v3428 = vmul.f32 %v3222, %v3387
    %v3429 = vmul.f32 %v3225, %v3387
    %v3430 = vmul.f32 %v3230, %v3387
    %v3431 = vmul.f32 %v3233, %v3387
    %v3432 = vmul.f32 %v3238, %v3387
    %v3433 = vmul.f32 %v3241, %v3387
    %v3434 = vmul.f32 %v3246, %v3387
    %v3435 = vmul.f32 %v3249, %v3387
    %v3436 = vmul.f32 %v3254, %v3389
    %v3437 = vmul.f32 %v3257, %v3389
    %v3438 = vmul.f32 %v3262, %v3389
    %v3439 = vmul.f32 %v3265, %v3389
    %v3440 = vmul.f32 %v3270, %v3389
    %v3441 = vmul.f32 %v3273, %v3389
    %v3442 = vmul.f32 %v3278, %v3389
    %v3443 = vmul.f32 %v3281, %v3389
    %v3444 = vmul.f32 %v3286, %v3391
    %v3445 = vmul.f32 %v3289, %v3391
    %v3446 = vmul.f32 %v3294, %v3391
    %v3447 = vmul.f32 %v3297, %v3391
    %v3448 = vmul.f32 %v3302, %v3391
    %v3449 = vmul.f32 %v3305, %v3391
    %v3450 = vmul.f32 %v3310, %v3391
    %v3451 = vmul.f32 %v3313, %v3391
    %v3452 = vmul.f32 %v3318, %v3393
    %v3453 = vmul.f32 %v3321, %v3393
    %v3454 = vmul.f32 %v3326, %v3393
    %v3455 = vmul.f32 %v3329, %v3393
    %v3456 = vmul.f32 %v3334, %v3393
    %v3457 = vmul.f32 %v3337, %v3393
    %v3458 = vmul.f32 %v3342, %v3393
    %v3459 = vmul.f32 %v3345, %v3393
    %v3460 = vmul.f32 %v3350, %v3395
    %v3461 = vmul.f32 %v3353, %v3395
    %v3462 = vmul.f32 %v3358, %v3395
    %v3463 = vmul.f32 %v3361, %v3395
    %v3464 = vmul.f32 %v3366, %v3395
    %v3465 = vmul.f32 %v3369, %v3395
    %v3466 = vmul.f32 %v3374, %v3395
    %v3467 = vmul.f32 %v3377, %v3395
    %v3468 = vsel %vm158, %v3404, 0.0
    %v3469 = vrot.slane %v3468, 4
    %v3470 = vadd.f32 %v3468, %v3469
    %v3471 = vrot.slane %v3470, 2
    %v3472 = vadd.f32 %v3470, %v3471
    %v3473 = vrot.slane %v3472, 1
    %v3474 = vadd.f32 %v3472, %v3473
    %v3475 = vsel %vm158, %v3405, 0.0
    %v3476 = vrot.slane %v3475, 4
    %v3477 = vadd.f32 %v3475, %v3476
    %v3478 = vrot.slane %v3477, 2
    %v3479 = vadd.f32 %v3477, %v3478
    %v3480 = vrot.slane %v3479, 1
    %v3481 = vadd.f32 %v3479, %v3480
    %v3482 = vsel %vm158, %v3406, 0.0
    %v3483 = vrot.slane %v3482, 4
    %v3484 = vadd.f32 %v3482, %v3483
    %v3485 = vrot.slane %v3484, 2
    %v3486 = vadd.f32 %v3484, %v3485
    %v3487 = vrot.slane %v3486, 1
    %v3488 = vadd.f32 %v3486, %v3487
    %v3489 = vsel %vm158, %v3407, 0.0
    %v3490 = vrot.slane %v3489, 4
    %v3491 = vadd.f32 %v3489, %v3490
    %v3492 = vrot.slane %v3491, 2
    %v3493 = vadd.f32 %v3491, %v3492
    %v3494 = vrot.slane %v3493, 1
    %v3495 = vadd.f32 %v3493, %v3494
    %v3496 = vsel %vm158, %v3408, 0.0
    %v3497 = vrot.slane %v3496, 4
    %v3498 = vadd.f32 %v3496, %v3497
    %v3499 = vrot.slane %v3498, 2
    %v3500 = vadd.f32 %v3498, %v3499
    %v3501 = vrot.slane %v3500, 1
    %v3502 = vadd.f32 %v3500, %v3501
    %v3503 = vsel %vm158, %v3409, 0.0
    %v3504 = vrot.slane %v3503, 4
    %v3505 = vadd.f32 %v3503, %v3504
    %v3506 = vrot.slane %v3505, 2
    %v3507 = vadd.f32 %v3505, %v3506
    %v3508 = vrot.slane %v3507, 1
    %v3509 = vadd.f32 %v3507, %v3508
    %v3510 = vsel %vm158, %v3410, 0.0
    %v3511 = vrot.slane %v3510, 4
    %v3512 = vadd.f32 %v3510, %v3511
    %v3513 = vrot.slane %v3512, 2
    %v3514 = vadd.f32 %v3512, %v3513
    %v3515 = vrot.slane %v3514, 1
    %v3516 = vadd.f32 %v3514, %v3515
    %v3517 = vsel %vm158, %v3411, 0.0
    %v3518 = vrot.slane %v3517, 4
    %v3519 = vadd.f32 %v3517, %v3518
    %v3520 = vrot.slane %v3519, 2
    %v3521 = vadd.f32 %v3519, %v3520
    %v3522 = vrot.slane %v3521, 1
    %v3523 = vadd.f32 %v3521, %v3522
    %v3524 = vsel %vm158, %v3412, 0.0
    %v3525 = vrot.slane %v3524, 4
    %v3526 = vadd.f32 %v3524, %v3525
    %v3527 = vrot.slane %v3526, 2
    %v3528 = vadd.f32 %v3526, %v3527
    %v3529 = vrot.slane %v3528, 1
    %v3530 = vadd.f32 %v3528, %v3529
    %v3531 = vsel %vm158, %v3413, 0.0
    %v3532 = vrot.slane %v3531, 4
    %v3533 = vadd.f32 %v3531, %v3532
    %v3534 = vrot.slane %v3533, 2
    %v3535 = vadd.f32 %v3533, %v3534
    %v3536 = vrot.slane %v3535, 1
    %v3537 = vadd.f32 %v3535, %v3536
    %v3538 = vsel %vm158, %v3414, 0.0
    %v3539 = vrot.slane %v3538, 4
    %v3540 = vadd.f32 %v3538, %v3539
    %v3541 = vrot.slane %v3540, 2
    %v3542 = vadd.f32 %v3540, %v3541
    %v3543 = vrot.slane %v3542, 1
    %v3544 = vadd.f32 %v3542, %v3543
    %v3545 = vsel %vm158, %v3415, 0.0
    %v3546 = vrot.slane %v3545, 4
    %v3547 = vadd.f32 %v3545, %v3546
    %v3548 = vrot.slane %v3547, 2
    %v3549 = vadd.f32 %v3547, %v3548
    %v3550 = vrot.slane %v3549, 1
    %v3551 = vadd.f32 %v3549, %v3550
    %v3552 = vsel %vm158, %v3416, 0.0
    %v3553 = vrot.slane %v3552, 4
    %v3554 = vadd.f32 %v3552, %v3553
    %v3555 = vrot.slane %v3554, 2
    %v3556 = vadd.f32 %v3554, %v3555
    %v3557 = vrot.slane %v3556, 1
    %v3558 = vadd.f32 %v3556, %v3557
    %v3559 = vsel %vm158, %v3417, 0.0
    %v3560 = vrot.slane %v3559, 4
    %v3561 = vadd.f32 %v3559, %v3560
    %v3562 = vrot.slane %v3561, 2
    %v3563 = vadd.f32 %v3561, %v3562
    %v3564 = vrot.slane %v3563, 1
    %v3565 = vadd.f32 %v3563, %v3564
    %v3566 = vsel %vm158, %v3418, 0.0
    %v3567 = vrot.slane %v3566, 4
    %v3568 = vadd.f32 %v3566, %v3567
    %v3569 = vrot.slane %v3568, 2
    %v3570 = vadd.f32 %v3568, %v3569
    %v3571 = vrot.slane %v3570, 1
    %v3572 = vadd.f32 %v3570, %v3571
    %v3573 = vsel %vm158, %v3419, 0.0
    %v3574 = vrot.slane %v3573, 4
    %v3575 = vadd.f32 %v3573, %v3574
    %v3576 = vrot.slane %v3575, 2
    %v3577 = vadd.f32 %v3575, %v3576
    %v3578 = vrot.slane %v3577, 1
    %v3579 = vadd.f32 %v3577, %v3578
    %v3580 = vsel %vm158, %v3420, 0.0
    %v3581 = vrot.slane %v3580, 4
    %v3582 = vadd.f32 %v3580, %v3581
    %v3583 = vrot.slane %v3582, 2
    %v3584 = vadd.f32 %v3582, %v3583
    %v3585 = vrot.slane %v3584, 1
    %v3586 = vadd.f32 %v3584, %v3585
    %v3587 = vsel %vm158, %v3421, 0.0
    %v3588 = vrot.slane %v3587, 4
    %v3589 = vadd.f32 %v3587, %v3588
    %v3590 = vrot.slane %v3589, 2
    %v3591 = vadd.f32 %v3589, %v3590
    %v3592 = vrot.slane %v3591, 1
    %v3593 = vadd.f32 %v3591, %v3592
    %v3594 = vsel %vm158, %v3422, 0.0
    %v3595 = vrot.slane %v3594, 4
    %v3596 = vadd.f32 %v3594, %v3595
    %v3597 = vrot.slane %v3596, 2
    %v3598 = vadd.f32 %v3596, %v3597
    %v3599 = vrot.slane %v3598, 1
    %v3600 = vadd.f32 %v3598, %v3599
    %v3601 = vsel %vm158, %v3423, 0.0
    %v3602 = vrot.slane %v3601, 4
    %v3603 = vadd.f32 %v3601, %v3602
    %v3604 = vrot.slane %v3603, 2
    %v3605 = vadd.f32 %v3603, %v3604
    %v3606 = vrot.slane %v3605, 1
    %v3607 = vadd.f32 %v3605, %v3606
    %v3608 = vsel %vm158, %v3424, 0.0
    %v3609 = vrot.slane %v3608, 4
    %v3610 = vadd.f32 %v3608, %v3609
    %v3611 = vrot.slane %v3610, 2
    %v3612 = vadd.f32 %v3610, %v3611
    %v3613 = vrot.slane %v3612, 1
    %v3614 = vadd.f32 %v3612, %v3613
    %v3615 = vsel %vm158, %v3425, 0.0
    %v3616 = vrot.slane %v3615, 4
    %v3617 = vadd.f32 %v3615, %v3616
    %v3618 = vrot.slane %v3617, 2
    %v3619 = vadd.f32 %v3617, %v3618
    %v3620 = vrot.slane %v3619, 1
    %v3621 = vadd.f32 %v3619, %v3620
    %v3622 = vsel %vm158, %v3426, 0.0
    %v3623 = vrot.slane %v3622, 4
    %v3624 = vadd.f32 %v3622, %v3623
    %v3625 = vrot.slane %v3624, 2
    %v3626 = vadd.f32 %v3624, %v3625
    %v3627 = vrot.slane %v3626, 1
    %v3628 = vadd.f32 %v3626, %v3627
    %v3629 = vsel %vm158, %v3427, 0.0
    %v3630 = vrot.slane %v3629, 4
    %v3631 = vadd.f32 %v3629, %v3630
    %v3632 = vrot.slane %v3631, 2
    %v3633 = vadd.f32 %v3631, %v3632
    %v3634 = vrot.slane %v3633, 1
    %v3635 = vadd.f32 %v3633, %v3634
    %v3636 = vsel %vm158, %v3428, 0.0
    %v3637 = vrot.slane %v3636, 4
    %v3638 = vadd.f32 %v3636, %v3637
    %v3639 = vrot.slane %v3638, 2
    %v3640 = vadd.f32 %v3638, %v3639
    %v3641 = vrot.slane %v3640, 1
    %v3642 = vadd.f32 %v3640, %v3641
    %v3643 = vsel %vm158, %v3429, 0.0
    %v3644 = vrot.slane %v3643, 4
    %v3645 = vadd.f32 %v3643, %v3644
    %v3646 = vrot.slane %v3645, 2
    %v3647 = vadd.f32 %v3645, %v3646
    %v3648 = vrot.slane %v3647, 1
    %v3649 = vadd.f32 %v3647, %v3648
    %v3650 = vsel %vm158, %v3430, 0.0
    %v3651 = vrot.slane %v3650, 4
    %v3652 = vadd.f32 %v3650, %v3651
    %v3653 = vrot.slane %v3652, 2
    %v3654 = vadd.f32 %v3652, %v3653
    %v3655 = vrot.slane %v3654, 1
    %v3656 = vadd.f32 %v3654, %v3655
    %v3657 = vsel %vm158, %v3431, 0.0
    %v3658 = vrot.slane %v3657, 4
    %v3659 = vadd.f32 %v3657, %v3658
    %v3660 = vrot.slane %v3659, 2
    %v3661 = vadd.f32 %v3659, %v3660
    %v3662 = vrot.slane %v3661, 1
    %v3663 = vadd.f32 %v3661, %v3662
    %v3664 = vsel %vm158, %v3432, 0.0
    %v3665 = vrot.slane %v3664, 4
    %v3666 = vadd.f32 %v3664, %v3665
    %v3667 = vrot.slane %v3666, 2
    %v3668 = vadd.f32 %v3666, %v3667
    %v3669 = vrot.slane %v3668, 1
    %v3670 = vadd.f32 %v3668, %v3669
    %v3671 = vsel %vm158, %v3433, 0.0
    %v3672 = vrot.slane %v3671, 4
    %v3673 = vadd.f32 %v3671, %v3672
    %v3674 = vrot.slane %v3673, 2
    %v3675 = vadd.f32 %v3673, %v3674
    %v3676 = vrot.slane %v3675, 1
    %v3677 = vadd.f32 %v3675, %v3676
    %v3678 = vsel %vm158, %v3434, 0.0
    %v3679 = vrot.slane %v3678, 4
    %v3680 = vadd.f32 %v3678, %v3679
    %v3681 = vrot.slane %v3680, 2
    %v3682 = vadd.f32 %v3680, %v3681
    %v3683 = vrot.slane %v3682, 1
    %v3684 = vadd.f32 %v3682, %v3683
    %v3685 = vsel %vm158, %v3435, 0.0
    %v3686 = vrot.slane %v3685, 4
    %v3687 = vadd.f32 %v3685, %v3686
    %v3688 = vrot.slane %v3687, 2
    %v3689 = vadd.f32 %v3687, %v3688
    %v3690 = vrot.slane %v3689, 1
    %v3691 = vadd.f32 %v3689, %v3690
    %v3692 = vsel %vm158, %v3436, 0.0
    %v3693 = vrot.slane %v3692, 4
    %v3694 = vadd.f32 %v3692, %v3693
    %v3695 = vrot.slane %v3694, 2
    %v3696 = vadd.f32 %v3694, %v3695
    %v3697 = vrot.slane %v3696, 1
    %v3698 = vadd.f32 %v3696, %v3697
    %v3699 = vsel %vm158, %v3437, 0.0
    %v3700 = vrot.slane %v3699, 4
    %v3701 = vadd.f32 %v3699, %v3700
    %v3702 = vrot.slane %v3701, 2
    %v3703 = vadd.f32 %v3701, %v3702
    %v3704 = vrot.slane %v3703, 1
    %v3705 = vadd.f32 %v3703, %v3704
    %v3706 = vsel %vm158, %v3438, 0.0
    %v3707 = vrot.slane %v3706, 4
    %v3708 = vadd.f32 %v3706, %v3707
    %v3709 = vrot.slane %v3708, 2
    %v3710 = vadd.f32 %v3708, %v3709
    %v3711 = vrot.slane %v3710, 1
    %v3712 = vadd.f32 %v3710, %v3711
    %v3713 = vsel %vm158, %v3439, 0.0
    %v3714 = vrot.slane %v3713, 4
    %v3715 = vadd.f32 %v3713, %v3714
    %v3716 = vrot.slane %v3715, 2
    %v3717 = vadd.f32 %v3715, %v3716
    %v3718 = vrot.slane %v3717, 1
    %v3719 = vadd.f32 %v3717, %v3718
    %v3720 = vsel %vm158, %v3440, 0.0
    %v3721 = vrot.slane %v3720, 4
    %v3722 = vadd.f32 %v3720, %v3721
    %v3723 = vrot.slane %v3722, 2
    %v3724 = vadd.f32 %v3722, %v3723
    %v3725 = vrot.slane %v3724, 1
    %v3726 = vadd.f32 %v3724, %v3725
    %v3727 = vsel %vm158, %v3441, 0.0
    %v3728 = vrot.slane %v3727, 4
    %v3729 = vadd.f32 %v3727, %v3728
    %v3730 = vrot.slane %v3729, 2
    %v3731 = vadd.f32 %v3729, %v3730
    %v3732 = vrot.slane %v3731, 1
    %v3733 = vadd.f32 %v3731, %v3732
    %v3734 = vsel %vm158, %v3442, 0.0
    %v3735 = vrot.slane %v3734, 4
    %v3736 = vadd.f32 %v3734, %v3735
    %v3737 = vrot.slane %v3736, 2
    %v3738 = vadd.f32 %v3736, %v3737
    %v3739 = vrot.slane %v3738, 1
    %v3740 = vadd.f32 %v3738, %v3739
    %v3741 = vsel %vm158, %v3443, 0.0
    %v3742 = vrot.slane %v3741, 4
    %v3743 = vadd.f32 %v3741, %v3742
    %v3744 = vrot.slane %v3743, 2
    %v3745 = vadd.f32 %v3743, %v3744
    %v3746 = vrot.slane %v3745, 1
    %v3747 = vadd.f32 %v3745, %v3746
    %v3748 = vsel %vm158, %v3444, 0.0
    %v3749 = vrot.slane %v3748, 4
    %v3750 = vadd.f32 %v3748, %v3749
    %v3751 = vrot.slane %v3750, 2
    %v3752 = vadd.f32 %v3750, %v3751
    %v3753 = vrot.slane %v3752, 1
    %v3754 = vadd.f32 %v3752, %v3753
    %v3755 = vsel %vm158, %v3445, 0.0
    %v3756 = vrot.slane %v3755, 4
    %v3757 = vadd.f32 %v3755, %v3756
    %v3758 = vrot.slane %v3757, 2
    %v3759 = vadd.f32 %v3757, %v3758
    %v3760 = vrot.slane %v3759, 1
    %v3761 = vadd.f32 %v3759, %v3760
    %v3762 = vsel %vm158, %v3446, 0.0
    %v3763 = vrot.slane %v3762, 4
    %v3764 = vadd.f32 %v3762, %v3763
    %v3765 = vrot.slane %v3764, 2
    %v3766 = vadd.f32 %v3764, %v3765
    %v3767 = vrot.slane %v3766, 1
    %v3768 = vadd.f32 %v3766, %v3767
    %v3769 = vsel %vm158, %v3447, 0.0
    %v3770 = vrot.slane %v3769, 4
    %v3771 = vadd.f32 %v3769, %v3770
    %v3772 = vrot.slane %v3771, 2
    %v3773 = vadd.f32 %v3771, %v3772
    %v3774 = vrot.slane %v3773, 1
    %v3775 = vadd.f32 %v3773, %v3774
    %v3776 = vsel %vm158, %v3448, 0.0
    %v3777 = vrot.slane %v3776, 4
    %v3778 = vadd.f32 %v3776, %v3777
    %v3779 = vrot.slane %v3778, 2
    %v3780 = vadd.f32 %v3778, %v3779
    %v3781 = vrot.slane %v3780, 1
    %v3782 = vadd.f32 %v3780, %v3781
    %v3783 = vsel %vm158, %v3449, 0.0
    %v3784 = vrot.slane %v3783, 4
    %v3785 = vadd.f32 %v3783, %v3784
    %v3786 = vrot.slane %v3785, 2
    %v3787 = vadd.f32 %v3785, %v3786
    %v3788 = vrot.slane %v3787, 1
    %v3789 = vadd.f32 %v3787, %v3788
    %v3790 = vsel %vm158, %v3450, 0.0
    %v3791 = vrot.slane %v3790, 4
    %v3792 = vadd.f32 %v3790, %v3791
    %v3793 = vrot.slane %v3792, 2
    %v3794 = vadd.f32 %v3792, %v3793
    %v3795 = vrot.slane %v3794, 1
    %v3796 = vadd.f32 %v3794, %v3795
    %v3797 = vsel %vm158, %v3451, 0.0
    %v3798 = vrot.slane %v3797, 4
    %v3799 = vadd.f32 %v3797, %v3798
    %v3800 = vrot.slane %v3799, 2
    %v3801 = vadd.f32 %v3799, %v3800
    %v3802 = vrot.slane %v3801, 1
    %v3803 = vadd.f32 %v3801, %v3802
    %v3804 = vsel %vm158, %v3452, 0.0
    %v3805 = vrot.slane %v3804, 4
    %v3806 = vadd.f32 %v3804, %v3805
    %v3807 = vrot.slane %v3806, 2
    %v3808 = vadd.f32 %v3806, %v3807
    %v3809 = vrot.slane %v3808, 1
    %v3810 = vadd.f32 %v3808, %v3809
    %v3811 = vsel %vm158, %v3453, 0.0
    %v3812 = vrot.slane %v3811, 4
    %v3813 = vadd.f32 %v3811, %v3812
    %v3814 = vrot.slane %v3813, 2
    %v3815 = vadd.f32 %v3813, %v3814
    %v3816 = vrot.slane %v3815, 1
    %v3817 = vadd.f32 %v3815, %v3816
    %v3818 = vsel %vm158, %v3454, 0.0
    %v3819 = vrot.slane %v3818, 4
    %v3820 = vadd.f32 %v3818, %v3819
    %v3821 = vrot.slane %v3820, 2
    %v3822 = vadd.f32 %v3820, %v3821
    %v3823 = vrot.slane %v3822, 1
    %v3824 = vadd.f32 %v3822, %v3823
    %v3825 = vsel %vm158, %v3455, 0.0
    %v3826 = vrot.slane %v3825, 4
    %v3827 = vadd.f32 %v3825, %v3826
    %v3828 = vrot.slane %v3827, 2
    %v3829 = vadd.f32 %v3827, %v3828
    %v3830 = vrot.slane %v3829, 1
    %v3831 = vadd.f32 %v3829, %v3830
    %v3832 = vsel %vm158, %v3456, 0.0
    %v3833 = vrot.slane %v3832, 4
    %v3834 = vadd.f32 %v3832, %v3833
    %v3835 = vrot.slane %v3834, 2
    %v3836 = vadd.f32 %v3834, %v3835
    %v3837 = vrot.slane %v3836, 1
    %v3838 = vadd.f32 %v3836, %v3837
    %v3839 = vsel %vm158, %v3457, 0.0
    %v3840 = vrot.slane %v3839, 4
    %v3841 = vadd.f32 %v3839, %v3840
    %v3842 = vrot.slane %v3841, 2
    %v3843 = vadd.f32 %v3841, %v3842
    %v3844 = vrot.slane %v3843, 1
    %v3845 = vadd.f32 %v3843, %v3844
    %v3846 = vsel %vm158, %v3458, 0.0
    %v3847 = vrot.slane %v3846, 4
    %v3848 = vadd.f32 %v3846, %v3847
    %v3849 = vrot.slane %v3848, 2
    %v3850 = vadd.f32 %v3848, %v3849
    %v3851 = vrot.slane %v3850, 1
    %v3852 = vadd.f32 %v3850, %v3851
    %v3853 = vsel %vm158, %v3459, 0.0
    %v3854 = vrot.slane %v3853, 4
    %v3855 = vadd.f32 %v3853, %v3854
    %v3856 = vrot.slane %v3855, 2
    %v3857 = vadd.f32 %v3855, %v3856
    %v3858 = vrot.slane %v3857, 1
    %v3859 = vadd.f32 %v3857, %v3858
    %v3860 = vsel %vm158, %v3460, 0.0
    %v3861 = vrot.slane %v3860, 4
    %v3862 = vadd.f32 %v3860, %v3861
    %v3863 = vrot.slane %v3862, 2
    %v3864 = vadd.f32 %v3862, %v3863
    %v3865 = vrot.slane %v3864, 1
    %v3866 = vadd.f32 %v3864, %v3865
    %v3867 = vsel %vm158, %v3461, 0.0
    %v3868 = vrot.slane %v3867, 4
    %v3869 = vadd.f32 %v3867, %v3868
    %v3870 = vrot.slane %v3869, 2
    %v3871 = vadd.f32 %v3869, %v3870
    %v3872 = vrot.slane %v3871, 1
    %v3873 = vadd.f32 %v3871, %v3872
    %v3874 = vsel %vm158, %v3462, 0.0
    %v3875 = vrot.slane %v3874, 4
    %v3876 = vadd.f32 %v3874, %v3875
    %v3877 = vrot.slane %v3876, 2
    %v3878 = vadd.f32 %v3876, %v3877
    %v3879 = vrot.slane %v3878, 1
    %v3880 = vadd.f32 %v3878, %v3879
    %v3881 = vsel %vm158, %v3463, 0.0
    %v3882 = vrot.slane %v3881, 4
    %v3883 = vadd.f32 %v3881, %v3882
    %v3884 = vrot.slane %v3883, 2
    %v3885 = vadd.f32 %v3883, %v3884
    %v3886 = vrot.slane %v3885, 1
    %v3887 = vadd.f32 %v3885, %v3886
    %v3888 = vsel %vm158, %v3464, 0.0
    %v3889 = vrot.slane %v3888, 4
    %v3890 = vadd.f32 %v3888, %v3889
    %v3891 = vrot.slane %v3890, 2
    %v3892 = vadd.f32 %v3890, %v3891
    %v3893 = vrot.slane %v3892, 1
    %v3894 = vadd.f32 %v3892, %v3893
    %v3895 = vsel %vm158, %v3465, 0.0
    %v3896 = vrot.slane %v3895, 4
    %v3897 = vadd.f32 %v3895, %v3896
    %v3898 = vrot.slane %v3897, 2
    %v3899 = vadd.f32 %v3897, %v3898
    %v3900 = vrot.slane %v3899, 1
    %v3901 = vadd.f32 %v3899, %v3900
    %v3902 = vsel %vm158, %v3466, 0.0
    %v3903 = vrot.slane %v3902, 4
    %v3904 = vadd.f32 %v3902, %v3903
    %v3905 = vrot.slane %v3904, 2
    %v3906 = vadd.f32 %v3904, %v3905
    %v3907 = vrot.slane %v3906, 1
    %v3908 = vadd.f32 %v3906, %v3907
    %v3909 = vsel %vm158, %v3467, 0.0
    %v3910 = vrot.slane %v3909, 4
    %v3911 = vadd.f32 %v3909, %v3910
    %v3912 = vrot.slane %v3911, 2
    %v3913 = vadd.f32 %v3911, %v3912
    %v3914 = vrot.slane %v3913, 1
    %v3915 = vadd.f32 %v3913, %v3914
    %v3916 = vpack.c.bf16 %v3474, %v3474
    %v3917 = vpack.c.bf16 %v3481, %v3481
    %v3918 = vpack.c.bf16 %v3488, %v3488
    %v3919 = vpack.c.bf16 %v3495, %v3495
    %v3920 = vpack.c.bf16 %v3502, %v3502
    %v3921 = vpack.c.bf16 %v3509, %v3509
    %v3922 = vpack.c.bf16 %v3516, %v3516
    %v3923 = vpack.c.bf16 %v3523, %v3523
    %v3924 = vpack.c.bf16 %v3530, %v3530
    %v3925 = vpack.c.bf16 %v3537, %v3537
    %v3926 = vpack.c.bf16 %v3544, %v3544
    %v3927 = vpack.c.bf16 %v3551, %v3551
    %v3928 = vpack.c.bf16 %v3558, %v3558
    %v3929 = vpack.c.bf16 %v3565, %v3565
    %v3930 = vpack.c.bf16 %v3572, %v3572
    %v3931 = vpack.c.bf16 %v3579, %v3579
    %v3932 = vpack.c.bf16 %v3586, %v3586
    %v3933 = vpack.c.bf16 %v3593, %v3593
    %v3934 = vpack.c.bf16 %v3600, %v3600
    %v3935 = vpack.c.bf16 %v3607, %v3607
    %v3936 = vpack.c.bf16 %v3614, %v3614
    %v3937 = vpack.c.bf16 %v3621, %v3621
    %v3938 = vpack.c.bf16 %v3628, %v3628
    %v3939 = vpack.c.bf16 %v3635, %v3635
    %v3940 = vpack.c.bf16 %v3642, %v3642
    %v3941 = vpack.c.bf16 %v3649, %v3649
    %v3942 = vpack.c.bf16 %v3656, %v3656
    %v3943 = vpack.c.bf16 %v3663, %v3663
    %v3944 = vpack.c.bf16 %v3670, %v3670
    %v3945 = vpack.c.bf16 %v3677, %v3677
    %v3946 = vpack.c.bf16 %v3684, %v3684
    %v3947 = vpack.c.bf16 %v3691, %v3691
    %v3948 = vpack.c.bf16 %v3698, %v3698
    %v3949 = vpack.c.bf16 %v3705, %v3705
    %v3950 = vpack.c.bf16 %v3712, %v3712
    %v3951 = vpack.c.bf16 %v3719, %v3719
    %v3952 = vpack.c.bf16 %v3726, %v3726
    %v3953 = vpack.c.bf16 %v3733, %v3733
    %v3954 = vpack.c.bf16 %v3740, %v3740
    %v3955 = vpack.c.bf16 %v3747, %v3747
    %v3956 = vpack.c.bf16 %v3754, %v3754
    %v3957 = vpack.c.bf16 %v3761, %v3761
    %v3958 = vpack.c.bf16 %v3768, %v3768
    %v3959 = vpack.c.bf16 %v3775, %v3775
    %v3960 = vpack.c.bf16 %v3782, %v3782
    %v3961 = vpack.c.bf16 %v3789, %v3789
    %v3962 = vpack.c.bf16 %v3796, %v3796
    %v3963 = vpack.c.bf16 %v3803, %v3803
    %v3964 = vpack.c.bf16 %v3810, %v3810
    %v3965 = vpack.c.bf16 %v3817, %v3817
    %v3966 = vpack.c.bf16 %v3824, %v3824
    %v3967 = vpack.c.bf16 %v3831, %v3831
    %v3968 = vpack.c.bf16 %v3838, %v3838
    %v3969 = vpack.c.bf16 %v3845, %v3845
    %v3970 = vpack.c.bf16 %v3852, %v3852
    %v3971 = vpack.c.bf16 %v3859, %v3859
    %v3972 = vpack.c.bf16 %v3866, %v3866
    %v3973 = vpack.c.bf16 %v3873, %v3873
    %v3974 = vpack.c.bf16 %v3880, %v3880
    %v3975 = vpack.c.bf16 %v3887, %v3887
    %v3976 = vpack.c.bf16 %v3894, %v3894
    %v3977 = vpack.c.bf16 %v3901, %v3901
    %v3978 = vpack.c.bf16 %v3908, %v3908
    %v3979 = vpack.c.bf16 %v3915, %v3915
    %v3980 = vld [vmem:[%s6] sm:$0xf]
    %v3981 = vld [vmem:[%s6 + $0x4] sm:$0xf]
    %v3982 = vld [vmem:[%s6 + $0x8] sm:$0xf]
    %v3983 = vld [vmem:[%s6 + $0xc] sm:$0xf]
    %v3984 = vld [vmem:[%s7] sm:$0x1]
    %v3986 = vlaneseq
    %v3987 = vshrl.u32 %v3986, 7
    %v3988 = vsub.s32 0, %v3987
    %v3989 = vrot.slane %v3984, %v3988
    %v4055 = vunpack.c.l.b16 %v3916
    %v4056 = vunpack.c.l.b16 %v3917
    %v4057 = vunpack.c.l.b16 %v3918
    %v4058 = vunpack.c.l.b16 %v3919
    %v4059 = vunpack.c.l.b16 %v3920
    %v4060 = vunpack.c.l.b16 %v3921
    %v4061 = vunpack.c.l.b16 %v3922
    %v4062 = vunpack.c.l.b16 %v3923
    %v4063 = vunpack.c.l.b16 %v3924
    %v4064 = vunpack.c.l.b16 %v3925
    %v4065 = vunpack.c.l.b16 %v3926
    %v4066 = vunpack.c.l.b16 %v3927
    %v4067 = vunpack.c.l.b16 %v3928
    %v4068 = vunpack.c.l.b16 %v3929
    %v4069 = vunpack.c.l.b16 %v3930
    %v4070 = vunpack.c.l.b16 %v3931
    %v4071 = vunpack.c.l.b16 %v3932
    %v4072 = vunpack.c.l.b16 %v3933
    %v4073 = vunpack.c.l.b16 %v3934
    %v4074 = vunpack.c.l.b16 %v3935
    %v4075 = vunpack.c.l.b16 %v3936
    %v4076 = vunpack.c.l.b16 %v3937
    %v4077 = vunpack.c.l.b16 %v3938
    %v4078 = vunpack.c.l.b16 %v3939
    %v4079 = vunpack.c.l.b16 %v3940
    %v4080 = vunpack.c.l.b16 %v3941
    %v4081 = vunpack.c.l.b16 %v3942
    %v4082 = vunpack.c.l.b16 %v3943
    %v4083 = vunpack.c.l.b16 %v3944
    %v4084 = vunpack.c.l.b16 %v3945
    %v4085 = vunpack.c.l.b16 %v3946
    %v4086 = vunpack.c.l.b16 %v3947
    %v4087 = vunpack.c.l.b16 %v3948
    %v4088 = vunpack.c.l.b16 %v3949
    %v4089 = vunpack.c.l.b16 %v3950
    %v4090 = vunpack.c.l.b16 %v3951
    %v4091 = vunpack.c.l.b16 %v3952
    %v4092 = vunpack.c.l.b16 %v3953
    %v4093 = vunpack.c.l.b16 %v3954
    %v4094 = vunpack.c.l.b16 %v3955
    %v4095 = vunpack.c.l.b16 %v3956
    %v4096 = vunpack.c.l.b16 %v3957
    %v4097 = vunpack.c.l.b16 %v3958
    %v4098 = vunpack.c.l.b16 %v3959
    %v4099 = vunpack.c.l.b16 %v3960
    %v4100 = vunpack.c.l.b16 %v3961
    %v4101 = vunpack.c.l.b16 %v3962
    %v4102 = vunpack.c.l.b16 %v3963
    %v4103 = vunpack.c.l.b16 %v3964
    %v4104 = vunpack.c.l.b16 %v3965
    %v4105 = vunpack.c.l.b16 %v3966
    %v4106 = vunpack.c.l.b16 %v3967
    %v4107 = vunpack.c.l.b16 %v3968
    %v4108 = vunpack.c.l.b16 %v3969
    %v4109 = vunpack.c.l.b16 %v3970
    %v4110 = vunpack.c.l.b16 %v3971
    %v4111 = vunpack.c.l.b16 %v3972
    %v4112 = vunpack.c.l.b16 %v3973
    %v4113 = vunpack.c.l.b16 %v3974
    %v4114 = vunpack.c.l.b16 %v3975
    %v4115 = vunpack.c.l.b16 %v3976
    %v4116 = vunpack.c.l.b16 %v3977
    %v4117 = vunpack.c.l.b16 %v3978
    %v4118 = vunpack.c.l.b16 %v3979
    %vm4119 = vcmask 1041409
    %v4120 = vsel %vm4119, %v4056, %v4055
    %vm4121 = vcmask 1042434
    %v4122 = vsel %vm4121, %v4057, %v4120
    %vm4123 = vcmask 1043459
    %v4124 = vsel %vm4123, %v4058, %v4122
    %vm4125 = vcmask 1044484
    %v4126 = vsel %vm4125, %v4059, %v4124
    %vm4127 = vcmask 1045509
    %v4128 = vsel %vm4127, %v4060, %v4126
    %vm4129 = vcmask 1046534
    %v4130 = vsel %vm4129, %v4061, %v4128
    %vm4131 = vcmask 1047559
    %v4132 = vsel %vm4131, %v4062, %v4130
    %v4133 = vsel %vm4119, %v4064, %v4063
    %v4134 = vsel %vm4121, %v4065, %v4133
    %v4135 = vsel %vm4123, %v4066, %v4134
    %v4136 = vsel %vm4125, %v4067, %v4135
    %v4137 = vsel %vm4127, %v4068, %v4136
    %v4138 = vsel %vm4129, %v4069, %v4137
    %v4139 = vsel %vm4131, %v4070, %v4138
    %v4140 = vsel %vm4119, %v4072, %v4071
    %v4141 = vsel %vm4121, %v4073, %v4140
    %v4142 = vsel %vm4123, %v4074, %v4141
    %v4143 = vsel %vm4125, %v4075, %v4142
    %v4144 = vsel %vm4127, %v4076, %v4143
    %v4145 = vsel %vm4129, %v4077, %v4144
    %v4146 = vsel %vm4131, %v4078, %v4145
    %v4147 = vsel %vm4119, %v4080, %v4079
    %v4148 = vsel %vm4121, %v4081, %v4147
    %v4149 = vsel %vm4123, %v4082, %v4148
    %v4150 = vsel %vm4125, %v4083, %v4149
    %v4151 = vsel %vm4127, %v4084, %v4150
    %v4152 = vsel %vm4129, %v4085, %v4151
    %v4153 = vsel %vm4131, %v4086, %v4152
    %v4154 = vsel %vm4119, %v4088, %v4087
    %v4155 = vsel %vm4121, %v4089, %v4154
    %v4156 = vsel %vm4123, %v4090, %v4155
    %v4157 = vsel %vm4125, %v4091, %v4156
    %v4158 = vsel %vm4127, %v4092, %v4157
    %v4159 = vsel %vm4129, %v4093, %v4158
    %v4160 = vsel %vm4131, %v4094, %v4159
    %v4161 = vsel %vm4119, %v4096, %v4095
    %v4162 = vsel %vm4121, %v4097, %v4161
    %v4163 = vsel %vm4123, %v4098, %v4162
    %v4164 = vsel %vm4125, %v4099, %v4163
    %v4165 = vsel %vm4127, %v4100, %v4164
    %v4166 = vsel %vm4129, %v4101, %v4165
    %v4167 = vsel %vm4131, %v4102, %v4166
    %v4168 = vsel %vm4119, %v4104, %v4103
    %v4169 = vsel %vm4121, %v4105, %v4168
    %v4170 = vsel %vm4123, %v4106, %v4169
    %v4171 = vsel %vm4125, %v4107, %v4170
    %v4172 = vsel %vm4127, %v4108, %v4171
    %v4173 = vsel %vm4129, %v4109, %v4172
    %v4174 = vsel %vm4131, %v4110, %v4173
    %v4175 = vsel %vm4119, %v4112, %v4111
    %v4176 = vsel %vm4121, %v4113, %v4175
    %v4177 = vsel %vm4123, %v4114, %v4176
    %v4178 = vsel %vm4125, %v4115, %v4177
    %v4179 = vsel %vm4127, %v4116, %v4178
    %v4180 = vsel %vm4129, %v4117, %v4179
    %v4181 = vsel %vm4131, %v4118, %v4180
    %v4182 = vpack.c.b16 %v4139, %v4132
    %v4183 = vpack.c.b16 %v4153, %v4146
    %v4184 = vpack.c.b16 %v4167, %v4160
    %v4185 = vpack.c.b16 %v4181, %v4174
    %v4190 = vunpack.c.l.b16 %v3980
    %v4191 = vunpack.c.l.b16 %v3981
    %v4192 = vunpack.c.l.b16 %v3982
    %v4193 = vunpack.c.l.b16 %v3983
    %v4194 = vpack.c.b16 %v4191, %v4190
    %v4195 = vpack.c.b16 %v4193, %v4192
    %v4199 = vsel %vm158, %v4182, 0
    %v4202 = vsel %vm158, %v4183, 0
    %v4205 = vsel %vm158, %v4184, 0
    %v4208 = vsel %vm158, %v4185, 0
    %4210 = vmatprep.subr.bf16.mxu0 0
    %4211 = vmatpush1.bf16.msra.mxu0 0
    %4212 = vmatprep.subr.bf16.mxu0 0
    %4213 = vmatpush1.bf16.msra.mxu0 0
    %4214 = vmatprep.subr.bf16.mxu0 0
    %4215 = vmatpush1.bf16.msra.mxu0 0
    %4216 = vmatprep.subr.bf16.mxu0 0
    %4217 = vmatpush1.bf16.msra.mxu0 0
    %4218 = vmatprep.subr.bf16.mxu0 0
    %4219 = vmatpush1.bf16.msra.mxu0 0
    %4220 = vmatprep.subr.bf16.mxu0 0
    %4221 = vmatpush1.bf16.msra.mxu0 0
    %4222 = vmatprep.subr.bf16.mxu0 0
    %4223 = vmatpush1.bf16.msra.mxu0 %v4195
    %4224 = vmatprep.subr.bf16.mxu0 0
    %4225 = vmatpush1.bf16.msra.mxu0 %v4194
    %4226 = vmatprep.subr.bf16.mxu0 0
    %4227 = vmatpush2.bf16.msra.mxu0 0
    %4228 = vmatprep.subr.bf16.mxu0 0
    %4229 = vmatpush2.bf16.msra.mxu0 0
    %4230 = vmatprep.subr.bf16.mxu0 0
    %4231 = vmatpush2.bf16.msra.mxu0 0
    %4232 = vmatprep.subr.bf16.mxu0 0
    %4233 = vmatpush2.bf16.msra.mxu0 0
    %4234 = vmatprep.subr.bf16.mxu0 0
    %4235 = vmatpush2.bf16.msra.mxu0 0
    %4236 = vmatprep.subr.bf16.mxu0 0
    %4237 = vmatpush2.bf16.msra.mxu0 0
    %4238 = vmatprep.subr.bf16.mxu0 0
    %4239 = vmatpush2.bf16.msra.mxu0 0
    %4240 = vmatprep.subr.bf16.mxu0 0
    %4241 = vmatpush2.bf16.msra.mxu0 0
    %4242 = vmatprep.mubr.bf16.mxu0 0
    %4243 = vmatmul.mubr.bf16.gmra.mxu0 %v4199
    %v4244 = vpop.f32.mrf.mxu0
    %v4245 = vadd.f32 %v3989, %v4244
    %v4246 = vpop.f32.mrf.mxu0
    %v4247 = vpop.f32.mrf.mxu0
    %v4248 = vadd.f32 %v3989, %v4247
    %v4249 = vpop.f32.mrf.mxu0
    %4250 = vmatprep.mubr.bf16.mxu0 0
    %4251 = vmatmul.mubr.bf16.gmra.mxu0 %v4202
    %v4252 = vpop.f32.mrf.mxu0
    %v4253 = vadd.f32 %v3989, %v4252
    %v4254 = vpop.f32.mrf.mxu0
    %v4255 = vpop.f32.mrf.mxu0
    %v4256 = vadd.f32 %v3989, %v4255
    %v4257 = vpop.f32.mrf.mxu0
    %4258 = vmatprep.mubr.bf16.mxu0 0
    %4259 = vmatmul.mubr.bf16.gmra.mxu0 %v4205
    %v4260 = vpop.f32.mrf.mxu0
    %v4261 = vadd.f32 %v3989, %v4260
    %v4262 = vpop.f32.mrf.mxu0
    %v4263 = vpop.f32.mrf.mxu0
    %v4264 = vadd.f32 %v3989, %v4263
    %v4265 = vpop.f32.mrf.mxu0
    %4266 = vmatprep.mubr.bf16.mxu0 0
    %4267 = vmatmul.mubr.bf16.gmra.mxu0 %v4208
    %v4268 = vpop.f32.mrf.mxu0
    %v4269 = vadd.f32 %v3989, %v4268
    %v4270 = vpop.f32.mrf.mxu0
    %v4271 = vpop.f32.mrf.mxu0
    %v4272 = vadd.f32 %v3989, %v4271
    %v4273 = vpop.f32.mrf.mxu0
    %4274 = vdwg.mxu0
    %v4275 = vadd.f32 %v284, %v4245
    %v4276 = vadd.f32 %v285, %v4248
    %v4277 = vadd.f32 %v286, %v4253
    %v4278 = vadd.f32 %v287, %v4256
    %v4279 = vadd.f32 %v288, %v4261
    %v4280 = vadd.f32 %v289, %v4264
    %v4281 = vadd.f32 %v290, %v4269
    %v4282 = vadd.f32 %v291, %v4272
    %v4283 = vld [vmem:[%s8] sm:$0x1]
    %v4284 = vld [vmem:[%s9] sm:$0x1]
    %v4285 = vsel %vm158, %v4275, 0.0
    %4286 = vadd.xlane.f32.xlu0 %v4285
    %v4287 = vpop.xlane.xlu0 %4286
    %v4288 = vsel %vm158, %v4276, 0.0
    %4289 = vadd.xlane.f32.xlu0 %v4288
    %v4290 = vpop.xlane.xlu0 %4289
    %v4291 = vsel %vm158, %v4277, 0.0
    %4292 = vadd.xlane.f32.xlu0 %v4291
    %v4293 = vpop.xlane.xlu0 %4292
    %v4294 = vsel %vm158, %v4278, 0.0
    %4295 = vadd.xlane.f32.xlu0 %v4294
    %v4296 = vpop.xlane.xlu0 %4295
    %v4297 = vsel %vm158, %v4279, 0.0
    %4298 = vadd.xlane.f32.xlu0 %v4297
    %v4299 = vpop.xlane.xlu0 %4298
    %v4300 = vsel %vm158, %v4280, 0.0
    %4301 = vadd.xlane.f32.xlu0 %v4300
    %v4302 = vpop.xlane.xlu0 %4301
    %v4303 = vsel %vm158, %v4281, 0.0
    %4304 = vadd.xlane.f32.xlu0 %v4303
    %v4305 = vpop.xlane.xlu0 %4304
    %v4306 = vsel %vm158, %v4282, 0.0
    %4307 = vadd.xlane.f32.xlu0 %v4306
    %v4308 = vpop.xlane.xlu0 %4307
    %v4309 = vmul.f32 %v4287, %v183
    %v4310 = vmul.f32 %v4290, %v183
    %v4311 = vmul.f32 %v4293, %v183
    %v4312 = vmul.f32 %v4296, %v183
    %v4313 = vmul.f32 %v4299, %v183
    %v4314 = vmul.f32 %v4302, %v183
    %v4315 = vmul.f32 %v4305, %v183
    %v4316 = vmul.f32 %v4308, %v183
    %v4317 = vsub.f32 %v4275, %v4309
    %v4318 = vsub.f32 %v4276, %v4310
    %v4319 = vsub.f32 %v4277, %v4311
    %v4320 = vsub.f32 %v4278, %v4312
    %v4321 = vsub.f32 %v4279, %v4313
    %v4322 = vsub.f32 %v4280, %v4314
    %v4323 = vsub.f32 %v4281, %v4315
    %v4324 = vsub.f32 %v4282, %v4316
    %v4325 = vmul.f32 %v4317, %v4317
    %v4326 = vmul.f32 %v4318, %v4318
    %v4327 = vmul.f32 %v4319, %v4319
    %v4328 = vmul.f32 %v4320, %v4320
    %v4329 = vmul.f32 %v4321, %v4321
    %v4330 = vmul.f32 %v4322, %v4322
    %v4331 = vmul.f32 %v4323, %v4323
    %v4332 = vmul.f32 %v4324, %v4324
    %v4333 = vsel %vm158, %v4325, 0.0
    %4334 = vadd.xlane.f32.xlu0 %v4333
    %v4335 = vpop.xlane.xlu0 %4334
    %v4336 = vsel %vm158, %v4326, 0.0
    %4337 = vadd.xlane.f32.xlu0 %v4336
    %v4338 = vpop.xlane.xlu0 %4337
    %v4339 = vsel %vm158, %v4327, 0.0
    %4340 = vadd.xlane.f32.xlu0 %v4339
    %v4341 = vpop.xlane.xlu0 %4340
    %v4342 = vsel %vm158, %v4328, 0.0
    %4343 = vadd.xlane.f32.xlu0 %v4342
    %v4344 = vpop.xlane.xlu0 %4343
    %v4345 = vsel %vm158, %v4329, 0.0
    %4346 = vadd.xlane.f32.xlu0 %v4345
    %v4347 = vpop.xlane.xlu0 %4346
    %v4348 = vsel %vm158, %v4330, 0.0
    %4349 = vadd.xlane.f32.xlu0 %v4348
    %v4350 = vpop.xlane.xlu0 %4349
    %v4351 = vsel %vm158, %v4331, 0.0
    %4352 = vadd.xlane.f32.xlu0 %v4351
    %v4353 = vpop.xlane.xlu0 %4352
    %v4354 = vsel %vm158, %v4332, 0.0
    %4355 = vadd.xlane.f32.xlu0 %v4354
    %v4356 = vpop.xlane.xlu0 %4355
    %v4357 = vmul.f32 %v4335, %v183
    %v4358 = vmul.f32 %v4338, %v183
    %v4359 = vmul.f32 %v4341, %v183
    %v4360 = vmul.f32 %v4344, %v183
    %v4361 = vmul.f32 %v4347, %v183
    %v4362 = vmul.f32 %v4350, %v183
    %v4363 = vmul.f32 %v4353, %v183
    %v4364 = vmul.f32 %v4356, %v183
    %v4365 = vadd.f32 %v4357, 1e-05
    %v4366 = vadd.f32 %v4358, 1e-05
    %v4367 = vadd.f32 %v4359, 1e-05
    %v4368 = vadd.f32 %v4360, 1e-05
    %v4369 = vadd.f32 %v4361, 1e-05
    %v4370 = vadd.f32 %v4362, 1e-05
    %v4371 = vadd.f32 %v4363, 1e-05
    %v4372 = vadd.f32 %v4364, 1e-05
    %v4373 = vrsqrt.pop %v4365
    %v4374 = vrsqrt.pop %v4366
    %v4375 = vrsqrt.pop %v4367
    %v4376 = vrsqrt.pop %v4368
    %v4377 = vrsqrt.pop %v4369
    %v4378 = vrsqrt.pop %v4370
    %v4379 = vrsqrt.pop %v4371
    %v4380 = vrsqrt.pop %v4372
    %v4381 = vmul.f32 %v4317, %v4373
    %v4382 = vmul.f32 %v4318, %v4374
    %v4383 = vmul.f32 %v4319, %v4375
    %v4384 = vmul.f32 %v4320, %v4376
    %v4385 = vmul.f32 %v4321, %v4377
    %v4386 = vmul.f32 %v4322, %v4378
    %v4387 = vmul.f32 %v4323, %v4379
    %v4388 = vmul.f32 %v4324, %v4380
    %v4390 = vlaneseq
    %v4391 = vshrl.u32 %v4390, 7
    %v4392 = vsub.s32 0, %v4391
    %v4393 = vrot.slane %v4283, %v4392
    %v4395 = vmul.f32 %v4381, %v4393
    %v4396 = vmul.f32 %v4382, %v4393
    %v4397 = vmul.f32 %v4383, %v4393
    %v4398 = vmul.f32 %v4384, %v4393
    %v4399 = vmul.f32 %v4385, %v4393
    %v4400 = vmul.f32 %v4386, %v4393
    %v4401 = vmul.f32 %v4387, %v4393
    %v4402 = vmul.f32 %v4388, %v4393
    %v4404 = vlaneseq
    %v4405 = vshrl.u32 %v4404, 7
    %v4406 = vsub.s32 0, %v4405
    %v4407 = vrot.slane %v4284, %v4406
    %v4409 = vadd.f32 %v4395, %v4407
    %v4410 = vadd.f32 %v4396, %v4407
    %v4411 = vadd.f32 %v4397, %v4407
    %v4412 = vadd.f32 %v4398, %v4407
    %v4413 = vadd.f32 %v4399, %v4407
    %v4414 = vadd.f32 %v4400, %v4407
    %v4415 = vadd.f32 %v4401, %v4407
    %v4416 = vadd.f32 %v4402, %v4407
    %v4417 = vpack.c.bf16 %v4410, %v4409
    %v4418 = vpack.c.bf16 %v4412, %v4411
    %v4419 = vpack.c.bf16 %v4414, %v4413
    %v4420 = vpack.c.bf16 %v4416, %v4415
    %v4421 = vld [vmem:[%s10] sm:$0xf]
    %v4422 = vld [vmem:[%s10 + $0x4] sm:$0xf]
    %v4423 = vld [vmem:[%s10 + $0x8] sm:$0xf]
    %v4424 = vld [vmem:[%s10 + $0xc] sm:$0xf]
    %v4425 = vld [vmem:[%s11] sm:$0x1]
    %v4427 = vlaneseq
    %v4428 = vshrl.u32 %v4427, 7
    %v4429 = vsub.s32 0, %v4428
    %v4430 = vrot.slane %v4425, %v4429
    %v4436 = vunpack.c.l.b16 %v4421
    %v4437 = vunpack.c.l.b16 %v4422
    %v4438 = vunpack.c.l.b16 %v4423
    %v4439 = vunpack.c.l.b16 %v4424
    %v4440 = vpack.c.b16 %v4437, %v4436
    %v4441 = vpack.c.b16 %v4439, %v4438
    %v4445 = vsel %vm158, %v4417, 0
    %v4448 = vsel %vm158, %v4418, 0
    %v4451 = vsel %vm158, %v4419, 0
    %v4454 = vsel %vm158, %v4420, 0
    %4456 = vmatprep.subr.bf16.mxu0 0
    %4457 = vmatpush1.bf16.msra.mxu0 0
    %4458 = vmatprep.subr.bf16.mxu0 0
    %4459 = vmatpush1.bf16.msra.mxu0 0
    %4460 = vmatprep.subr.bf16.mxu0 0
    %4461 = vmatpush1.bf16.msra.mxu0 0
    %4462 = vmatprep.subr.bf16.mxu0 0
    %4463 = vmatpush1.bf16.msra.mxu0 0
    %4464 = vmatprep.subr.bf16.mxu0 0
    %4465 = vmatpush1.bf16.msra.mxu0 0
    %4466 = vmatprep.subr.bf16.mxu0 0
    %4467 = vmatpush1.bf16.msra.mxu0 0
    %4468 = vmatprep.subr.bf16.mxu0 0
    %4469 = vmatpush1.bf16.msra.mxu0 %v4441
    %4470 = vmatprep.subr.bf16.mxu0 0
    %4471 = vmatpush1.bf16.msra.mxu0 %v4440
    %4472 = vmatprep.subr.bf16.mxu0 0
    %4473 = vmatpush2.bf16.msra.mxu0 0
    %4474 = vmatprep.subr.bf16.mxu0 0
    %4475 = vmatpush2.bf16.msra.mxu0 0
    %4476 = vmatprep.subr.bf16.mxu0 0
    %4477 = vmatpush2.bf16.msra.mxu0 0
    %4478 = vmatprep.subr.bf16.mxu0 0
    %4479 = vmatpush2.bf16.msra.mxu0 0
    %4480 = vmatprep.subr.bf16.mxu0 0
    %4481 = vmatpush2.bf16.msra.mxu0 0
    %4482 = vmatprep.subr.bf16.mxu0 0
    %4483 = vmatpush2.bf16.msra.mxu0 0
    %4484 = vmatprep.subr.bf16.mxu0 0
    %4485 = vmatpush2.bf16.msra.mxu0 0
    %4486 = vmatprep.subr.bf16.mxu0 0
    %4487 = vmatpush2.bf16.msra.mxu0 0
    %4488 = vmatprep.mubr.bf16.mxu0 0
    %4489 = vmatmul.mubr.bf16.gmra.mxu0 %v4445
    %v4490 = vpop.f32.mrf.mxu0
    %v4491 = vadd.f32 %v4430, %v4490
    %v4492 = vpop.f32.mrf.mxu0
    %v4493 = vpop.f32.mrf.mxu0
    %v4494 = vadd.f32 %v4430, %v4493
    %v4495 = vpop.f32.mrf.mxu0
    %4496 = vmatprep.mubr.bf16.mxu0 0
    %4497 = vmatmul.mubr.bf16.gmra.mxu0 %v4448
    %v4498 = vpop.f32.mrf.mxu0
    %v4499 = vadd.f32 %v4430, %v4498
    %v4500 = vpop.f32.mrf.mxu0
    %v4501 = vpop.f32.mrf.mxu0
    %v4502 = vadd.f32 %v4430, %v4501
    %v4503 = vpop.f32.mrf.mxu0
    %4504 = vmatprep.mubr.bf16.mxu0 0
    %4505 = vmatmul.mubr.bf16.gmra.mxu0 %v4451
    %v4506 = vpop.f32.mrf.mxu0
    %v4507 = vadd.f32 %v4430, %v4506
    %v4508 = vpop.f32.mrf.mxu0
    %v4509 = vpop.f32.mrf.mxu0
    %v4510 = vadd.f32 %v4430, %v4509
    %v4511 = vpop.f32.mrf.mxu0
    %4512 = vmatprep.mubr.bf16.mxu0 0
    %4513 = vmatmul.mubr.bf16.gmra.mxu0 %v4454
    %v4514 = vpop.f32.mrf.mxu0
    %v4515 = vadd.f32 %v4430, %v4514
    %v4516 = vpop.f32.mrf.mxu0
    %v4517 = vpop.f32.mrf.mxu0
    %v4518 = vadd.f32 %v4430, %v4517
    %v4519 = vpop.f32.mrf.mxu0
    %4520 = vdwg.mxu0
    %v4521 = vmul.f32 %v4491, %v4491
    %v4522 = vmul.f32 %v4494, %v4494
    %v4523 = vmul.f32 %v4499, %v4499
    %v4524 = vmul.f32 %v4502, %v4502
    %v4525 = vmul.f32 %v4507, %v4507
    %v4526 = vmul.f32 %v4510, %v4510
    %v4527 = vmul.f32 %v4515, %v4515
    %v4528 = vmul.f32 %v4518, %v4518
    %v4529 = vmul.f32 %v4491, %v4521
    %v4530 = vmul.f32 %v4494, %v4522
    %v4531 = vmul.f32 %v4499, %v4523
    %v4532 = vmul.f32 %v4502, %v4524
    %v4533 = vmul.f32 %v4507, %v4525
    %v4534 = vmul.f32 %v4510, %v4526
    %v4535 = vmul.f32 %v4515, %v4527
    %v4536 = vmul.f32 %v4518, %v4528
    %v4537 = vmul.f32 %v4529, 0.044715
    %v4538 = vmul.f32 %v4530, 0.044715
    %v4539 = vmul.f32 %v4531, 0.044715
    %v4540 = vmul.f32 %v4532, 0.044715
    %v4541 = vmul.f32 %v4533, 0.044715
    %v4542 = vmul.f32 %v4534, 0.044715
    %v4543 = vmul.f32 %v4535, 0.044715
    %v4544 = vmul.f32 %v4536, 0.044715
    %v4545 = vadd.f32 %v4491, %v4537
    %v4546 = vadd.f32 %v4494, %v4538
    %v4547 = vadd.f32 %v4499, %v4539
    %v4548 = vadd.f32 %v4502, %v4540
    %v4549 = vadd.f32 %v4507, %v4541
    %v4550 = vadd.f32 %v4510, %v4542
    %v4551 = vadd.f32 %v4515, %v4543
    %v4552 = vadd.f32 %v4518, %v4544
    %v4553 = vmul.f32 %v4545, 0.7978846
    %v4554 = vmul.f32 %v4546, 0.7978846
    %v4555 = vmul.f32 %v4547, 0.7978846
    %v4556 = vmul.f32 %v4548, 0.7978846
    %v4557 = vmul.f32 %v4549, 0.7978846
    %v4558 = vmul.f32 %v4550, 0.7978846
    %v4559 = vmul.f32 %v4551, 0.7978846
    %v4560 = vmul.f32 %v4552, 0.7978846
    %v4561 = vtanh.pop %v4553
    %v4562 = vtanh.pop %v4554
    %v4563 = vtanh.pop %v4555
    %v4564 = vtanh.pop %v4556
    %v4565 = vtanh.pop %v4557
    %v4566 = vtanh.pop %v4558
    %v4567 = vtanh.pop %v4559
    %v4568 = vtanh.pop %v4560
    %v4569 = vadd.f32 %v4561, 1.0
    %v4570 = vadd.f32 %v4562, 1.0
    %v4571 = vadd.f32 %v4563, 1.0
    %v4572 = vadd.f32 %v4564, 1.0
    %v4573 = vadd.f32 %v4565, 1.0
    %v4574 = vadd.f32 %v4566, 1.0
    %v4575 = vadd.f32 %v4567, 1.0
    %v4576 = vadd.f32 %v4568, 1.0
    %v4577 = vmul.f32 %v4569, 0.5
    %v4578 = vmul.f32 %v4570, 0.5
    %v4579 = vmul.f32 %v4571, 0.5
    %v4580 = vmul.f32 %v4572, 0.5
    %v4581 = vmul.f32 %v4573, 0.5
    %v4582 = vmul.f32 %v4574, 0.5
    %v4583 = vmul.f32 %v4575, 0.5
    %v4584 = vmul.f32 %v4576, 0.5
    %v4585 = vmul.f32 %v4491, %v4577
    %v4586 = vmul.f32 %v4494, %v4578
    %v4587 = vmul.f32 %v4499, %v4579
    %v4588 = vmul.f32 %v4502, %v4580
    %v4589 = vmul.f32 %v4507, %v4581
    %v4590 = vmul.f32 %v4510, %v4582
    %v4591 = vmul.f32 %v4515, %v4583
    %v4592 = vmul.f32 %v4518, %v4584
    %v4593 = vpack.c.bf16 %v4586, %v4585
    %v4594 = vpack.c.bf16 %v4588, %v4587
    %v4595 = vpack.c.bf16 %v4590, %v4589
    %v4596 = vpack.c.bf16 %v4592, %v4591
    %v4597 = vld [vmem:[%s12] sm:$0xf]
    %v4598 = vld [vmem:[%s12 + $0x4] sm:$0xf]
    %v4599 = vld [vmem:[%s12 + $0x8] sm:$0xf]
    %v4600 = vld [vmem:[%s12 + $0xc] sm:$0xf]
    %v4601 = vld [vmem:[%s12 + $0x10] sm:$0xf]
    %v4602 = vld [vmem:[%s12 + $0x14] sm:$0xf]
    %v4603 = vld [vmem:[%s12 + $0x18] sm:$0xf]
    %v4604 = vld [vmem:[%s12 + $0x1c] sm:$0xf]
    %v4605 = vld [vmem:[%s13] sm:$0x1]
    %v4607 = vlaneseq
    %v4608 = vshrl.u32 %v4607, 7
    %v4609 = vsub.s32 0, %v4608
    %v4610 = vrot.slane %v4605, %v4609
    %v4620 = vunpack.c.l.b16 %v4597
    %v4621 = vunpack.c.l.b16 %v4598
    %v4622 = vunpack.c.l.b16 %v4599
    %v4623 = vunpack.c.l.b16 %v4600
    %v4624 = vunpack.c.l.b16 %v4601
    %v4625 = vunpack.c.l.b16 %v4602
    %v4626 = vunpack.c.l.b16 %v4603
    %v4627 = vunpack.c.l.b16 %v4604
    %v4628 = vpack.c.b16 %v4621, %v4620
    %v4629 = vpack.c.b16 %v4623, %v4622
    %v4630 = vpack.c.b16 %v4625, %v4624
    %v4631 = vpack.c.b16 %v4627, %v4626
    %vm4636 = vcmask 523264
    %v4638 = vsel %vm4636, %v4593, 0
    %v4641 = vsel %vm4636, %v4594, 0
    %v4644 = vsel %vm4636, %v4595, 0
    %v4647 = vsel %vm4636, %v4596, 0
    %4649 = vmatprep.subr.bf16.mxu0 0
    %4650 = vmatpush1.bf16.msra.mxu0 0
    %4651 = vmatprep.subr.bf16.mxu0 0
    %4652 = vmatpush1.bf16.msra.mxu0 0
    %4653 = vmatprep.subr.bf16.mxu0 0
    %4654 = vmatpush1.bf16.msra.mxu0 0
    %4655 = vmatprep.subr.bf16.mxu0 0
    %4656 = vmatpush1.bf16.msra.mxu0 0
    %4657 = vmatprep.subr.bf16.mxu0 0
    %4658 = vmatpush1.bf16.msra.mxu0 %v4631
    %4659 = vmatprep.subr.bf16.mxu0 0
    %4660 = vmatpush1.bf16.msra.mxu0 %v4630
    %4661 = vmatprep.subr.bf16.mxu0 0
    %4662 = vmatpush1.bf16.msra.mxu0 %v4629
    %4663 = vmatprep.subr.bf16.mxu0 0
    %4664 = vmatpush1.bf16.msra.mxu0 %v4628
    %4665 = vmatprep.subr.bf16.mxu0 0
    %4666 = vmatpush2.bf16.msra.mxu0 0
    %4667 = vmatprep.subr.bf16.mxu0 0
    %4668 = vmatpush2.bf16.msra.mxu0 0
    %4669 = vmatprep.subr.bf16.mxu0 0
    %4670 = vmatpush2.bf16.msra.mxu0 0
    %4671 = vmatprep.subr.bf16.mxu0 0
    %4672 = vmatpush2.bf16.msra.mxu0 0
    %4673 = vmatprep.subr.bf16.mxu0 0
    %4674 = vmatpush2.bf16.msra.mxu0 0
    %4675 = vmatprep.subr.bf16.mxu0 0
    %4676 = vmatpush2.bf16.msra.mxu0 0
    %4677 = vmatprep.subr.bf16.mxu0 0
    %4678 = vmatpush2.bf16.msra.mxu0 0
    %4679 = vmatprep.subr.bf16.mxu0 0
    %4680 = vmatpush2.bf16.msra.mxu0 0
    %4681 = vmatprep.mubr.bf16.mxu0 0
    %4682 = vmatmul.mubr.bf16.gmra.mxu0 %v4638
    %v4683 = vpop.f32.mrf.mxu0
    %v4684 = vadd.f32 %v4610, %v4683
    %v4685 = vpop.f32.mrf.mxu0
    %v4686 = vpop.f32.mrf.mxu0
    %v4687 = vadd.f32 %v4610, %v4686
    %v4688 = vpop.f32.mrf.mxu0
    %4689 = vmatprep.mubr.bf16.mxu0 0
    %4690 = vmatmul.mubr.bf16.gmra.mxu0 %v4641
    %v4691 = vpop.f32.mrf.mxu0
    %v4692 = vadd.f32 %v4610, %v4691
    %v4693 = vpop.f32.mrf.mxu0
    %v4694 = vpop.f32.mrf.mxu0
    %v4695 = vadd.f32 %v4610, %v4694
    %v4696 = vpop.f32.mrf.mxu0
    %4697 = vmatprep.mubr.bf16.mxu0 0
    %4698 = vmatmul.mubr.bf16.gmra.mxu0 %v4644
    %v4699 = vpop.f32.mrf.mxu0
    %v4700 = vadd.f32 %v4610, %v4699
    %v4701 = vpop.f32.mrf.mxu0
    %v4702 = vpop.f32.mrf.mxu0
    %v4703 = vadd.f32 %v4610, %v4702
    %v4704 = vpop.f32.mrf.mxu0
    %4705 = vmatprep.mubr.bf16.mxu0 0
    %4706 = vmatmul.mubr.bf16.gmra.mxu0 %v4647
    %v4707 = vpop.f32.mrf.mxu0
    %v4708 = vadd.f32 %v4610, %v4707
    %v4709 = vpop.f32.mrf.mxu0
    %v4710 = vpop.f32.mrf.mxu0
    %v4711 = vadd.f32 %v4610, %v4710
    %v4712 = vpop.f32.mrf.mxu0
    %4713 = vdwg.mxu0
    %v4714 = vadd.f32 %v4409, %v4684
    %v4715 = vadd.f32 %v4410, %v4687
    %v4716 = vadd.f32 %v4411, %v4692
    %v4717 = vadd.f32 %v4412, %v4695
    %v4718 = vadd.f32 %v4413, %v4700
    %v4719 = vadd.f32 %v4414, %v4703
    %v4720 = vadd.f32 %v4415, %v4708
    %v4721 = vadd.f32 %v4416, %v4711
    %v4722 = vld [vmem:[%s14] sm:$0x1]
    %v4723 = vld [vmem:[%s15] sm:$0x1]
    %v4724 = vsel %vm158, %v4714, 0.0
    %4725 = vadd.xlane.f32.xlu0 %v4724
    %v4726 = vpop.xlane.xlu0 %4725
    %v4727 = vsel %vm158, %v4715, 0.0
    %4728 = vadd.xlane.f32.xlu0 %v4727
    %v4729 = vpop.xlane.xlu0 %4728
    %v4730 = vsel %vm158, %v4716, 0.0
    %4731 = vadd.xlane.f32.xlu0 %v4730
    %v4732 = vpop.xlane.xlu0 %4731
    %v4733 = vsel %vm158, %v4717, 0.0
    %4734 = vadd.xlane.f32.xlu0 %v4733
    %v4735 = vpop.xlane.xlu0 %4734
    %v4736 = vsel %vm158, %v4718, 0.0
    %4737 = vadd.xlane.f32.xlu0 %v4736
    %v4738 = vpop.xlane.xlu0 %4737
    %v4739 = vsel %vm158, %v4719, 0.0
    %4740 = vadd.xlane.f32.xlu0 %v4739
    %v4741 = vpop.xlane.xlu0 %4740
    %v4742 = vsel %vm158, %v4720, 0.0
    %4743 = vadd.xlane.f32.xlu0 %v4742
    %v4744 = vpop.xlane.xlu0 %4743
    %v4745 = vsel %vm158, %v4721, 0.0
    %4746 = vadd.xlane.f32.xlu0 %v4745
    %v4747 = vpop.xlane.xlu0 %4746
    %v4748 = vmul.f32 %v4726, %v183
    %v4749 = vmul.f32 %v4729, %v183
    %v4750 = vmul.f32 %v4732, %v183
    %v4751 = vmul.f32 %v4735, %v183
    %v4752 = vmul.f32 %v4738, %v183
    %v4753 = vmul.f32 %v4741, %v183
    %v4754 = vmul.f32 %v4744, %v183
    %v4755 = vmul.f32 %v4747, %v183
    %v4756 = vsub.f32 %v4714, %v4748
    %v4757 = vsub.f32 %v4715, %v4749
    %v4758 = vsub.f32 %v4716, %v4750
    %v4759 = vsub.f32 %v4717, %v4751
    %v4760 = vsub.f32 %v4718, %v4752
    %v4761 = vsub.f32 %v4719, %v4753
    %v4762 = vsub.f32 %v4720, %v4754
    %v4763 = vsub.f32 %v4721, %v4755
    %v4764 = vmul.f32 %v4756, %v4756
    %v4765 = vmul.f32 %v4757, %v4757
    %v4766 = vmul.f32 %v4758, %v4758
    %v4767 = vmul.f32 %v4759, %v4759
    %v4768 = vmul.f32 %v4760, %v4760
    %v4769 = vmul.f32 %v4761, %v4761
    %v4770 = vmul.f32 %v4762, %v4762
    %v4771 = vmul.f32 %v4763, %v4763
    %v4772 = vsel %vm158, %v4764, 0.0
    %4773 = vadd.xlane.f32.xlu0 %v4772
    %v4774 = vpop.xlane.xlu0 %4773
    %v4775 = vsel %vm158, %v4765, 0.0
    %4776 = vadd.xlane.f32.xlu0 %v4775
    %v4777 = vpop.xlane.xlu0 %4776
    %v4778 = vsel %vm158, %v4766, 0.0
    %4779 = vadd.xlane.f32.xlu0 %v4778
    %v4780 = vpop.xlane.xlu0 %4779
    %v4781 = vsel %vm158, %v4767, 0.0
    %4782 = vadd.xlane.f32.xlu0 %v4781
    %v4783 = vpop.xlane.xlu0 %4782
    %v4784 = vsel %vm158, %v4768, 0.0
    %4785 = vadd.xlane.f32.xlu0 %v4784
    %v4786 = vpop.xlane.xlu0 %4785
    %v4787 = vsel %vm158, %v4769, 0.0
    %4788 = vadd.xlane.f32.xlu0 %v4787
    %v4789 = vpop.xlane.xlu0 %4788
    %v4790 = vsel %vm158, %v4770, 0.0
    %4791 = vadd.xlane.f32.xlu0 %v4790
    %v4792 = vpop.xlane.xlu0 %4791
    %v4793 = vsel %vm158, %v4771, 0.0
    %4794 = vadd.xlane.f32.xlu0 %v4793
    %v4795 = vpop.xlane.xlu0 %4794
    %v4796 = vmul.f32 %v4774, %v183
    %v4797 = vmul.f32 %v4777, %v183
    %v4798 = vmul.f32 %v4780, %v183
    %v4799 = vmul.f32 %v4783, %v183
    %v4800 = vmul.f32 %v4786, %v183
    %v4801 = vmul.f32 %v4789, %v183
    %v4802 = vmul.f32 %v4792, %v183
    %v4803 = vmul.f32 %v4795, %v183
    %v4804 = vadd.f32 %v4796, 1e-05
    %v4805 = vadd.f32 %v4797, 1e-05
    %v4806 = vadd.f32 %v4798, 1e-05
    %v4807 = vadd.f32 %v4799, 1e-05
    %v4808 = vadd.f32 %v4800, 1e-05
    %v4809 = vadd.f32 %v4801, 1e-05
    %v4810 = vadd.f32 %v4802, 1e-05
    %v4811 = vadd.f32 %v4803, 1e-05
    %v4812 = vrsqrt.pop %v4804
    %v4813 = vrsqrt.pop %v4805
    %v4814 = vrsqrt.pop %v4806
    %v4815 = vrsqrt.pop %v4807
    %v4816 = vrsqrt.pop %v4808
    %v4817 = vrsqrt.pop %v4809
    %v4818 = vrsqrt.pop %v4810
    %v4819 = vrsqrt.pop %v4811
    %v4820 = vmul.f32 %v4756, %v4812
    %v4821 = vmul.f32 %v4757, %v4813
    %v4822 = vmul.f32 %v4758, %v4814
    %v4823 = vmul.f32 %v4759, %v4815
    %v4824 = vmul.f32 %v4760, %v4816
    %v4825 = vmul.f32 %v4761, %v4817
    %v4826 = vmul.f32 %v4762, %v4818
    %v4827 = vmul.f32 %v4763, %v4819
    %v4829 = vlaneseq
    %v4830 = vshrl.u32 %v4829, 7
    %v4831 = vsub.s32 0, %v4830
    %v4832 = vrot.slane %v4722, %v4831
    %v4834 = vmul.f32 %v4820, %v4832
    %v4835 = vmul.f32 %v4821, %v4832
    %v4836 = vmul.f32 %v4822, %v4832
    %v4837 = vmul.f32 %v4823, %v4832
    %v4838 = vmul.f32 %v4824, %v4832
    %v4839 = vmul.f32 %v4825, %v4832
    %v4840 = vmul.f32 %v4826, %v4832
    %v4841 = vmul.f32 %v4827, %v4832
    %v4843 = vlaneseq
    %v4844 = vshrl.u32 %v4843, 7
    %v4845 = vsub.s32 0, %v4844
    %v4846 = vrot.slane %v4723, %v4845
    %v4848 = vadd.f32 %v4834, %v4846
    %v4849 = vadd.f32 %v4835, %v4846
    %v4850 = vadd.f32 %v4836, %v4846
    %v4851 = vadd.f32 %v4837, %v4846
    %v4852 = vadd.f32 %v4838, %v4846
    %v4853 = vadd.f32 %v4839, %v4846
    %v4854 = vadd.f32 %v4840, %v4846
    %v4855 = vadd.f32 %v4841, %v4846
    %v4856 = vpack.c.bf16 %v4849, %v4848
    %v4857 = vpack.c.bf16 %v4851, %v4850
    %v4858 = vpack.c.bf16 %v4853, %v4852
    %v4859 = vpack.c.bf16 %v4855, %v4854
    %s4860 = scalar_lea.vmem %s4, 16
    %v4861 = vld [vmem:[%s4860] sm:$0xf]
    %v4862 = vld [vmem:[%s4860 + $0x4] sm:$0xf]
    %v4863 = vld [vmem:[%s4860 + $0x8] sm:$0xf]
    %v4864 = vld [vmem:[%s4860 + $0xc] sm:$0xf]
    %s4865 = scalar_lea.vmem [#allocation7], 1
    %v4866 = vld [vmem:[%s4865] sm:$0x1]
    %v4868 = vlaneseq
    %v4869 = vshrl.u32 %v4868, 7
    %v4870 = vsub.s32 0, %v4869
    %v4871 = vrot.slane %v4866, %v4870
    %v4877 = vunpack.c.l.b16 %v4861
    %v4878 = vunpack.c.l.b16 %v4862
    %v4879 = vunpack.c.l.b16 %v4863
    %v4880 = vunpack.c.l.b16 %v4864
    %v4881 = vpack.c.b16 %v4878, %v4877
    %v4882 = vpack.c.b16 %v4880, %v4879
    %v4886 = vsel %vm158, %v4856, 0
    %v4889 = vsel %vm158, %v4857, 0
    %v4892 = vsel %vm158, %v4858, 0
    %v4895 = vsel %vm158, %v4859, 0
    %4897 = vmatprep.subr.bf16.mxu0 0
    %4898 = vmatpush1.bf16.msra.mxu0 0
    %4899 = vmatprep.subr.bf16.mxu0 0
    %4900 = vmatpush1.bf16.msra.mxu0 0
    %4901 = vmatprep.subr.bf16.mxu0 0
    %4902 = vmatpush1.bf16.msra.mxu0 0
    %4903 = vmatprep.subr.bf16.mxu0 0
    %4904 = vmatpush1.bf16.msra.mxu0 0
    %4905 = vmatprep.subr.bf16.mxu0 0
    %4906 = vmatpush1.bf16.msra.mxu0 0
    %4907 = vmatprep.subr.bf16.mxu0 0
    %4908 = vmatpush1.bf16.msra.mxu0 0
    %4909 = vmatprep.subr.bf16.mxu0 0
    %4910 = vmatpush1.bf16.msra.mxu0 %v4882
    %4911 = vmatprep.subr.bf16.mxu0 0
    %4912 = vmatpush1.bf16.msra.mxu0 %v4881
    %4913 = vmatprep.subr.bf16.mxu0 0
    %4914 = vmatpush2.bf16.msra.mxu0 0
    %4915 = vmatprep.subr.bf16.mxu0 0
    %4916 = vmatpush2.bf16.msra.mxu0 0
    %4917 = vmatprep.subr.bf16.mxu0 0
    %4918 = vmatpush2.bf16.msra.mxu0 0
    %4919 = vmatprep.subr.bf16.mxu0 0
    %4920 = vmatpush2.bf16.msra.mxu0 0
    %4921 = vmatprep.subr.bf16.mxu0 0
    %4922 = vmatpush2.bf16.msra.mxu0 0
    %4923 = vmatprep.subr.bf16.mxu0 0
    %4924 = vmatpush2.bf16.msra.mxu0 0
    %4925 = vmatprep.subr.bf16.mxu0 0
    %4926 = vmatpush2.bf16.msra.mxu0 0
    %4927 = vmatprep.subr.bf16.mxu0 0
    %4928 = vmatpush2.bf16.msra.mxu0 0
    %4929 = vmatprep.mubr.bf16.mxu0 0
    %4930 = vmatmul.mubr.bf16.gmra.mxu0 %v4886
    %v4931 = vpop.f32.mrf.mxu0
    %v4932 = vadd.f32 %v4871, %v4931
    %v4933 = vpop.f32.mrf.mxu0
    %v4934 = vpop.f32.mrf.mxu0
    %v4935 = vadd.f32 %v4871, %v4934
    %v4936 = vpop.f32.mrf.mxu0
    %4937 = vmatprep.mubr.bf16.mxu0 0
    %4938 = vmatmul.mubr.bf16.gmra.mxu0 %v4889
    %v4939 = vpop.f32.mrf.mxu0
    %v4940 = vadd.f32 %v4871, %v4939
    %v4941 = vpop.f32.mrf.mxu0
    %v4942 = vpop.f32.mrf.mxu0
    %v4943 = vadd.f32 %v4871, %v4942
    %v4944 = vpop.f32.mrf.mxu0
    %4945 = vmatprep.mubr.bf16.mxu0 0
    %4946 = vmatmul.mubr.bf16.gmra.mxu0 %v4892
    %v4947 = vpop.f32.mrf.mxu0
    %v4948 = vadd.f32 %v4871, %v4947
    %v4949 = vpop.f32.mrf.mxu0
    %v4950 = vpop.f32.mrf.mxu0
    %v4951 = vadd.f32 %v4871, %v4950
    %v4952 = vpop.f32.mrf.mxu0
    %4953 = vmatprep.mubr.bf16.mxu0 0
    %4954 = vmatmul.mubr.bf16.gmra.mxu0 %v4895
    %v4955 = vpop.f32.mrf.mxu0
    %v4956 = vadd.f32 %v4871, %v4955
    %v4957 = vpop.f32.mrf.mxu0
    %v4958 = vpop.f32.mrf.mxu0
    %v4959 = vadd.f32 %v4871, %v4958
    %v4960 = vpop.f32.mrf.mxu0
    %4961 = vdwg.mxu0
    %v4962 = vlaneseq
    %v4963 = vshrl.u32 %v4962, 7
    %v4964 = vsub.s32 0, %v4963
    %v4965 = vrot.slane %v4932, %v4964
    %v4966 = vlaneseq
    %v4967 = vshrl.u32 %v4966, 7
    %v4968 = vsub.s32 0, %v4967
    %v4969 = vrot.slane %v4935, %v4968
    %v4970 = vlaneseq
    %v4971 = vshrl.u32 %v4970, 7
    %v4972 = vsub.s32 0, %v4971
    %v4973 = vrot.slane %v4940, %v4972
    %v4974 = vlaneseq
    %v4975 = vshrl.u32 %v4974, 7
    %v4976 = vsub.s32 0, %v4975
    %v4977 = vrot.slane %v4943, %v4976
    %v4978 = vlaneseq
    %v4979 = vshrl.u32 %v4978, 7
    %v4980 = vsub.s32 0, %v4979
    %v4981 = vrot.slane %v4948, %v4980
    %v4982 = vlaneseq
    %v4983 = vshrl.u32 %v4982, 7
    %v4984 = vsub.s32 0, %v4983
    %v4985 = vrot.slane %v4951, %v4984
    %v4986 = vlaneseq
    %v4987 = vshrl.u32 %v4986, 7
    %v4988 = vsub.s32 0, %v4987
    %v4989 = vrot.slane %v4956, %v4988
    %v4990 = vlaneseq
    %v4991 = vshrl.u32 %v4990, 7
    %v4992 = vsub.s32 0, %v4991
    %v4993 = vrot.slane %v4959, %v4992
    %5002 = vrot.lane.b32.xlu0 %v4932, 96
    %v5003 = vpop.permute.xlu0 %5002
    %5004 = vrot.lane.b32.xlu0 %v4935, 96
    %v5005 = vpop.permute.xlu0 %5004
    %5006 = vrot.lane.b32.xlu0 %v4940, 96
    %v5007 = vpop.permute.xlu0 %5006
    %5008 = vrot.lane.b32.xlu0 %v4943, 96
    %v5009 = vpop.permute.xlu0 %5008
    %5010 = vrot.lane.b32.xlu0 %v4948, 96
    %v5011 = vpop.permute.xlu0 %5010
    %5012 = vrot.lane.b32.xlu0 %v4951, 96
    %v5013 = vpop.permute.xlu0 %5012
    %5014 = vrot.lane.b32.xlu0 %v4956, 96
    %v5015 = vpop.permute.xlu0 %5014
    %5016 = vrot.lane.b32.xlu0 %v4959, 96
    %v5017 = vpop.permute.xlu0 %5016
    %v5026 = vmul.f32 %v4965, %v5003
    %v5027 = vmul.f32 %v4969, %v5005
    %v5028 = vmul.f32 %v4973, %v5007
    %v5029 = vmul.f32 %v4977, %v5009
    %v5030 = vmul.f32 %v4981, %v5011
    %v5031 = vmul.f32 %v4985, %v5013
    %v5032 = vmul.f32 %v4989, %v5015
    %v5033 = vmul.f32 %v4993, %v5017
    %v5034 = vpack.c.bf16 %v5027, %v5026
    %v5035 = vpack.c.bf16 %v5029, %v5028
    %v5036 = vpack.c.bf16 %v5031, %v5030
    %v5037 = vpack.c.bf16 %v5033, %v5032
    %v5039 = vsel %vm158, %v5034, 0
    %v5042 = vsel %vm158, %v5035, 0
    %v5045 = vsel %vm158, %v5036, 0
    %v5048 = vsel %vm158, %v5037, 0
    %5050 = vmatprep.subr.bf16.mxu0 0
    %5051 = vmatpush1.bf16.msra.mxu0 0
    %5052 = vmatprep.subr.bf16.mxu0 0
    %5053 = vmatpush1.bf16.msra.mxu0 0
    %5054 = vmatprep.subr.bf16.mxu0 0
    %5055 = vmatpush1.bf16.msra.mxu0 0
    %5056 = vmatprep.subr.bf16.mxu0 0
    %5057 = vmatpush1.bf16.msra.mxu0 0
    %5058 = vmatprep.subr.bf16.mxu0 0
    %5059 = vmatpush1.bf16.msra.mxu0 0
    %5060 = vmatprep.subr.bf16.mxu0 0
    %5061 = vmatpush1.bf16.msra.mxu0 0
    %5062 = vmatprep.subr.bf16.mxu0 0
    %5063 = vmatpush1.bf16.msra.mxu0 %v1250
    %5064 = vmatprep.subr.bf16.mxu0 0
    %5065 = vmatpush1.bf16.msra.mxu0 %v1249
    %5066 = vmatprep.subr.bf16.mxu0 0
    %5067 = vmatpush2.bf16.msra.mxu0 0
    %5068 = vmatprep.subr.bf16.mxu0 0
    %5069 = vmatpush2.bf16.msra.mxu0 0
    %5070 = vmatprep.subr.bf16.mxu0 0
    %5071 = vmatpush2.bf16.msra.mxu0 0
    %5072 = vmatprep.subr.bf16.mxu0 0
    %5073 = vmatpush2.bf16.msra.mxu0 0
    %5074 = vmatprep.subr.bf16.mxu0 0
    %5075 = vmatpush2.bf16.msra.mxu0 0
    %5076 = vmatprep.subr.bf16.mxu0 0
    %5077 = vmatpush2.bf16.msra.mxu0 0
    %5078 = vmatprep.subr.bf16.mxu0 0
    %5079 = vmatpush2.bf16.msra.mxu0 0
    %5080 = vmatprep.subr.bf16.mxu0 0
    %5081 = vmatpush2.bf16.msra.mxu0 0
    %5082 = vmatprep.mubr.bf16.mxu0 0
    %5083 = vmatmul.mubr.bf16.gmra.mxu0 %v5039
    %v5084 = vpop.f32.mrf.mxu0
    %v5085 = vadd.f32 0.0, %v5084
    %v5086 = vpop.f32.mrf.mxu0
    %v5087 = vpop.f32.mrf.mxu0
    %v5088 = vadd.f32 0.0, %v5087
    %v5089 = vpop.f32.mrf.mxu0
    %5090 = vmatprep.mubr.bf16.mxu0 0
    %5091 = vmatmul.mubr.bf16.gmra.mxu0 %v5042
    %v5092 = vpop.f32.mrf.mxu0
    %v5093 = vadd.f32 0.0, %v5092
    %v5094 = vpop.f32.mrf.mxu0
    %v5095 = vpop.f32.mrf.mxu0
    %v5096 = vadd.f32 0.0, %v5095
    %v5097 = vpop.f32.mrf.mxu0
    %5098 = vmatprep.mubr.bf16.mxu0 0
    %5099 = vmatmul.mubr.bf16.gmra.mxu0 %v5045
    %v5100 = vpop.f32.mrf.mxu0
    %v5101 = vadd.f32 0.0, %v5100
    %v5102 = vpop.f32.mrf.mxu0
    %v5103 = vpop.f32.mrf.mxu0
    %v5104 = vadd.f32 0.0, %v5103
    %v5105 = vpop.f32.mrf.mxu0
    %5106 = vmatprep.mubr.bf16.mxu0 0
    %5107 = vmatmul.mubr.bf16.gmra.mxu0 %v5048
    %v5108 = vpop.f32.mrf.mxu0
    %v5109 = vadd.f32 0.0, %v5108
    %v5110 = vpop.f32.mrf.mxu0
    %v5111 = vpop.f32.mrf.mxu0
    %v5112 = vadd.f32 0.0, %v5111
    %v5113 = vpop.f32.mrf.mxu0
    %5114 = vdwg.mxu0
    %v5115 = vadd.f32 %v5085, %v1641
    %v5116 = vadd.f32 %v5088, %v1646
    %v5117 = vadd.f32 %v5093, %v1651
    %v5118 = vadd.f32 %v5096, %v1656
    %v5119 = vadd.f32 %v5101, %v1661
    %v5120 = vadd.f32 %v5104, %v1666
    %v5121 = vadd.f32 %v5109, %v1671
    %v5122 = vadd.f32 %v5112, %v1676
    %v5123 = vsel %vm1742, %v5115, -inf
    %v5124 = vrot.slane %v5123, 4
    %v5125 = vmax.f32 %v5123, %v5124
    %v5126 = vrot.slane %v5125, 2
    %v5127 = vmax.f32 %v5125, %v5126
    %v5128 = vrot.slane %v5127, 1
    %v5129 = vmax.f32 %v5127, %v5128
    %v5130 = vsel %vm1742, %v5116, -inf
    %v5131 = vrot.slane %v5130, 4
    %v5132 = vmax.f32 %v5130, %v5131
    %v5133 = vrot.slane %v5132, 2
    %v5134 = vmax.f32 %v5132, %v5133
    %v5135 = vrot.slane %v5134, 1
    %v5136 = vmax.f32 %v5134, %v5135
    %v5137 = vsel %vm1742, %v5117, -inf
    %v5138 = vrot.slane %v5137, 4
    %v5139 = vmax.f32 %v5137, %v5138
    %v5140 = vrot.slane %v5139, 2
    %v5141 = vmax.f32 %v5139, %v5140
    %v5142 = vrot.slane %v5141, 1
    %v5143 = vmax.f32 %v5141, %v5142
    %v5144 = vsel %vm1742, %v5118, -inf
    %v5145 = vrot.slane %v5144, 4
    %v5146 = vmax.f32 %v5144, %v5145
    %v5147 = vrot.slane %v5146, 2
    %v5148 = vmax.f32 %v5146, %v5147
    %v5149 = vrot.slane %v5148, 1
    %v5150 = vmax.f32 %v5148, %v5149
    %v5151 = vsel %vm1742, %v5119, -inf
    %v5152 = vrot.slane %v5151, 4
    %v5153 = vmax.f32 %v5151, %v5152
    %v5154 = vrot.slane %v5153, 2
    %v5155 = vmax.f32 %v5153, %v5154
    %v5156 = vrot.slane %v5155, 1
    %v5157 = vmax.f32 %v5155, %v5156
    %v5158 = vsel %vm1742, %v5120, -inf
    %v5159 = vrot.slane %v5158, 4
    %v5160 = vmax.f32 %v5158, %v5159
    %v5161 = vrot.slane %v5160, 2
    %v5162 = vmax.f32 %v5160, %v5161
    %v5163 = vrot.slane %v5162, 1
    %v5164 = vmax.f32 %v5162, %v5163
    %v5165 = vsel %vm1742, %v5121, -inf
    %v5166 = vrot.slane %v5165, 4
    %v5167 = vmax.f32 %v5165, %v5166
    %v5168 = vrot.slane %v5167, 2
    %v5169 = vmax.f32 %v5167, %v5168
    %v5170 = vrot.slane %v5169, 1
    %v5171 = vmax.f32 %v5169, %v5170
    %v5172 = vsel %vm1742, %v5122, -inf
    %v5173 = vrot.slane %v5172, 4
    %v5174 = vmax.f32 %v5172, %v5173
    %v5175 = vrot.slane %v5174, 2
    %v5176 = vmax.f32 %v5174, %v5175
    %v5177 = vrot.slane %v5176, 1
    %v5178 = vmax.f32 %v5176, %v5177
    %v5179 = vsub.f32 %v5115, %v5129
    %v5180 = vsub.f32 %v5116, %v5136
    %v5181 = vsub.f32 %v5117, %v5143
    %v5182 = vsub.f32 %v5118, %v5150
    %v5183 = vsub.f32 %v5119, %v5157
    %v5184 = vsub.f32 %v5120, %v5164
    %v5185 = vsub.f32 %v5121, %v5171
    %v5186 = vsub.f32 %v5122, %v5178
    %v5187 = vmul.f32 %v5179, 1.442695
    %v5188 = vpow.pop %v5187
    %v5189 = vmul.f32 %v5180, 1.442695
    %v5190 = vpow.pop %v5189
    %v5191 = vmul.f32 %v5181, 1.442695
    %v5192 = vpow.pop %v5191
    %v5193 = vmul.f32 %v5182, 1.442695
    %v5194 = vpow.pop %v5193
    %v5195 = vmul.f32 %v5183, 1.442695
    %v5196 = vpow.pop %v5195
    %v5197 = vmul.f32 %v5184, 1.442695
    %v5198 = vpow.pop %v5197
    %v5199 = vmul.f32 %v5185, 1.442695
    %v5200 = vpow.pop %v5199
    %v5201 = vmul.f32 %v5186, 1.442695
    %v5202 = vpow.pop %v5201
    %v5203 = vsel %vm1742, %v5188, 0.0
    %v5204 = vrot.slane %v5203, 4
    %v5205 = vadd.f32 %v5203, %v5204
    %v5206 = vrot.slane %v5205, 2
    %v5207 = vadd.f32 %v5205, %v5206
    %v5208 = vrot.slane %v5207, 1
    %v5209 = vadd.f32 %v5207, %v5208
    %v5210 = vsel %vm1742, %v5190, 0.0
    %v5211 = vrot.slane %v5210, 4
    %v5212 = vadd.f32 %v5210, %v5211
    %v5213 = vrot.slane %v5212, 2
    %v5214 = vadd.f32 %v5212, %v5213
    %v5215 = vrot.slane %v5214, 1
    %v5216 = vadd.f32 %v5214, %v5215
    %v5217 = vsel %vm1742, %v5192, 0.0
    %v5218 = vrot.slane %v5217, 4
    %v5219 = vadd.f32 %v5217, %v5218
    %v5220 = vrot.slane %v5219, 2
    %v5221 = vadd.f32 %v5219, %v5220
    %v5222 = vrot.slane %v5221, 1
    %v5223 = vadd.f32 %v5221, %v5222
    %v5224 = vsel %vm1742, %v5194, 0.0
    %v5225 = vrot.slane %v5224, 4
    %v5226 = vadd.f32 %v5224, %v5225
    %v5227 = vrot.slane %v5226, 2
    %v5228 = vadd.f32 %v5226, %v5227
    %v5229 = vrot.slane %v5228, 1
    %v5230 = vadd.f32 %v5228, %v5229
    %v5231 = vsel %vm1742, %v5196, 0.0
    %v5232 = vrot.slane %v5231, 4
    %v5233 = vadd.f32 %v5231, %v5232
    %v5234 = vrot.slane %v5233, 2
    %v5235 = vadd.f32 %v5233, %v5234
    %v5236 = vrot.slane %v5235, 1
    %v5237 = vadd.f32 %v5235, %v5236
    %v5238 = vsel %vm1742, %v5198, 0.0
    %v5239 = vrot.slane %v5238, 4
    %v5240 = vadd.f32 %v5238, %v5239
    %v5241 = vrot.slane %v5240, 2
    %v5242 = vadd.f32 %v5240, %v5241
    %v5243 = vrot.slane %v5242, 1
    %v5244 = vadd.f32 %v5242, %v5243
    %v5245 = vsel %vm1742, %v5200, 0.0
    %v5246 = vrot.slane %v5245, 4
    %v5247 = vadd.f32 %v5245, %v5246
    %v5248 = vrot.slane %v5247, 2
    %v5249 = vadd.f32 %v5247, %v5248
    %v5250 = vrot.slane %v5249, 1
    %v5251 = vadd.f32 %v5249, %v5250
    %v5252 = vsel %vm1742, %v5202, 0.0
    %v5253 = vrot.slane %v5252, 4
    %v5254 = vadd.f32 %v5252, %v5253
    %v5255 = vrot.slane %v5254, 2
    %v5256 = vadd.f32 %v5254, %v5255
    %v5257 = vrot.slane %v5256, 1
    %v5258 = vadd.f32 %v5256, %v5257
    %v5259 = vrcp.pop %v5209
    %v5260 = vrcp.pop %v5216
    %v5261 = vrcp.pop %v5223
    %v5262 = vrcp.pop %v5230
    %v5263 = vrcp.pop %v5237
    %v5264 = vrcp.pop %v5244
    %v5265 = vrcp.pop %v5251
    %v5266 = vrcp.pop %v5258
    %v5267 = vmul.f32 %v5188, %v5259
    %v5268 = vmul.f32 %v5190, %v5260
    %v5269 = vmul.f32 %v5192, %v5261
    %v5270 = vmul.f32 %v5194, %v5262
    %v5271 = vmul.f32 %v5196, %v5263
    %v5272 = vmul.f32 %v5198, %v5264
    %v5273 = vmul.f32 %v5200, %v5265
    %v5274 = vmul.f32 %v5202, %v5266
    %v5275 = vpack.c.bf16 %v5268, %v5267
    %v5276 = vpack.c.bf16 %v5270, %v5269
    %v5277 = vpack.c.bf16 %v5272, %v5271
    %v5278 = vpack.c.bf16 %v5274, %v5273
    %v5280 = vsel %vm1742, %v5275, 0
    %v5283 = vsel %vm1742, %v5276, 0
    %v5286 = vsel %vm1742, %v5277, 0
    %v5289 = vsel %vm1742, %v5278, 0
    %5291 = vmatprep.subr.bf16.mxu0 0
    %5292 = vmatpush1.bf16.msra.mxu0 0
    %5293 = vmatprep.subr.bf16.mxu0 0
    %5294 = vmatpush1.bf16.msra.mxu0 0
    %5295 = vmatprep.subr.bf16.mxu0 0
    %5296 = vmatpush1.bf16.msra.mxu0 0
    %5297 = vmatprep.subr.bf16.mxu0 0
    %5298 = vmatpush1.bf16.msra.mxu0 0
    %5299 = vmatprep.subr.bf16.mxu0 0
    %5300 = vmatpush1.bf16.msra.mxu0 0
    %5301 = vmatprep.subr.bf16.mxu0 0
    %5302 = vmatpush1.bf16.msra.mxu0 0
    %5303 = vmatprep.subr.bf16.mxu0 0
    %5304 = vmatpush1.bf16.msra.mxu0 0
    %5305 = vmatprep.subr.bf16.mxu0 0
    %5306 = vmatpush1.bf16.msra.mxu0 %v3089
    %5307 = vmatprep.subr.bf16.mxu0 0
    %5308 = vmatpush2.bf16.msra.mxu0 0
    %5309 = vmatprep.subr.bf16.mxu0 0
    %5310 = vmatpush2.bf16.msra.mxu0 0
    %5311 = vmatprep.subr.bf16.mxu0 0
    %5312 = vmatpush2.bf16.msra.mxu0 0
    %5313 = vmatprep.subr.bf16.mxu0 0
    %5314 = vmatpush2.bf16.msra.mxu0 0
    %5315 = vmatprep.subr.bf16.mxu0 0
    %5316 = vmatpush2.bf16.msra.mxu0 0
    %5317 = vmatprep.subr.bf16.mxu0 0
    %5318 = vmatpush2.bf16.msra.mxu0 0
    %5319 = vmatprep.subr.bf16.mxu0 0
    %5320 = vmatpush2.bf16.msra.mxu0 0
    %5321 = vmatprep.subr.bf16.mxu0 0
    %5322 = vmatpush2.bf16.msra.mxu0 0
    %5323 = vmatprep.mubr.bf16.mxu0 0
    %5324 = vmatmul.mubr.bf16.gmra.mxu0 %v5280
    %v5325 = vpop.f32.mrf.mxu0
    %v5326 = vadd.f32 0.0, %v5325
    %v5327 = vpop.f32.mrf.mxu0
    %v5328 = vpop.f32.mrf.mxu0
    %v5329 = vadd.f32 0.0, %v5328
    %v5330 = vpop.f32.mrf.mxu0
    %5331 = vmatprep.mubr.bf16.mxu0 0
    %5332 = vmatmul.mubr.bf16.gmra.mxu0 %v5283
    %v5333 = vpop.f32.mrf.mxu0
    %v5334 = vadd.f32 0.0, %v5333
    %v5335 = vpop.f32.mrf.mxu0
    %v5336 = vpop.f32.mrf.mxu0
    %v5337 = vadd.f32 0.0, %v5336
    %v5338 = vpop.f32.mrf.mxu0
    %5339 = vmatprep.mubr.bf16.mxu0 0
    %5340 = vmatmul.mubr.bf16.gmra.mxu0 %v5286
    %v5341 = vpop.f32.mrf.mxu0
    %v5342 = vadd.f32 0.0, %v5341
    %v5343 = vpop.f32.mrf.mxu0
    %v5344 = vpop.f32.mrf.mxu0
    %v5345 = vadd.f32 0.0, %v5344
    %v5346 = vpop.f32.mrf.mxu0
    %5347 = vmatprep.mubr.bf16.mxu0 0
    %5348 = vmatmul.mubr.bf16.gmra.mxu0 %v5289
    %v5349 = vpop.f32.mrf.mxu0
    %v5350 = vadd.f32 0.0, %v5349
    %v5351 = vpop.f32.mrf.mxu0
    %v5352 = vpop.f32.mrf.mxu0
    %v5353 = vadd.f32 0.0, %v5352
    %v5354 = vpop.f32.mrf.mxu0
    %5355 = vdwg.mxu0
    %5356 = vrot.lane.b32.xlu0 %v4932, 64
    %v5357 = vpop.permute.xlu0 %5356
    %5358 = vrot.lane.b32.xlu0 %v4935, 64
    %v5359 = vpop.permute.xlu0 %5358
    %5360 = vrot.lane.b32.xlu0 %v4940, 64
    %v5361 = vpop.permute.xlu0 %5360
    %5362 = vrot.lane.b32.xlu0 %v4943, 64
    %v5363 = vpop.permute.xlu0 %5362
    %5364 = vrot.lane.b32.xlu0 %v4948, 64
    %v5365 = vpop.permute.xlu0 %5364
    %5366 = vrot.lane.b32.xlu0 %v4951, 64
    %v5367 = vpop.permute.xlu0 %5366
    %5368 = vrot.lane.b32.xlu0 %v4956, 64
    %v5369 = vpop.permute.xlu0 %5368
    %5370 = vrot.lane.b32.xlu0 %v4959, 64
    %v5371 = vpop.permute.xlu0 %5370
    %v5380 = vmul.f32 %v5326, %v5357
    %v5381 = vmul.f32 %v5329, %v5359
    %v5382 = vmul.f32 %v5334, %v5361
    %v5383 = vmul.f32 %v5337, %v5363
    %v5384 = vmul.f32 %v5342, %v5365
    %v5385 = vmul.f32 %v5345, %v5367
    %v5386 = vmul.f32 %v5350, %v5369
    %v5387 = vmul.f32 %v5353, %v5371
    %v5388 = vsel %vm158, %v5380, 0.0
    %v5389 = vrot.slane %v5388, 4
    %v5390 = vadd.f32 %v5388, %v5389
    %v5391 = vrot.slane %v5390, 2
    %v5392 = vadd.f32 %v5390, %v5391
    %v5393 = vrot.slane %v5392, 1
    %v5394 = vadd.f32 %v5392, %v5393
    %v5395 = vsel %vm158, %v5381, 0.0
    %v5396 = vrot.slane %v5395, 4
    %v5397 = vadd.f32 %v5395, %v5396
    %v5398 = vrot.slane %v5397, 2
    %v5399 = vadd.f32 %v5397, %v5398
    %v5400 = vrot.slane %v5399, 1
    %v5401 = vadd.f32 %v5399, %v5400
    %v5402 = vsel %vm158, %v5382, 0.0
    %v5403 = vrot.slane %v5402, 4
    %v5404 = vadd.f32 %v5402, %v5403
    %v5405 = vrot.slane %v5404, 2
    %v5406 = vadd.f32 %v5404, %v5405
    %v5407 = vrot.slane %v5406, 1
    %v5408 = vadd.f32 %v5406, %v5407
    %v5409 = vsel %vm158, %v5383, 0.0
    %v5410 = vrot.slane %v5409, 4
    %v5411 = vadd.f32 %v5409, %v5410
    %v5412 = vrot.slane %v5411, 2
    %v5413 = vadd.f32 %v5411, %v5412
    %v5414 = vrot.slane %v5413, 1
    %v5415 = vadd.f32 %v5413, %v5414
    %v5416 = vsel %vm158, %v5384, 0.0
    %v5417 = vrot.slane %v5416, 4
    %v5418 = vadd.f32 %v5416, %v5417
    %v5419 = vrot.slane %v5418, 2
    %v5420 = vadd.f32 %v5418, %v5419
    %v5421 = vrot.slane %v5420, 1
    %v5422 = vadd.f32 %v5420, %v5421
    %v5423 = vsel %vm158, %v5385, 0.0
    %v5424 = vrot.slane %v5423, 4
    %v5425 = vadd.f32 %v5423, %v5424
    %v5426 = vrot.slane %v5425, 2
    %v5427 = vadd.f32 %v5425, %v5426
    %v5428 = vrot.slane %v5427, 1
    %v5429 = vadd.f32 %v5427, %v5428
    %v5430 = vsel %vm158, %v5386, 0.0
    %v5431 = vrot.slane %v5430, 4
    %v5432 = vadd.f32 %v5430, %v5431
    %v5433 = vrot.slane %v5432, 2
    %v5434 = vadd.f32 %v5432, %v5433
    %v5435 = vrot.slane %v5434, 1
    %v5436 = vadd.f32 %v5434, %v5435
    %v5437 = vsel %vm158, %v5387, 0.0
    %v5438 = vrot.slane %v5437, 4
    %v5439 = vadd.f32 %v5437, %v5438
    %v5440 = vrot.slane %v5439, 2
    %v5441 = vadd.f32 %v5439, %v5440
    %v5442 = vrot.slane %v5441, 1
    %v5443 = vadd.f32 %v5441, %v5442
    %v5444 = vpack.c.bf16 %v5394, %v5394
    %v5445 = vpack.c.bf16 %v5401, %v5401
    %v5446 = vpack.c.bf16 %v5408, %v5408
    %v5447 = vpack.c.bf16 %v5415, %v5415
    %v5448 = vpack.c.bf16 %v5422, %v5422
    %v5449 = vpack.c.bf16 %v5429, %v5429
    %v5450 = vpack.c.bf16 %v5436, %v5436
    %v5451 = vpack.c.bf16 %v5443, %v5443
    %s5452 = scalar_lea.vmem %s6, 16
    %v5453 = vld [vmem:[%s5452] sm:$0xf]
    %v5454 = vld [vmem:[%s5452 + $0x4] sm:$0xf]
    %v5455 = vld [vmem:[%s5452 + $0x8] sm:$0xf]
    %v5456 = vld [vmem:[%s5452 + $0xc] sm:$0xf]
    %s5457 = scalar_lea.vmem %s7, 1
    %v5458 = vld [vmem:[%s5457] sm:$0x1]
    %v5460 = vlaneseq
    %v5461 = vshrl.u32 %v5460, 7
    %v5462 = vsub.s32 0, %v5461
    %v5463 = vrot.slane %v5458, %v5462
    %v5473 = vunpack.c.l.b16 %v5444
    %v5474 = vunpack.c.l.b16 %v5445
    %v5475 = vunpack.c.l.b16 %v5446
    %v5476 = vunpack.c.l.b16 %v5447
    %v5477 = vunpack.c.l.b16 %v5448
    %v5478 = vunpack.c.l.b16 %v5449
    %v5479 = vunpack.c.l.b16 %v5450
    %v5480 = vunpack.c.l.b16 %v5451
    %v5481 = vsel %vm4119, %v5474, %v5473
    %v5482 = vsel %vm4121, %v5475, %v5481
    %v5483 = vsel %vm4123, %v5476, %v5482
    %v5484 = vsel %vm4125, %v5477, %v5483
    %v5485 = vsel %vm4127, %v5478, %v5484
    %v5486 = vsel %vm4129, %v5479, %v5485
    %v5487 = vsel %vm4131, %v5480, %v5486
    %v5488 = vpack.c.b16 %v5487, %v5487
    %v5493 = vunpack.c.l.b16 %v5453
    %v5494 = vunpack.c.l.b16 %v5454
    %v5495 = vunpack.c.l.b16 %v5455
    %v5496 = vunpack.c.l.b16 %v5456
    %v5497 = vpack.c.b16 %v5494, %v5493
    %v5498 = vpack.c.b16 %v5496, %v5495
    %v5502 = vsel %vm158, %v5488, 0
    %5504 = vmatprep.subr.bf16.mxu0 0
    %5505 = vmatpush1.bf16.msra.mxu0 0
    %5506 = vmatprep.subr.bf16.mxu0 0
    %5507 = vmatpush1.bf16.msra.mxu0 0
    %5508 = vmatprep.subr.bf16.mxu0 0
    %5509 = vmatpush1.bf16.msra.mxu0 0
    %5510 = vmatprep.subr.bf16.mxu0 0
    %5511 = vmatpush1.bf16.msra.mxu0 0
    %5512 = vmatprep.subr.bf16.mxu0 0
    %5513 = vmatpush1.bf16.msra.mxu0 0
    %5514 = vmatprep.subr.bf16.mxu0 0
    %5515 = vmatpush1.bf16.msra.mxu0 0
    %5516 = vmatprep.subr.bf16.mxu0 0
    %5517 = vmatpush1.bf16.msra.mxu0 %v5498
    %5518 = vmatprep.subr.bf16.mxu0 0
    %5519 = vmatpush1.bf16.msra.mxu0 %v5497
    %5520 = vmatprep.subr.bf16.mxu0 0
    %5521 = vmatpush2.bf16.msra.mxu0 0
    %5522 = vmatprep.subr.bf16.mxu0 0
    %5523 = vmatpush2.bf16.msra.mxu0 0
    %5524 = vmatprep.subr.bf16.mxu0 0
    %5525 = vmatpush2.bf16.msra.mxu0 0
    %5526 = vmatprep.subr.bf16.mxu0 0
    %5527 = vmatpush2.bf16.msra.mxu0 0
    %5528 = vmatprep.subr.bf16.mxu0 0
    %5529 = vmatpush2.bf16.msra.mxu0 0
    %5530 = vmatprep.subr.bf16.mxu0 0
    %5531 = vmatpush2.bf16.msra.mxu0 0
    %5532 = vmatprep.subr.bf16.mxu0 0
    %5533 = vmatpush2.bf16.msra.mxu0 0
    %5534 = vmatprep.subr.bf16.mxu0 0
    %5535 = vmatpush2.bf16.msra.mxu0 0
    %5536 = vmatprep.mubr.bf16.mxu0 0
    %5537 = vmatmul.mubr.bf16.gmra.mxu0 %v5502
    %v5538 = vpop.f32.mrf.mxu0
    %v5539 = vadd.f32 %v5463, %v5538
    %v5540 = vpop.f32.mrf.mxu0
    %v5541 = vpop.f32.mrf.mxu0
    %v5542 = vpop.f32.mrf.mxu0
    %5543 = vdwg.mxu0
    %v5545 = vrot.slane %v5539, 1
    %v5546 = vrot.slane %v5539, 2
    %v5547 = vrot.slane %v5539, 3
    %v5548 = vrot.slane %v5539, 4
    %v5549 = vrot.slane %v5539, 5
    %v5550 = vrot.slane %v5539, 6
    %v5551 = vrot.slane %v5539, 7
    %v5560 = vadd.f32 %v4848, %v5539
    %v5561 = vadd.f32 %v4849, %v5545
    %v5562 = vadd.f32 %v4850, %v5546
    %v5563 = vadd.f32 %v4851, %v5547
    %v5564 = vadd.f32 %v4852, %v5548
    %v5565 = vadd.f32 %v4853, %v5549
    %v5566 = vadd.f32 %v4854, %v5550
    %v5567 = vadd.f32 %v4855, %v5551
    %s5568 = scalar_lea.vmem %s8, 1
    %v5569 = vld [vmem:[%s5568] sm:$0x1]
    %s5570 = scalar_lea.vmem %s9, 1
    %v5571 = vld [vmem:[%s5570] sm:$0x1]
    %v5580 = vrot.slane %v5561, 7
    %v5581 = vsel %vm4119, %v5580, %v5560
    %v5582 = vrot.slane %v5562, 6
    %v5583 = vsel %vm4121, %v5582, %v5581
    %v5584 = vrot.slane %v5563, 5
    %v5585 = vsel %vm4123, %v5584, %v5583
    %v5586 = vrot.slane %v5564, 4
    %v5587 = vsel %vm4125, %v5586, %v5585
    %v5588 = vrot.slane %v5565, 3
    %v5589 = vsel %vm4127, %v5588, %v5587
    %v5590 = vrot.slane %v5566, 2
    %v5591 = vsel %vm4129, %v5590, %v5589
    %v5592 = vrot.slane %v5567, 1
    %v5593 = vsel %vm4131, %v5592, %v5591
    %v5595 = vsel %vm158, %v5593, 0.0
    %5596 = vadd.xlane.f32.xlu0 %v5595
    %v5597 = vpop.xlane.xlu0 %5596
    %v5598 = vmul.f32 %v5597, %v183
    %v5600 = vrot.slane %v5598, 1
    %v5601 = vrot.slane %v5598, 2
    %v5602 = vrot.slane %v5598, 3
    %v5603 = vrot.slane %v5598, 4
    %v5604 = vrot.slane %v5598, 5
    %v5605 = vrot.slane %v5598, 6
    %v5606 = vrot.slane %v5598, 7
    %v5615 = vsub.f32 %v5560, %v5598
    %v5616 = vsub.f32 %v5561, %v5600
    %v5617 = vsub.f32 %v5562, %v5601
    %v5618 = vsub.f32 %v5563, %v5602
    %v5619 = vsub.f32 %v5564, %v5603
    %v5620 = vsub.f32 %v5565, %v5604
    %v5621 = vsub.f32 %v5566, %v5605
    %v5622 = vsub.f32 %v5567, %v5606
    %v5623 = vmul.f32 %v5615, %v5615
    %v5624 = vmul.f32 %v5616, %v5616
    %v5625 = vmul.f32 %v5617, %v5617
    %v5626 = vmul.f32 %v5618, %v5618
    %v5627 = vmul.f32 %v5619, %v5619
    %v5628 = vmul.f32 %v5620, %v5620
    %v5629 = vmul.f32 %v5621, %v5621
    %v5630 = vmul.f32 %v5622, %v5622
    %v5639 = vrot.slane %v5624, 7
    %v5640 = vsel %vm4119, %v5639, %v5623
    %v5641 = vrot.slane %v5625, 6
    %v5642 = vsel %vm4121, %v5641, %v5640
    %v5643 = vrot.slane %v5626, 5
    %v5644 = vsel %vm4123, %v5643, %v5642
    %v5645 = vrot.slane %v5627, 4
    %v5646 = vsel %vm4125, %v5645, %v5644
    %v5647 = vrot.slane %v5628, 3
    %v5648 = vsel %vm4127, %v5647, %v5646
    %v5649 = vrot.slane %v5629, 2
    %v5650 = vsel %vm4129, %v5649, %v5648
    %v5651 = vrot.slane %v5630, 1
    %v5652 = vsel %vm4131, %v5651, %v5650
    %v5654 = vsel %vm158, %v5652, 0.0
    %5655 = vadd.xlane.f32.xlu0 %v5654
    %v5656 = vpop.xlane.xlu0 %5655
    %v5657 = vmul.f32 %v5656, %v183
    %v5658 = vadd.f32 %v5657, 1e-05
    %v5659 = vrsqrt.pop %v5658
    %v5661 = vrot.slane %v5659, 1
    %v5662 = vrot.slane %v5659, 2
    %v5663 = vrot.slane %v5659, 3
    %v5664 = vrot.slane %v5659, 4
    %v5665 = vrot.slane %v5659, 5
    %v5666 = vrot.slane %v5659, 6
    %v5667 = vrot.slane %v5659, 7
    %v5676 = vmul.f32 %v5615, %v5659
    %v5677 = vmul.f32 %v5616, %v5661
    %v5678 = vmul.f32 %v5617, %v5662
    %v5679 = vmul.f32 %v5618, %v5663
    %v5680 = vmul.f32 %v5619, %v5664
    %v5681 = vmul.f32 %v5620, %v5665
    %v5682 = vmul.f32 %v5621, %v5666
    %v5683 = vmul.f32 %v5622, %v5667
    %v5685 = vlaneseq
    %v5686 = vshrl.u32 %v5685, 7
    %v5687 = vsub.s32 0, %v5686
    %v5688 = vrot.slane %v5569, %v5687
    %v5690 = vmul.f32 %v5676, %v5688
    %v5691 = vmul.f32 %v5677, %v5688
    %v5692 = vmul.f32 %v5678, %v5688
    %v5693 = vmul.f32 %v5679, %v5688
    %v5694 = vmul.f32 %v5680, %v5688
    %v5695 = vmul.f32 %v5681, %v5688
    %v5696 = vmul.f32 %v5682, %v5688
    %v5697 = vmul.f32 %v5683, %v5688
    %v5699 = vlaneseq
    %v5700 = vshrl.u32 %v5699, 7
    %v5701 = vsub.s32 0, %v5700
    %v5702 = vrot.slane %v5571, %v5701
    %v5704 = vadd.f32 %v5690, %v5702
    %v5705 = vadd.f32 %v5691, %v5702
    %v5706 = vadd.f32 %v5692, %v5702
    %v5707 = vadd.f32 %v5693, %v5702
    %v5708 = vadd.f32 %v5694, %v5702
    %v5709 = vadd.f32 %v5695, %v5702
    %v5710 = vadd.f32 %v5696, %v5702
    %v5711 = vadd.f32 %v5697, %v5702
    %v5712 = vpack.c.bf16 %v5704, %v5704
    %v5713 = vpack.c.bf16 %v5705, %v5705
    %v5714 = vpack.c.bf16 %v5706, %v5706
    %v5715 = vpack.c.bf16 %v5707, %v5707
    %v5716 = vpack.c.bf16 %v5708, %v5708
    %v5717 = vpack.c.bf16 %v5709, %v5709
    %v5718 = vpack.c.bf16 %v5710, %v5710
    %v5719 = vpack.c.bf16 %v5711, %v5711
    %s5720 = scalar_lea.vmem %s10, 16
    %v5721 = vld [vmem:[%s5720] sm:$0xf]
    %v5722 = vld [vmem:[%s5720 + $0x4] sm:$0xf]
    %v5723 = vld [vmem:[%s5720 + $0x8] sm:$0xf]
    %v5724 = vld [vmem:[%s5720 + $0xc] sm:$0xf]
    %s5725 = scalar_lea.vmem %s11, 1
    %v5726 = vld [vmem:[%s5725] sm:$0x1]
    %v5728 = vlaneseq
    %v5729 = vshrl.u32 %v5728, 7
    %v5730 = vsub.s32 0, %v5729
    %v5731 = vrot.slane %v5726, %v5730
    %v5741 = vunpack.c.l.b16 %v5712
    %v5742 = vunpack.c.l.b16 %v5713
    %v5743 = vunpack.c.l.b16 %v5714
    %v5744 = vunpack.c.l.b16 %v5715
    %v5745 = vunpack.c.l.b16 %v5716
    %v5746 = vunpack.c.l.b16 %v5717
    %v5747 = vunpack.c.l.b16 %v5718
    %v5748 = vunpack.c.l.b16 %v5719
    %v5749 = vrot.slane %v5742, 7
    %v5750 = vsel %vm4119, %v5749, %v5741
    %v5751 = vrot.slane %v5743, 6
    %v5752 = vsel %vm4121, %v5751, %v5750
    %v5753 = vrot.slane %v5744, 5
    %v5754 = vsel %vm4123, %v5753, %v5752
    %v5755 = vrot.slane %v5745, 4
    %v5756 = vsel %vm4125, %v5755, %v5754
    %v5757 = vrot.slane %v5746, 3
    %v5758 = vsel %vm4127, %v5757, %v5756
    %v5759 = vrot.slane %v5747, 2
    %v5760 = vsel %vm4129, %v5759, %v5758
    %v5761 = vrot.slane %v5748, 1
    %v5762 = vsel %vm4131, %v5761, %v5760
    %v5763 = vpack.c.b16 %v5762, %v5762
    %v5768 = vunpack.c.l.b16 %v5721
    %v5769 = vunpack.c.l.b16 %v5722
    %v5770 = vunpack.c.l.b16 %v5723
    %v5771 = vunpack.c.l.b16 %v5724
    %v5772 = vpack.c.b16 %v5769, %v5768
    %v5773 = vpack.c.b16 %v5771, %v5770
    %v5777 = vsel %vm158, %v5763, 0
    %5779 = vmatprep.subr.bf16.mxu0 0
    %5780 = vmatpush1.bf16.msra.mxu0 0
    %5781 = vmatprep.subr.bf16.mxu0 0
    %5782 = vmatpush1.bf16.msra.mxu0 0
    %5783 = vmatprep.subr.bf16.mxu0 0
    %5784 = vmatpush1.bf16.msra.mxu0 0
    %5785 = vmatprep.subr.bf16.mxu0 0
    %5786 = vmatpush1.bf16.msra.mxu0 0
    %5787 = vmatprep.subr.bf16.mxu0 0
    %5788 = vmatpush1.bf16.msra.mxu0 0
    %5789 = vmatprep.subr.bf16.mxu0 0
    %5790 = vmatpush1.bf16.msra.mxu0 0
    %5791 = vmatprep.subr.bf16.mxu0 0
    %5792 = vmatpush1.bf16.msra.mxu0 %v5773
    %5793 = vmatprep.subr.bf16.mxu0 0
    %5794 = vmatpush1.bf16.msra.mxu0 %v5772
    %5795 = vmatprep.subr.bf16.mxu0 0
    %5796 = vmatpush2.bf16.msra.mxu0 0
    %5797 = vmatprep.subr.bf16.mxu0 0
    %5798 = vmatpush2.bf16.msra.mxu0 0
    %5799 = vmatprep.subr.bf16.mxu0 0
    %5800 = vmatpush2.bf16.msra.mxu0 0
    %5801 = vmatprep.subr.bf16.mxu0 0
    %5802 = vmatpush2.bf16.msra.mxu0 0
    %5803 = vmatprep.subr.bf16.mxu0 0
    %5804 = vmatpush2.bf16.msra.mxu0 0
    %5805 = vmatprep.subr.bf16.mxu0 0
    %5806 = vmatpush2.bf16.msra.mxu0 0
    %5807 = vmatprep.subr.bf16.mxu0 0
    %5808 = vmatpush2.bf16.msra.mxu0 0
    %5809 = vmatprep.subr.bf16.mxu0 0
    %5810 = vmatpush2.bf16.msra.mxu0 0
    %5811 = vmatprep.mubr.bf16.mxu0 0
    %5812 = vmatmul.mubr.bf16.gmra.mxu0 %v5777
    %v5813 = vpop.f32.mrf.mxu0
    %v5814 = vadd.f32 %v5731, %v5813
    %v5815 = vpop.f32.mrf.mxu0
    %v5816 = vpop.f32.mrf.mxu0
    %v5817 = vpop.f32.mrf.mxu0
    %5818 = vdwg.mxu0
    %v5819 = vmul.f32 %v5814, %v5814
    %v5820 = vmul.f32 %v5814, %v5819
    %v5821 = vmul.f32 %v5820, 0.044715
    %v5822 = vadd.f32 %v5814, %v5821
    %v5823 = vmul.f32 %v5822, 0.7978846
    %v5824 = vtanh.pop %v5823
    %v5825 = vadd.f32 %v5824, 1.0
    %v5826 = vmul.f32 %v5825, 0.5
    %v5827 = vmul.f32 %v5814, %v5826
    %v5828 = vpack.c.bf16 %v5827, %v5827
    %s5829 = scalar_lea.vmem %s12, 32
    %v5830 = vld [vmem:[%s5829] sm:$0xf]
    %v5831 = vld [vmem:[%s5829 + $0x4] sm:$0xf]
    %v5832 = vld [vmem:[%s5829 + $0x8] sm:$0xf]
    %v5833 = vld [vmem:[%s5829 + $0xc] sm:$0xf]
    %v5834 = vld [vmem:[%s5829 + $0x10] sm:$0xf]
    %v5835 = vld [vmem:[%s5829 + $0x14] sm:$0xf]
    %v5836 = vld [vmem:[%s5829 + $0x18] sm:$0xf]
    %v5837 = vld [vmem:[%s5829 + $0x1c] sm:$0xf]
    %s5838 = scalar_lea.vmem %s13, 1
    %v5839 = vld [vmem:[%s5838] sm:$0x1]
    %v5841 = vlaneseq
    %v5842 = vshrl.u32 %v5841, 7
    %v5843 = vsub.s32 0, %v5842
    %v5844 = vrot.slane %v5839, %v5843
    %v5854 = vunpack.c.l.b16 %v5830
    %v5855 = vunpack.c.l.b16 %v5831
    %v5856 = vunpack.c.l.b16 %v5832
    %v5857 = vunpack.c.l.b16 %v5833
    %v5858 = vunpack.c.l.b16 %v5834
    %v5859 = vunpack.c.l.b16 %v5835
    %v5860 = vunpack.c.l.b16 %v5836
    %v5861 = vunpack.c.l.b16 %v5837
    %v5862 = vpack.c.b16 %v5855, %v5854
    %v5863 = vpack.c.b16 %v5857, %v5856
    %v5864 = vpack.c.b16 %v5859, %v5858
    %v5865 = vpack.c.b16 %v5861, %v5860
    %v5871 = vsel %vm4636, %v5828, 0
    %5873 = vmatprep.subr.bf16.mxu0 0
    %5874 = vmatpush1.bf16.msra.mxu0 0
    %5875 = vmatprep.subr.bf16.mxu0 0
    %5876 = vmatpush1.bf16.msra.mxu0 0
    %5877 = vmatprep.subr.bf16.mxu0 0
    %5878 = vmatpush1.bf16.msra.mxu0 0
    %5879 = vmatprep.subr.bf16.mxu0 0
    %5880 = vmatpush1.bf16.msra.mxu0 0
    %5881 = vmatprep.subr.bf16.mxu0 0
    %5882 = vmatpush1.bf16.msra.mxu0 %v5865
    %5883 = vmatprep.subr.bf16.mxu0 0
    %5884 = vmatpush1.bf16.msra.mxu0 %v5864
    %5885 = vmatprep.subr.bf16.mxu0 0
    %5886 = vmatpush1.bf16.msra.mxu0 %v5863
    %5887 = vmatprep.subr.bf16.mxu0 0
    %5888 = vmatpush1.bf16.msra.mxu0 %v5862
    %5889 = vmatprep.subr.bf16.mxu0 0
    %5890 = vmatpush2.bf16.msra.mxu0 0
    %5891 = vmatprep.subr.bf16.mxu0 0
    %5892 = vmatpush2.bf16.msra.mxu0 0
    %5893 = vmatprep.subr.bf16.mxu0 0
    %5894 = vmatpush2.bf16.msra.mxu0 0
    %5895 = vmatprep.subr.bf16.mxu0 0
    %5896 = vmatpush2.bf16.msra.mxu0 0
    %5897 = vmatprep.subr.bf16.mxu0 0
    %5898 = vmatpush2.bf16.msra.mxu0 0
    %5899 = vmatprep.subr.bf16.mxu0 0
    %5900 = vmatpush2.bf16.msra.mxu0 0
    %5901 = vmatprep.subr.bf16.mxu0 0
    %5902 = vmatpush2.bf16.msra.mxu0 0
    %5903 = vmatprep.subr.bf16.mxu0 0
    %5904 = vmatpush2.bf16.msra.mxu0 0
    %5905 = vmatprep.mubr.bf16.mxu0 0
    %5906 = vmatmul.mubr.bf16.gmra.mxu0 %v5871
    %v5907 = vpop.f32.mrf.mxu0
    %v5908 = vadd.f32 %v5844, %v5907
    %v5909 = vpop.f32.mrf.mxu0
    %v5910 = vpop.f32.mrf.mxu0
    %v5911 = vpop.f32.mrf.mxu0
    %5912 = vdwg.mxu0
    %v5914 = vrot.slane %v5908, 1
    %v5915 = vrot.slane %v5908, 2
    %v5916 = vrot.slane %v5908, 3
    %v5917 = vrot.slane %v5908, 4
    %v5918 = vrot.slane %v5908, 5
    %v5919 = vrot.slane %v5908, 6
    %v5920 = vrot.slane %v5908, 7
    %v5929 = vadd.f32 %v5704, %v5908
    %v5930 = vadd.f32 %v5705, %v5914
    %v5931 = vadd.f32 %v5706, %v5915
    %v5932 = vadd.f32 %v5707, %v5916
    %v5933 = vadd.f32 %v5708, %v5917
    %v5934 = vadd.f32 %v5709, %v5918
    %v5935 = vadd.f32 %v5710, %v5919
    %v5936 = vadd.f32 %v5711, %v5920
    %s5937 = scalar_lea.vmem %s14, 1
    %v5938 = vld [vmem:[%s5937] sm:$0x1]
    %s5939 = scalar_lea.vmem %s15, 1
    %v5940 = vld [vmem:[%s5939] sm:$0x1]
    %v5949 = vrot.slane %v5930, 7
    %v5950 = vsel %vm4119, %v5949, %v5929
    %v5951 = vrot.slane %v5931, 6
    %v5952 = vsel %vm4121, %v5951, %v5950
    %v5953 = vrot.slane %v5932, 5
    %v5954 = vsel %vm4123, %v5953, %v5952
    %v5955 = vrot.slane %v5933, 4
    %v5956 = vsel %vm4125, %v5955, %v5954
    %v5957 = vrot.slane %v5934, 3
    %v5958 = vsel %vm4127, %v5957, %v5956
    %v5959 = vrot.slane %v5935, 2
    %v5960 = vsel %vm4129, %v5959, %v5958
    %v5961 = vrot.slane %v5936, 1
    %v5962 = vsel %vm4131, %v5961, %v5960
    %v5964 = vsel %vm158, %v5962, 0.0
    %5965 = vadd.xlane.f32.xlu0 %v5964
    %v5966 = vpop.xlane.xlu0 %5965
    %v5967 = vmul.f32 %v5966, %v183
    %v5969 = vrot.slane %v5967, 1
    %v5970 = vrot.slane %v5967, 2
    %v5971 = vrot.slane %v5967, 3
    %v5972 = vrot.slane %v5967, 4
    %v5973 = vrot.slane %v5967, 5
    %v5974 = vrot.slane %v5967, 6
    %v5975 = vrot.slane %v5967, 7
    %v5984 = vsub.f32 %v5929, %v5967
    %v5985 = vsub.f32 %v5930, %v5969
    %v5986 = vsub.f32 %v5931, %v5970
    %v5987 = vsub.f32 %v5932, %v5971
    %v5988 = vsub.f32 %v5933, %v5972
    %v5989 = vsub.f32 %v5934, %v5973
    %v5990 = vsub.f32 %v5935, %v5974
    %v5991 = vsub.f32 %v5936, %v5975
    %v5992 = vmul.f32 %v5984, %v5984
    %v5993 = vmul.f32 %v5985, %v5985
    %v5994 = vmul.f32 %v5986, %v5986
    %v5995 = vmul.f32 %v5987, %v5987
    %v5996 = vmul.f32 %v5988, %v5988
    %v5997 = vmul.f32 %v5989, %v5989
    %v5998 = vmul.f32 %v5990, %v5990
    %v5999 = vmul.f32 %v5991, %v5991
    %v6008 = vrot.slane %v5993, 7
    %v6009 = vsel %vm4119, %v6008, %v5992
    %v6010 = vrot.slane %v5994, 6
    %v6011 = vsel %vm4121, %v6010, %v6009
    %v6012 = vrot.slane %v5995, 5
    %v6013 = vsel %vm4123, %v6012, %v6011
    %v6014 = vrot.slane %v5996, 4
    %v6015 = vsel %vm4125, %v6014, %v6013
    %v6016 = vrot.slane %v5997, 3
    %v6017 = vsel %vm4127, %v6016, %v6015
    %v6018 = vrot.slane %v5998, 2
    %v6019 = vsel %vm4129, %v6018, %v6017
    %v6020 = vrot.slane %v5999, 1
    %v6021 = vsel %vm4131, %v6020, %v6019
    %v6023 = vsel %vm158, %v6021, 0.0
    %6024 = vadd.xlane.f32.xlu0 %v6023
    %v6025 = vpop.xlane.xlu0 %6024
    %v6026 = vmul.f32 %v6025, %v183
    %v6027 = vadd.f32 %v6026, 1e-05
    %v6028 = vrsqrt.pop %v6027
    %v6030 = vrot.slane %v6028, 1
    %v6031 = vrot.slane %v6028, 2
    %v6032 = vrot.slane %v6028, 3
    %v6033 = vrot.slane %v6028, 4
    %v6034 = vrot.slane %v6028, 5
    %v6035 = vrot.slane %v6028, 6
    %v6036 = vrot.slane %v6028, 7
    %v6045 = vmul.f32 %v5984, %v6028
    %v6046 = vmul.f32 %v5985, %v6030
    %v6047 = vmul.f32 %v5986, %v6031
    %v6048 = vmul.f32 %v5987, %v6032
    %v6049 = vmul.f32 %v5988, %v6033
    %v6050 = vmul.f32 %v5989, %v6034
    %v6051 = vmul.f32 %v5990, %v6035
    %v6052 = vmul.f32 %v5991, %v6036
    %v6054 = vlaneseq
    %v6055 = vshrl.u32 %v6054, 7
    %v6056 = vsub.s32 0, %v6055
    %v6057 = vrot.slane %v5938, %v6056
    %v6059 = vmul.f32 %v6045, %v6057
    %v6060 = vmul.f32 %v6046, %v6057
    %v6061 = vmul.f32 %v6047, %v6057
    %v6062 = vmul.f32 %v6048, %v6057
    %v6063 = vmul.f32 %v6049, %v6057
    %v6064 = vmul.f32 %v6050, %v6057
    %v6065 = vmul.f32 %v6051, %v6057
    %v6066 = vmul.f32 %v6052, %v6057
    %v6068 = vlaneseq
    %v6069 = vshrl.u32 %v6068, 7
    %v6070 = vsub.s32 0, %v6069
    %v6071 = vrot.slane %v5940, %v6070
    %v6073 = vadd.f32 %v6059, %v6071
    %v6074 = vadd.f32 %v6060, %v6071
    %v6075 = vadd.f32 %v6061, %v6071
    %v6076 = vadd.f32 %v6062, %v6071
    %v6077 = vadd.f32 %v6063, %v6071
    %v6078 = vadd.f32 %v6064, %v6071
    %v6079 = vadd.f32 %v6065, %v6071
    %v6080 = vadd.f32 %v6066, %v6071
    %v6081 = vld [vmem:[#allocation8] sm:$0xff]
    %v6082 = vld [vmem:[#allocation8 + $0x8] sm:$0xff]
    %v6083 = vld [vmem:[#allocation8 + $0x10] sm:$0xff]
    %v6084 = vld [vmem:[#allocation8 + $0x18] sm:$0xff]
    %v6085 = vld [vmem:[%s17] sm:$0x1]
    %v6087 = vlaneseq
    %v6088 = vshrl.u32 %v6087, 7
    %v6089 = vsub.s32 0, %v6088
    %v6090 = vrot.slane %v6085, %v6089
    %v6100 = vrot.slane %v6074, 7
    %v6101 = vsel %vm4119, %v6100, %v6073
    %v6102 = vrot.slane %v6075, 6
    %v6103 = vsel %vm4121, %v6102, %v6101
    %v6104 = vrot.slane %v6076, 5
    %v6105 = vsel %vm4123, %v6104, %v6103
    %v6106 = vrot.slane %v6077, 4
    %v6107 = vsel %vm4125, %v6106, %v6105
    %v6108 = vrot.slane %v6078, 3
    %v6109 = vsel %vm4127, %v6108, %v6107
    %v6110 = vrot.slane %v6079, 2
    %v6111 = vsel %vm4129, %v6110, %v6109
    %v6112 = vrot.slane %v6080, 1
    %v6113 = vsel %vm4131, %v6112, %v6111
    %v6114 = vsel %vm158, %v6113, 0
    %6116 = vmatprep.subr.mxu0 0.0
    %6117 = vmatpush1.msra.mxu0 0.0
    %6118 = vmatprep.subr.mxu0 0.0
    %6119 = vmatpush1.msra.mxu0 0.0
    %6120 = vmatprep.subr.mxu0 0.0
    %6121 = vmatpush1.msra.mxu0 0.0
    %6122 = vmatprep.subr.mxu0 0.0
    %6123 = vmatpush1.msra.mxu0 0.0
    %6124 = vmatprep.subr.mxu0 0.0
    %6125 = vmatpush1.msra.mxu0 0.0
    %6126 = vmatprep.subr.mxu0 0.0
    %6127 = vmatpush1.msra.mxu0 0.0
    %6128 = vmatprep.subr.mxu0 0.0
    %6129 = vmatpush1.msra.mxu0 0.0
    %6130 = vmatprep.subr.mxu0 0.0
    %6131 = vmatpush1.msra.mxu0 0.0
    %6132 = vmatprep.subr.mxu0 0.0
    %6133 = vmatpush1.msra.mxu0 0.0
    %6134 = vmatprep.subr.mxu0 0.0
    %6135 = vmatpush1.msra.mxu0 0.0
    %6136 = vmatprep.subr.mxu0 0.0
    %6137 = vmatpush1.msra.mxu0 0.0
    %6138 = vmatprep.subr.mxu0 0.0
    %6139 = vmatpush1.msra.mxu0 0.0
    %6140 = vmatprep.subr.mxu0 0.0
    %6141 = vmatpush1.msra.mxu0 %v6084
    %6142 = vmatprep.subr.mxu0 0.0
    %6143 = vmatpush1.msra.mxu0 %v6083
    %6144 = vmatprep.subr.mxu0 0.0
    %6145 = vmatpush1.msra.mxu0 %v6082
    %6146 = vmatprep.subr.mxu0 0.0
    %6147 = vmatpush1.msra.mxu0 %v6081
    %6148 = vmatprep.subr.mxu0 0.0
    %6149 = vmatpush2.msra.mxu0 0.0
    %6150 = vmatprep.subr.mxu0 0.0
    %6151 = vmatpush2.msra.mxu0 0.0
    %6152 = vmatprep.subr.mxu0 0.0
    %6153 = vmatpush2.msra.mxu0 0.0
    %6154 = vmatprep.subr.mxu0 0.0
    %6155 = vmatpush2.msra.mxu0 0.0
    %6156 = vmatprep.subr.mxu0 0.0
    %6157 = vmatpush2.msra.mxu0 0.0
    %6158 = vmatprep.subr.mxu0 0.0
    %6159 = vmatpush2.msra.mxu0 0.0
    %6160 = vmatprep.subr.mxu0 0.0
    %6161 = vmatpush2.msra.mxu0 0.0
    %6162 = vmatprep.subr.mxu0 0.0
    %6163 = vmatpush2.msra.mxu0 0.0
    %6164 = vmatprep.subr.mxu0 0.0
    %6165 = vmatpush2.msra.mxu0 0.0
    %6166 = vmatprep.subr.mxu0 0.0
    %6167 = vmatpush2.msra.mxu0 0.0
    %6168 = vmatprep.subr.mxu0 0.0
    %6169 = vmatpush2.msra.mxu0 0.0
    %6170 = vmatprep.subr.mxu0 0.0
    %6171 = vmatpush2.msra.mxu0 0.0
    %6172 = vmatprep.subr.mxu0 0.0
    %6173 = vmatpush2.msra.mxu0 0.0
    %6174 = vmatprep.subr.mxu0 0.0
    %6175 = vmatpush2.msra.mxu0 0.0
    %6176 = vmatprep.subr.mxu0 0.0
    %6177 = vmatpush2.msra.mxu0 0.0
    %6178 = vmatprep.subr.mxu0 0.0
    %6179 = vmatpush2.msra.mxu0 0.0
    %6180 = vmatprep.mubr.f32.mxu0 0.0
    %6181 = vmatmul.mubr.f32.gmra.mxu0 %v6114
    %v6182 = vpop.f32.mrf.mxu0
    %v6183 = vadd.f32 %v6090, %v6182
    %v6184 = vpop.f32.mrf.mxu0
    %6185 = vdwg.mxu0
    %v6186 = vld [vmem:[%s18] sm:$0x1]
    %v6187 = vld [vmem:[%s19] sm:$0x1]
    %v6188 = vsel %vm158, %v6183, 0.0
    %6189 = vadd.xlane.f32.xlu0 %v6188
    %v6190 = vpop.xlane.xlu0 %6189
    %v6191 = vmul.f32 %v6190, %v183
    %v6192 = vsub.f32 %v6183, %v6191
    %v6193 = vmul.f32 %v6192, %v6192
    %v6194 = vsel %vm158, %v6193, 0.0
    %6195 = vadd.xlane.f32.xlu0 %v6194
    %v6196 = vpop.xlane.xlu0 %6195
    %v6197 = vmul.f32 %v6196, %v183
    %v6198 = vadd.f32 %v6197, 1e-05
    %v6199 = vrsqrt.pop %v6198
    %v6200 = vmul.f32 %v6192, %v6199
    %v6202 = vlaneseq
    %v6203 = vshrl.u32 %v6202, 7
    %v6204 = vsub.s32 0, %v6203
    %v6205 = vrot.slane %v6186, %v6204
    %v6207 = vmul.f32 %v6200, %v6205
    %v6209 = vlaneseq
    %v6210 = vshrl.u32 %v6209, 7
    %v6211 = vsub.s32 0, %v6210
    %v6212 = vrot.slane %v6187, %v6211
    %v6214 = vadd.f32 %v6207, %v6212
    %6215 = vst.msk [vmem:[#allocation10] sm:$0xff] %vm158, %v6214
    // Predicated region
    $region106: #{tpu_custom_call.1} parent=1 // pred_check
      _
    $region107: #{tpu_custom_call.1} parent=1 // pred_check_branch
      %6217 = sbr.rel (0) target = $region109
    $region108: #{tpu_custom_call.1} parent=1 // pred_region
      %s6219 = ssub.s32 128, 128
      %6220 = vsyncadd [#allocation4], %s6219
      %s6222 = sshll.u32 [#allocation10], 4
      %s6223 = int_to_ptr.vmem [resolvable:$true] %s6222
      %6225 = dma.vmem_to_hbm [thread:$0]  %s6223, 128, %s22, [#allocation4]
    $region109: #{tpu_custom_call.1} parent=1 // pred_fallthru
      _
    // Predicated region
    $region110: #{tpu_custom_call.1} parent=1 // pred_check
      _
    $region111: #{tpu_custom_call.1} parent=1 // pred_check_branch
      %6227 = sbr.rel (0) target = $region113
    $region112: #{tpu_custom_call.1} parent=1 // pred_region
      %6228 = dma.done [#allocation4], 128
    $region113: #{tpu_custom_call.1} parent=1 // pred_fallthru
      _
    %6229 = vsyncpa [#allocation3], 1
    %6230 = vsyncpa [#allocation6], 1
    %6231 = vsyncpa [#allocation9], 1
    %6232 = vsyncpa [#allocation4], 1

</llo_original>
